<compile_context>
chip_gen: v7x
topology: tpu7x:2x2x1
jax: 0.10.0
libtpu: 0.0.40
codegen_flags: <defaults>
</compile_context>

<pallas_src>
import functools

import jax
import jax.numpy as jnp
from jax.experimental import pallas as pl
from jax.experimental.pallas import tpu as pltpu


HIDDEN = (1024, 512, 256, 128)   # hidden widths of fc1..fc4
NC_PAD = 128                     # lane-dense padded width of the final layer


def mlp_kernel(x_ref,
               w1_ref, b1_ref,
               w2_ref, b2_ref,
               w3_ref, b3_ref,
               w4_ref, b4_ref,
               w5_ref, b5_ref,
               o_ref,
               *, epilogue_dtype):
    """Fused 5-layer MLP on one (TM, in_dim) batch tile.

    All matmuls run on the bf16 MXU path with f32 accumulation.  Hidden-layer
    epilogues (bias + ReLU + down-cast to bf16) run in `epilogue_dtype`
    (bf16 on v6e/v7x, f32 on v5e); the final layer's bias add stays f32.
    """

    def hidden_layer(h_bf16, w_ref, b_ref):
        y = jnp.dot(h_bf16, w_ref[...], preferred_element_type=jnp.float32)
        y = y.astype(epilogue_dtype) + b_ref[...].astype(epilogue_dtype)
        return jnp.maximum(y, 0.0).astype(jnp.bfloat16)

    h = x_ref[...].astype(jnp.bfloat16)
    h = hidden_layer(h, w1_ref, b1_ref)
    h = hidden_layer(h, w2_ref, b2_ref)
    h = hidden_layer(h, w3_ref, b3_ref)
    h = hidden_layer(h, w4_ref, b4_ref)
    # Final layer: no ReLU; bias add stays f32.
    y = jnp.dot(h, w5_ref[...], preferred_element_type=jnp.float32) + b5_ref[...]
    o_ref[...] = y.astype(o_ref.dtype)


def prepare_params(params):
    """One-time parameter preparation (hoisted out of the per-call hot path).

    * weights cast to bf16 (halves weight DMA; native MXU input dtype)
    * final layer zero-padded to NC_PAD=128 output columns (lane-dense vst)
    * biases reshaped to (1, N) f32 rows (VMEM-friendly layout)

    Returns (flat_params, num_classes); flat_params is the interleaved
    (w1, b1, ..., w5, b5) tuple ready to pass to `mlp_forward`.
    """
    w5, b5 = params[-1]
    num_classes = w5.shape[-1]
    w5p = jnp.zeros((w5.shape[0], NC_PAD), w5.dtype).at[:, :num_classes].set(w5)
    b5p = jnp.zeros((NC_PAD,), b5.dtype).at[:num_classes].set(b5)
    eff_params = list(params[:-1]) + [(w5p, b5p)]

    flat = []
    for w, b in eff_params:
        flat.append(jnp.asarray(w, jnp.bfloat16))
        flat.append(jnp.asarray(b, jnp.float32).reshape(1, -1))
    return tuple(flat), num_classes


def _round_up(n, m):
    return -(-n // m) * m


def _choose_batch_tile(batch):
    """Pick (TM, padded_batch): sublane-aligned, >=2 grid steps once B > 16
    (so the 'parallel' axis shards across both TensorCores on v7x), and TM
    capped at 512 to amortize the ~0.35 us per-grid-step overhead while
    staying well inside the 32 MiB scoped-VMEM budget."""
    if batch <= 16:
        tm = _round_up(batch, 8)
        return tm, tm
    n_steps = max(2, pl.cdiv(batch, 512))
    tm = _round_up(pl.cdiv(batch, n_steps), 8)
    return tm, _round_up(batch, tm)


def _epilogue_dtype():
    """bf16 epilogue on chips with a bf16 VPU (v6e/v7x); f32 on v5e/older."""
    try:
        kind = jax.devices()[0].device_kind.lower()
    except Exception:
        kind = ""
    if any(tag in kind for tag in ("v2", "v3", "v4", "v5")):
        return jnp.float32
    return jnp.bfloat16


def mlp_forward(x_nchw, prepared_params, num_classes):
    """x_nchw: (B, C, H, W) f32. prepared_params: output of prepare_params()."""
    B = x_nchw.shape[0]
    x_flat = x_nchw.reshape(B, -1).astype(jnp.float32)       # nn.Flatten
    in_dim = x_flat.shape[1]

    TM, Bp = _choose_batch_tile(B)
    if Bp != B:
        x_flat = jnp.pad(x_flat, ((0, Bp - B), (0, 0)))
    grid = (Bp // TM,)

    x_spec = pl.BlockSpec((TM, in_dim), lambda i: (i, 0))
    out_spec = pl.BlockSpec((TM, NC_PAD), lambda i: (i, 0))
    # Constant block index -> weights/biases are DMA'd once and stay
    # VMEM-resident across all grid steps.
    wb_specs = [pl.BlockSpec(p.shape, lambda i: (0, 0)) for p in prepared_params]

    dims = (in_dim,) + HIDDEN + (NC_PAD,)
    flops = 2 * Bp * sum(a * b for a, b in zip(dims[:-1], dims[1:]))
    bytes_accessed = (sum(int(p.size) * p.dtype.itemsize for p in prepared_params)
                      + int(x_flat.size) * 4 + Bp * NC_PAD * 4)

    kernel = functools.partial(mlp_kernel, epilogue_dtype=_epilogue_dtype())

    out = pl.pallas_call(
        kernel,
        out_shape=jax.ShapeDtypeStruct((Bp, NC_PAD), jnp.float32),
        grid_spec=pltpu.PrefetchScalarGridSpec(
            num_scalar_prefetch=0,
            grid=grid,
            in_specs=[x_spec] + wb_specs,
            out_specs=out_spec,
        ),
        compiler_params=pltpu.CompilerParams(
            dimension_semantics=("parallel",),
            vmem_limit_bytes=32 << 20,
        ),
        cost_estimate=pl.CostEstimate(flops=flops, transcendentals=0,
                                      bytes_accessed=bytes_accessed),
    )(x_flat, *prepared_params)

    return out[:B, :num_classes]


def init_params(key, input_size, num_classes):
    """Deterministic init mimicking PyTorch nn.Linear: U(-1/sqrt(fan_in), +)."""
    dims = [input_size, *HIDDEN, num_classes]
    params = []
    for i in range(len(dims) - 1):
        fan_in, fan_out = dims[i], dims[i + 1]
        key, kw, kb = jax.random.split(key, 3)
        bound = 1.0 / jnp.sqrt(fan_in)
        w = jax.random.uniform(kw, (fan_in, fan_out), jnp.float32, -bound, bound)
        b = jax.random.uniform(kb, (fan_out,), jnp.float32, -bound, bound)
        params.append((w, b))
    return params


def mlp_reference(x_nchw, params):
    """Pure-JAX f32 reference for sanity checking."""
    h = x_nchw.reshape(x_nchw.shape[0], -1)
    for i, (w, b) in enumerate(params):
        h = h @ w + b
        if i < len(params) - 1:
            h = jnp.maximum(h, 0.0)
    return h


if __name__ == "__main__":
    key = jax.random.PRNGKey(0)
    B, C, H, W = 2, 4, 16, 16
    input_size = C * H * W          # 1024
    num_classes = 10

    kx, kp = jax.random.split(key)
    x = jax.random.normal(kx, (B, C, H, W), dtype=jnp.float32)
    params = init_params(kp, input_size, num_classes)

    # One-time param prep (bf16 cast + lane-dense padding) -- off the hot path.
    prepared, nc = prepare_params(params)

    out = mlp_forward(x, prepared, nc)
    out = jax.block_until_ready(out)

    ref = mlp_reference(x, params)
    assert out.shape == (B, num_classes)
    # bf16 weight/activation streaming vs. f32 reference -> loosened tolerance.
    assert jnp.allclose(out, ref, atol=5e-2, rtol=5e-2)

    print("KERNEL_OK")
</pallas_src>

<mosaic_0001>
module attributes {stable_mosaic.version = 11 : i64} {
  func.func @mlp_kernel(%arg0: i32, %arg1: memref<8x1024xf32, #tpu.memory_space<vmem>>, %arg2: memref<1024x1024xbf16, #tpu.memory_space<vmem>>, %arg3: memref<1x1024xf32, #tpu.memory_space<vmem>>, %arg4: memref<1024x512xbf16, #tpu.memory_space<vmem>>, %arg5: memref<1x512xf32, #tpu.memory_space<vmem>>, %arg6: memref<512x256xbf16, #tpu.memory_space<vmem>>, %arg7: memref<1x256xf32, #tpu.memory_space<vmem>>, %arg8: memref<256x128xbf16, #tpu.memory_space<vmem>>, %arg9: memref<1x128xf32, #tpu.memory_space<vmem>>, %arg10: memref<128x128xbf16, #tpu.memory_space<vmem>>, %arg11: memref<1x128xf32, #tpu.memory_space<vmem>>, %arg12: memref<8x128xf32, #tpu.memory_space<vmem>>) attributes {dimension_semantics = [#tpu.dimension_semantics<parallel>], iteration_bounds = array<i64: 1>, scalar_prefetch = 0 : i64, scratch_operands = 0 : i64, tpu.core_type = #tpu.core_type<tc>, window_params = [{transform_indices = @transform_0, window_bounds = array<i64: 8, 1024>}, {pipeline_mode = #tpu.pipeline_mode<synchronous>, transform_indices = @transform_1, window_bounds = array<i64: 1024, 1024>}, {pipeline_mode = #tpu.pipeline_mode<synchronous>, transform_indices = @transform_2, window_bounds = array<i64: 1, 1024>}, {pipeline_mode = #tpu.pipeline_mode<synchronous>, transform_indices = @transform_3, window_bounds = array<i64: 1024, 512>}, {pipeline_mode = #tpu.pipeline_mode<synchronous>, transform_indices = @transform_4, window_bounds = array<i64: 1, 512>}, {pipeline_mode = #tpu.pipeline_mode<synchronous>, transform_indices = @transform_5, window_bounds = array<i64: 512, 256>}, {pipeline_mode = #tpu.pipeline_mode<synchronous>, transform_indices = @transform_6, window_bounds = array<i64: 1, 256>}, {pipeline_mode = #tpu.pipeline_mode<synchronous>, transform_indices = @transform_7, window_bounds = array<i64: 256, 128>}, {pipeline_mode = #tpu.pipeline_mode<synchronous>, transform_indices = @transform_8, window_bounds = array<i64: 1, 128>}, {pipeline_mode = #tpu.pipeline_mode<synchronous>, transform_indices = @transform_9, window_bounds = array<i64: 128, 128>}, {pipeline_mode = #tpu.pipeline_mode<synchronous>, transform_indices = @transform_10, window_bounds = array<i64: 1, 128>}, {transform_indices = @transform_11, window_bounds = array<i64: 8, 128>}]} {
    %c0 = arith.constant 0 : index
    %c0_0 = arith.constant 0 : index
    %0 = vector.load %arg1[%c0, %c0_0] : memref<8x1024xf32, #tpu.memory_space<vmem>>, vector<8x1024xf32>
    %1 = arith.truncf %0 : vector<8x1024xf32> to vector<8x1024xbf16>
    %c0_1 = arith.constant 0 : index
    %c0_2 = arith.constant 0 : index
    %2 = vector.load %arg2[%c0_1, %c0_2] : memref<1024x1024xbf16, #tpu.memory_space<vmem>>, vector<1024x1024xbf16>
    %cst = arith.constant dense<0.000000e+00> : vector<8x1024xf32>
    %3 = tpu.matmul %1, %2, %cst {dimension_numbers = #tpu.dot_dimension_numbers<[1], [0], [0], [1], [0, 0, 1, 1], [], []>} : vector<8x1024xbf16>, vector<1024x1024xbf16>, vector<8x1024xf32> -> vector<8x1024xf32>
    %4 = arith.truncf %3 : vector<8x1024xf32> to vector<8x1024xbf16>
    %c0_3 = arith.constant 0 : index
    %c0_4 = arith.constant 0 : index
    %5 = vector.load %arg3[%c0_3, %c0_4] : memref<1x1024xf32, #tpu.memory_space<vmem>>, vector<1x1024xf32>
    %6 = arith.truncf %5 : vector<1x1024xf32> to vector<1x1024xbf16>
    %7 = vector.broadcast %6 : vector<1x1024xbf16> to vector<8x1024xbf16>
    %8 = arith.addf %4, %7 : vector<8x1024xbf16>
    %cst_5 = arith.constant 0.000000e+00 : bf16
    %9 = vector.broadcast %cst_5 : bf16 to vector<8x1024xbf16>
    %10 = arith.maximumf %8, %9 : vector<8x1024xbf16>
    %c0_6 = arith.constant 0 : index
    %c0_7 = arith.constant 0 : index
    %11 = vector.load %arg4[%c0_6, %c0_7] : memref<1024x512xbf16, #tpu.memory_space<vmem>>, vector<1024x512xbf16>
    %cst_8 = arith.constant dense<0.000000e+00> : vector<8x512xf32>
    %12 = tpu.matmul %10, %11, %cst_8 {dimension_numbers = #tpu.dot_dimension_numbers<[1], [0], [0], [1], [0, 0, 1, 1], [], []>} : vector<8x1024xbf16>, vector<1024x512xbf16>, vector<8x512xf32> -> vector<8x512xf32>
    %13 = arith.truncf %12 : vector<8x512xf32> to vector<8x512xbf16>
    %c0_9 = arith.constant 0 : index
    %c0_10 = arith.constant 0 : index
    %14 = vector.load %arg5[%c0_9, %c0_10] : memref<1x512xf32, #tpu.memory_space<vmem>>, vector<1x512xf32>
    %15 = arith.truncf %14 : vector<1x512xf32> to vector<1x512xbf16>
    %16 = vector.broadcast %15 : vector<1x512xbf16> to vector<8x512xbf16>
    %17 = arith.addf %13, %16 : vector<8x512xbf16>
    %cst_11 = arith.constant 0.000000e+00 : bf16
    %18 = vector.broadcast %cst_11 : bf16 to vector<8x512xbf16>
    %19 = arith.maximumf %17, %18 : vector<8x512xbf16>
    %c0_12 = arith.constant 0 : index
    %c0_13 = arith.constant 0 : index
    %20 = vector.load %arg6[%c0_12, %c0_13] : memref<512x256xbf16, #tpu.memory_space<vmem>>, vector<512x256xbf16>
    %cst_14 = arith.constant dense<0.000000e+00> : vector<8x256xf32>
    %21 = tpu.matmul %19, %20, %cst_14 {dimension_numbers = #tpu.dot_dimension_numbers<[1], [0], [0], [1], [0, 0, 1, 1], [], []>} : vector<8x512xbf16>, vector<512x256xbf16>, vector<8x256xf32> -> vector<8x256xf32>
    %22 = arith.truncf %21 : vector<8x256xf32> to vector<8x256xbf16>
    %c0_15 = arith.constant 0 : index
    %c0_16 = arith.constant 0 : index
    %23 = vector.load %arg7[%c0_15, %c0_16] : memref<1x256xf32, #tpu.memory_space<vmem>>, vector<1x256xf32>
    %24 = arith.truncf %23 : vector<1x256xf32> to vector<1x256xbf16>
    %25 = vector.broadcast %24 : vector<1x256xbf16> to vector<8x256xbf16>
    %26 = arith.addf %22, %25 : vector<8x256xbf16>
    %cst_17 = arith.constant 0.000000e+00 : bf16
    %27 = vector.broadcast %cst_17 : bf16 to vector<8x256xbf16>
    %28 = arith.maximumf %26, %27 : vector<8x256xbf16>
    %c0_18 = arith.constant 0 : index
    %c0_19 = arith.constant 0 : index
    %29 = vector.load %arg8[%c0_18, %c0_19] : memref<256x128xbf16, #tpu.memory_space<vmem>>, vector<256x128xbf16>
    %cst_20 = arith.constant dense<0.000000e+00> : vector<8x128xf32>
    %30 = tpu.matmul %28, %29, %cst_20 {dimension_numbers = #tpu.dot_dimension_numbers<[1], [0], [0], [1], [0, 0, 1, 1], [], []>} : vector<8x256xbf16>, vector<256x128xbf16>, vector<8x128xf32> -> vector<8x128xf32>
    %31 = arith.truncf %30 : vector<8x128xf32> to vector<8x128xbf16>
    %c0_21 = arith.constant 0 : index
    %c0_22 = arith.constant 0 : index
    %32 = vector.load %arg9[%c0_21, %c0_22] : memref<1x128xf32, #tpu.memory_space<vmem>>, vector<1x128xf32>
    %33 = arith.truncf %32 : vector<1x128xf32> to vector<1x128xbf16>
    %34 = vector.broadcast %33 : vector<1x128xbf16> to vector<8x128xbf16>
    %35 = arith.addf %31, %34 : vector<8x128xbf16>
    %cst_23 = arith.constant 0.000000e+00 : bf16
    %36 = vector.broadcast %cst_23 : bf16 to vector<8x128xbf16>
    %37 = arith.maximumf %35, %36 : vector<8x128xbf16>
    %c0_24 = arith.constant 0 : index
    %c0_25 = arith.constant 0 : index
    %38 = vector.load %arg10[%c0_24, %c0_25] : memref<128x128xbf16, #tpu.memory_space<vmem>>, vector<128x128xbf16>
    %cst_26 = arith.constant dense<0.000000e+00> : vector<8x128xf32>
    %39 = tpu.matmul %37, %38, %cst_26 {dimension_numbers = #tpu.dot_dimension_numbers<[1], [0], [0], [1], [0, 0, 1, 1], [], []>} : vector<8x128xbf16>, vector<128x128xbf16>, vector<8x128xf32> -> vector<8x128xf32>
    %c0_27 = arith.constant 0 : index
    %c0_28 = arith.constant 0 : index
    %40 = vector.load %arg11[%c0_27, %c0_28] : memref<1x128xf32, #tpu.memory_space<vmem>>, vector<1x128xf32>
    %41 = vector.broadcast %40 : vector<1x128xf32> to vector<8x128xf32>
    %42 = arith.addf %39, %41 : vector<8x128xf32>
    %c0_29 = arith.constant 0 : index
    %c0_30 = arith.constant 0 : index
    %43 = vector.load %arg12[%c0_29, %c0_30] : memref<8x128xf32, #tpu.memory_space<vmem>>, vector<8x128xf32>
    tpu.vector_store %arg12[%c0_29, %c0_30], %42 {strides = array<i32>} : memref<8x128xf32, #tpu.memory_space<vmem>>, vector<8x128xf32>,
    return
  }
  func.func @transform_0(%arg0: i32) -> (i32, i32) {
    %c0_i32 = arith.constant 0 : i32
    %c0_i32_0 = arith.constant 0 : i32
    return %arg0, %c0_i32 : i32, i32
  }
  func.func @transform_1(%arg0: i32) -> (i32, i32) {
    %c0_i32 = arith.constant 0 : i32
    %c0_i32_0 = arith.constant 0 : i32
    %c0_i32_1 = arith.constant 0 : i32
    return %c0_i32, %c0_i32_0 : i32, i32
  }
  func.func @transform_2(%arg0: i32) -> (i32, i32) {
    %c0_i32 = arith.constant 0 : i32
    %c0_i32_0 = arith.constant 0 : i32
    %c0_i32_1 = arith.constant 0 : i32
    return %c0_i32, %c0_i32_0 : i32, i32
  }
  func.func @transform_3(%arg0: i32) -> (i32, i32) {
    %c0_i32 = arith.constant 0 : i32
    %c0_i32_0 = arith.constant 0 : i32
    %c0_i32_1 = arith.constant 0 : i32
    return %c0_i32, %c0_i32_0 : i32, i32
  }
  func.func @transform_4(%arg0: i32) -> (i32, i32) {
    %c0_i32 = arith.constant 0 : i32
    %c0_i32_0 = arith.constant 0 : i32
    %c0_i32_1 = arith.constant 0 : i32
    return %c0_i32, %c0_i32_0 : i32, i32
  }
  func.func @transform_5(%arg0: i32) -> (i32, i32) {
    %c0_i32 = arith.constant 0 : i32
    %c0_i32_0 = arith.constant 0 : i32
    %c0_i32_1 = arith.constant 0 : i32
    return %c0_i32, %c0_i32_0 : i32, i32
  }
  func.func @transform_6(%arg0: i32) -> (i32, i32) {
    %c0_i32 = arith.constant 0 : i32
    %c0_i32_0 = arith.constant 0 : i32
    %c0_i32_1 = arith.constant 0 : i32
    return %c0_i32, %c0_i32_0 : i32, i32
  }
  func.func @transform_7(%arg0: i32) -> (i32, i32) {
    %c0_i32 = arith.constant 0 : i32
    %c0_i32_0 = arith.constant 0 : i32
    %c0_i32_1 = arith.constant 0 : i32
    return %c0_i32, %c0_i32_0 : i32, i32
  }
  func.func @transform_8(%arg0: i32) -> (i32, i32) {
    %c0_i32 = arith.constant 0 : i32
    %c0_i32_0 = arith.constant 0 : i32
    %c0_i32_1 = arith.constant 0 : i32
    return %c0_i32, %c0_i32_0 : i32, i32
  }
  func.func @transform_9(%arg0: i32) -> (i32, i32) {
    %c0_i32 = arith.constant 0 : i32
    %c0_i32_0 = arith.constant 0 : i32
    %c0_i32_1 = arith.constant 0 : i32
    return %c0_i32, %c0_i32_0 : i32, i32
  }
  func.func @transform_10(%arg0: i32) -> (i32, i32) {
    %c0_i32 = arith.constant 0 : i32
    %c0_i32_0 = arith.constant 0 : i32
    %c0_i32_1 = arith.constant 0 : i32
    return %c0_i32, %c0_i32_0 : i32, i32
  }
  func.func @transform_11(%arg0: i32) -> (i32, i32) {
    %c0_i32 = arith.constant 0 : i32
    %c0_i32_0 = arith.constant 0 : i32
    return %arg0, %c0_i32 : i32, i32
  }
}

</mosaic_0001>

<llo_original>
// kernel: tpu_custom_call.1
$region0: #{tpu_custom_call.1}
  #allocation0 [shape = 'u32[]', space=smem, size = 0x4, offset = 0x4, fixed_abs, tag = 'smem constant byte address 0x4 - core index']
  #allocation1 [shape = 'u32[144,128]{1,0:T(1,128)}', space=vmem, size = 0x12000, scoped, tag = 'internal scratch']
  %s0 = inlined_call_operand.hbm [shape: f32[8,1024], index: 0, kind: input, shape index: {}]
  %s1 = inlined_call_operand.hbm [shape: bf16[1024,1024], index: 1, kind: input, shape index: {}]
  %s2 = inlined_call_operand.hbm [shape: f32[1,1024], index: 2, kind: input, shape index: {}]
  %s3 = inlined_call_operand.hbm [shape: bf16[1024,512], index: 3, kind: input, shape index: {}]
  %s4 = inlined_call_operand.hbm [shape: f32[1,512], index: 4, kind: input, shape index: {}]
  %s5 = inlined_call_operand.hbm [shape: bf16[512,256], index: 5, kind: input, shape index: {}]
  %s6 = inlined_call_operand.hbm [shape: f32[1,256], index: 6, kind: input, shape index: {}]
  %s7 = inlined_call_operand.hbm [shape: bf16[256,128], index: 7, kind: input, shape index: {}]
  %s8 = inlined_call_operand.hbm [shape: f32[1,128], index: 8, kind: input, shape index: {}]
  %s9 = inlined_call_operand.hbm [shape: bf16[128,128], index: 9, kind: input, shape index: {}]
  %s10 = inlined_call_operand.hbm [shape: f32[1,128], index: 10, kind: input, shape index: {}]
  %s11 = inlined_call_operand.hbm [shape: f32[8,128], index: 11, kind: output, shape index: {}]
  %s12 = sld [smem:[#allocation0]]
  $region98: #{tpu_custom_call.1} parent=0
    _
  %s14 = ssub.s32 1, %s12
  %s15 = scalar_select 0, %s14, %s12
  $region1: #{tpu_custom_call.1} parent=0
    #allocation2 [shape = 'u8[32768]{0}', space=vmem, size = 0x8000, scoped, tag = 'input window, operand 0, single buffered']
    #allocation3 [shape = 's32[1]{0}', space=sflag, size = 0x4, scoped, tag = 'scoped memory for tpu_custom_call.1']
    #allocation4 [shape = 's32[1]{0}', space=sflag, size = 0x4, scoped, tag = 'scoped memory for tpu_custom_call.1']
    #allocation5 [shape = 'u8[2097152]{0}', space=vmem, size = 0x200000, scoped, tag = 'input window, operand 1, single buffered']
    #allocation6 [shape = 's32[1]{0}', space=sflag, size = 0x4, scoped, tag = 'scoped memory for tpu_custom_call.1']
    #allocation7 [shape = 'u8[4096]{0}', space=vmem, size = 0x1000, scoped, tag = 'input window, operand 2, single buffered']
    #allocation8 [shape = 'u8[1048576]{0}', space=vmem, size = 0x100000, scoped, tag = 'input window, operand 3, single buffered']
    #allocation9 [shape = 's32[1]{0}', space=sflag, size = 0x4, scoped, tag = 'scoped memory for tpu_custom_call.1']
    #allocation10 [shape = 'u8[2048]{0}', space=vmem, size = 0x800, scoped, tag = 'input window, operand 4, single buffered']
    #allocation11 [shape = 'u8[262144]{0}', space=vmem, size = 0x40000, scoped, tag = 'input window, operand 5, single buffered']
    #allocation12 [shape = 's32[1]{0}', space=sflag, size = 0x4, scoped, tag = 'scoped memory for tpu_custom_call.1']
    #allocation13 [shape = 'u8[1024]{0}', space=vmem, size = 0x400, scoped, tag = 'input window, operand 6, single buffered']
    #allocation14 [shape = 'u8[65536]{0}', space=vmem, size = 0x10000, scoped, tag = 'input window, operand 7, single buffered']
    #allocation15 [shape = 's32[1]{0}', space=sflag, size = 0x4, scoped, tag = 'scoped memory for tpu_custom_call.1']
    #allocation16 [shape = 'u8[512]{0}', space=vmem, size = 0x400, scoped, tag = 'input window, operand 8, single buffered']
    #allocation17 [shape = 'u8[32768]{0}', space=vmem, size = 0x8000, scoped, tag = 'input window, operand 9, single buffered']
    #allocation18 [shape = 's32[1]{0}', space=sflag, size = 0x4, scoped, tag = 'scoped memory for tpu_custom_call.1']
    #allocation19 [shape = 'u8[512]{0}', space=vmem, size = 0x400, scoped, tag = 'input window, operand 10, single buffered']
    #allocation20 [shape = 'u8[4096]{0}', space=vmem, size = 0x1000, scoped, tag = 'output window, operand 0, single buffered']
    %16 = vsyncpa [#allocation3], 0
    %17 = vsyncpa [#allocation6], 0
    %18 = vsyncpa [#allocation9], 0
    %19 = vsyncpa [#allocation12], 0
    %20 = vsyncpa [#allocation15], 0
    %21 = vsyncpa [#allocation18], 0
    %22 = vsyncpa [#allocation4], 0
    // Predicated region
    $region2: #{tpu_custom_call.1} parent=1 // pred_check
      _
    $region3: #{tpu_custom_call.1} parent=1 // pred_check_branch
      %24 = sbr.rel (0) target = $region5
    $region4: #{tpu_custom_call.1} parent=1 // pred_region
      %s26 = ssub.s32 1024, 1024
      %27 = vsyncadd [#allocation3], %s26
      %s29 = sshll.u32 [#allocation2], 4
      %s30 = int_to_ptr.vmem [resolvable:$true] %s29
      %32 = dma.hbm_to_vmem [thread:$0]  %s0, 1024, %s30, [#allocation3]
    $region5: #{tpu_custom_call.1} parent=1 // pred_fallthru
      _
    // Predicated region
    $region6: #{tpu_custom_call.1} parent=1 // pred_check
      _
    $region7: #{tpu_custom_call.1} parent=1 // pred_check_branch
      %34 = sbr.rel (0) target = $region9
    $region8: #{tpu_custom_call.1} parent=1 // pred_region
      %s36 = ssub.s32 65536, 65536
      %37 = vsyncadd [#allocation6], %s36
      %s38 = sshll.u32 [#allocation5], 4
      %s39 = int_to_ptr.vmem [resolvable:$true] %s38
      %44 = dma.hbm_to_vmem [thread:$0]  %s1, 65536, %s39, [#allocation6], 512, 512, 32
    $region9: #{tpu_custom_call.1} parent=1 // pred_fallthru
      _
    // Predicated region
    $region10: #{tpu_custom_call.1} parent=1 // pred_check
      _
    $region11: #{tpu_custom_call.1} parent=1 // pred_check_branch
      %46 = sbr.rel (0) target = $region13
    $region12: #{tpu_custom_call.1} parent=1 // pred_region
      %s48 = ssub.s32 128, 128
      %49 = vsyncadd [#allocation6], %s48
      %s51 = sshll.u32 [#allocation7], 4
      %s52 = int_to_ptr.vmem [resolvable:$true] %s51
      %54 = dma.hbm_to_vmem [thread:$0]  %s2, 128, %s52, [#allocation6]
    $region13: #{tpu_custom_call.1} parent=1 // pred_fallthru
      _
    // Predicated region
    $region14: #{tpu_custom_call.1} parent=1 // pred_check
      _
    $region15: #{tpu_custom_call.1} parent=1 // pred_check_branch
      %56 = sbr.rel (0) target = $region17
    $region16: #{tpu_custom_call.1} parent=1 // pred_region
      %s58 = ssub.s32 32768, 32768
      %59 = vsyncadd [#allocation9], %s58
      %s60 = sshll.u32 [#allocation8], 4
      %s61 = int_to_ptr.vmem [resolvable:$true] %s60
      %66 = dma.hbm_to_vmem [thread:$0]  %s3, 32768, %s61, [#allocation9], 256, 256, 16
    $region17: #{tpu_custom_call.1} parent=1 // pred_fallthru
      _
    // Predicated region
    $region18: #{tpu_custom_call.1} parent=1 // pred_check
      _
    $region19: #{tpu_custom_call.1} parent=1 // pred_check_branch
      %68 = sbr.rel (0) target = $region21
    $region20: #{tpu_custom_call.1} parent=1 // pred_region
      %s70 = ssub.s32 64, 64
      %71 = vsyncadd [#allocation9], %s70
      %s73 = sshll.u32 [#allocation10], 4
      %s74 = int_to_ptr.vmem [resolvable:$true] %s73
      %76 = dma.hbm_to_vmem [thread:$0]  %s4, 64, %s74, [#allocation9]
    $region21: #{tpu_custom_call.1} parent=1 // pred_fallthru
      _
    // Predicated region
    $region22: #{tpu_custom_call.1} parent=1 // pred_check
      _
    $region23: #{tpu_custom_call.1} parent=1 // pred_check_branch
      %78 = sbr.rel (0) target = $region25
    $region24: #{tpu_custom_call.1} parent=1 // pred_region
      %s80 = ssub.s32 8192, 8192
      %81 = vsyncadd [#allocation12], %s80
      %s82 = sshll.u32 [#allocation11], 4
      %s83 = int_to_ptr.vmem [resolvable:$true] %s82
      %88 = dma.hbm_to_vmem [thread:$0]  %s5, 8192, %s83, [#allocation12], 128, 128, 8
    $region25: #{tpu_custom_call.1} parent=1 // pred_fallthru
      _
    // Predicated region
    $region26: #{tpu_custom_call.1} parent=1 // pred_check
      _
    $region27: #{tpu_custom_call.1} parent=1 // pred_check_branch
      %90 = sbr.rel (0) target = $region29
    $region28: #{tpu_custom_call.1} parent=1 // pred_region
      %s92 = ssub.s32 32, 32
      %93 = vsyncadd [#allocation12], %s92
      %s95 = sshll.u32 [#allocation13], 4
      %s96 = int_to_ptr.vmem [resolvable:$true] %s95
      %98 = dma.hbm_to_vmem [thread:$0]  %s6, 32, %s96, [#allocation12]
    $region29: #{tpu_custom_call.1} parent=1 // pred_fallthru
      _
    // Predicated region
    $region30: #{tpu_custom_call.1} parent=1 // pred_check
      _
    $region31: #{tpu_custom_call.1} parent=1 // pred_check_branch
      %100 = sbr.rel (0) target = $region33
    $region32: #{tpu_custom_call.1} parent=1 // pred_region
      %s102 = ssub.s32 2048, 2048
      %103 = vsyncadd [#allocation15], %s102
      %s104 = sshll.u32 [#allocation14], 4
      %s105 = int_to_ptr.vmem [resolvable:$true] %s104
      %110 = dma.hbm_to_vmem [thread:$0]  %s7, 2048, %s105, [#allocation15], 64, 64, 4
    $region33: #{tpu_custom_call.1} parent=1 // pred_fallthru
      _
    // Predicated region
    $region34: #{tpu_custom_call.1} parent=1 // pred_check
      _
    $region35: #{tpu_custom_call.1} parent=1 // pred_check_branch
      %112 = sbr.rel (0) target = $region37
    $region36: #{tpu_custom_call.1} parent=1 // pred_region
      %s114 = ssub.s32 16, 16
      %115 = vsyncadd [#allocation15], %s114
      %s117 = sshll.u32 [#allocation16], 4
      %s118 = int_to_ptr.vmem [resolvable:$true] %s117
      %120 = dma.hbm_to_vmem [thread:$0]  %s8, 16, %s118, [#allocation15]
    $region37: #{tpu_custom_call.1} parent=1 // pred_fallthru
      _
    // Predicated region
    $region38: #{tpu_custom_call.1} parent=1 // pred_check
      _
    $region39: #{tpu_custom_call.1} parent=1 // pred_check_branch
      %122 = sbr.rel (0) target = $region41
    $region40: #{tpu_custom_call.1} parent=1 // pred_region
      %s124 = ssub.s32 1024, 1024
      %125 = vsyncadd [#allocation18], %s124
      %s126 = sshll.u32 [#allocation17], 4
      %s127 = int_to_ptr.vmem [resolvable:$true] %s126
      %132 = dma.hbm_to_vmem [thread:$0]  %s9, 1024, %s127, [#allocation18], 64, 64, 4
    $region41: #{tpu_custom_call.1} parent=1 // pred_fallthru
      _
    // Predicated region
    $region42: #{tpu_custom_call.1} parent=1 // pred_check
      _
    $region43: #{tpu_custom_call.1} parent=1 // pred_check_branch
      %134 = sbr.rel (0) target = $region45
    $region44: #{tpu_custom_call.1} parent=1 // pred_region
      %s136 = ssub.s32 16, 16
      %137 = vsyncadd [#allocation18], %s136
      %s139 = sshll.u32 [#allocation19], 4
      %s140 = int_to_ptr.vmem [resolvable:$true] %s139
      %142 = dma.hbm_to_vmem [thread:$0]  %s10, 16, %s140, [#allocation18]
    $region45: #{tpu_custom_call.1} parent=1 // pred_fallthru
      _
    // Predicated region
    $region46: #{tpu_custom_call.1} parent=1 // pred_check
      _
    $region47: #{tpu_custom_call.1} parent=1 // pred_check_branch
      %144 = sbr.rel (0) target = $region49
    $region48: #{tpu_custom_call.1} parent=1 // pred_region
      %145 = dma.done [#allocation3], 1024
    $region49: #{tpu_custom_call.1} parent=1 // pred_fallthru
      _
    // Predicated region
    $region50: #{tpu_custom_call.1} parent=1 // pred_check
      _
    $region51: #{tpu_custom_call.1} parent=1 // pred_check_branch
      %147 = sbr.rel (0) target = $region53
    $region52: #{tpu_custom_call.1} parent=1 // pred_region
      %148 = dma.done [#allocation6], 65536
    $region53: #{tpu_custom_call.1} parent=1 // pred_fallthru
      _
    // Predicated region
    $region54: #{tpu_custom_call.1} parent=1 // pred_check
      _
    $region55: #{tpu_custom_call.1} parent=1 // pred_check_branch
      %150 = sbr.rel (0) target = $region57
    $region56: #{tpu_custom_call.1} parent=1 // pred_region
      %151 = dma.done [#allocation6], 128
    $region57: #{tpu_custom_call.1} parent=1 // pred_fallthru
      _
    // Predicated region
    $region58: #{tpu_custom_call.1} parent=1 // pred_check
      _
    $region59: #{tpu_custom_call.1} parent=1 // pred_check_branch
      %153 = sbr.rel (0) target = $region61
    $region60: #{tpu_custom_call.1} parent=1 // pred_region
      %154 = dma.done [#allocation9], 32768
    $region61: #{tpu_custom_call.1} parent=1 // pred_fallthru
      _
    // Predicated region
    $region62: #{tpu_custom_call.1} parent=1 // pred_check
      _
    $region63: #{tpu_custom_call.1} parent=1 // pred_check_branch
      %156 = sbr.rel (0) target = $region65
    $region64: #{tpu_custom_call.1} parent=1 // pred_region
      %157 = dma.done [#allocation9], 64
    $region65: #{tpu_custom_call.1} parent=1 // pred_fallthru
      _
    // Predicated region
    $region66: #{tpu_custom_call.1} parent=1 // pred_check
      _
    $region67: #{tpu_custom_call.1} parent=1 // pred_check_branch
      %159 = sbr.rel (0) target = $region69
    $region68: #{tpu_custom_call.1} parent=1 // pred_region
      %160 = dma.done [#allocation12], 8192
    $region69: #{tpu_custom_call.1} parent=1 // pred_fallthru
      _
    // Predicated region
    $region70: #{tpu_custom_call.1} parent=1 // pred_check
      _
    $region71: #{tpu_custom_call.1} parent=1 // pred_check_branch
      %162 = sbr.rel (0) target = $region73
    $region72: #{tpu_custom_call.1} parent=1 // pred_region
      %163 = dma.done [#allocation12], 32
    $region73: #{tpu_custom_call.1} parent=1 // pred_fallthru
      _
    // Predicated region
    $region74: #{tpu_custom_call.1} parent=1 // pred_check
      _
    $region75: #{tpu_custom_call.1} parent=1 // pred_check_branch
      %165 = sbr.rel (0) target = $region77
    $region76: #{tpu_custom_call.1} parent=1 // pred_region
      %166 = dma.done [#allocation15], 2048
    $region77: #{tpu_custom_call.1} parent=1 // pred_fallthru
      _
    // Predicated region
    $region78: #{tpu_custom_call.1} parent=1 // pred_check
      _
    $region79: #{tpu_custom_call.1} parent=1 // pred_check_branch
      %168 = sbr.rel (0) target = $region81
    $region80: #{tpu_custom_call.1} parent=1 // pred_region
      %169 = dma.done [#allocation15], 16
    $region81: #{tpu_custom_call.1} parent=1 // pred_fallthru
      _
    // Predicated region
    $region82: #{tpu_custom_call.1} parent=1 // pred_check
      _
    $region83: #{tpu_custom_call.1} parent=1 // pred_check_branch
      %171 = sbr.rel (0) target = $region85
    $region84: #{tpu_custom_call.1} parent=1 // pred_region
      %172 = dma.done [#allocation18], 1024
    $region85: #{tpu_custom_call.1} parent=1 // pred_fallthru
      _
    // Predicated region
    $region86: #{tpu_custom_call.1} parent=1 // pred_check
      _
    $region87: #{tpu_custom_call.1} parent=1 // pred_check_branch
      %174 = sbr.rel (0) target = $region89
    $region88: #{tpu_custom_call.1} parent=1 // pred_region
      %175 = dma.done [#allocation18], 16
    $region89: #{tpu_custom_call.1} parent=1 // pred_fallthru
      _
    %v177 = vld [vmem:[#allocation2] sm:$0xff]
    %v178 = vld [vmem:[#allocation2 + $0x8] sm:$0xff]
    %v179 = vld [vmem:[#allocation2 + $0x10] sm:$0xff]
    %v180 = vld [vmem:[#allocation2 + $0x18] sm:$0xff]
    %v181 = vld [vmem:[#allocation2 + $0x20] sm:$0xff]
    %v182 = vld [vmem:[#allocation2 + $0x28] sm:$0xff]
    %v183 = vld [vmem:[#allocation2 + $0x30] sm:$0xff]
    %v184 = vld [vmem:[#allocation2 + $0x38] sm:$0xff]
    %v185 = vpack.c.bf16 %v177, %v177
    %v186 = vpack.c.bf16 %v178, %v178
    %v187 = vpack.c.bf16 %v179, %v179
    %v188 = vpack.c.bf16 %v180, %v180
    %v189 = vpack.c.bf16 %v181, %v181
    %v190 = vpack.c.bf16 %v182, %v182
    %v191 = vpack.c.bf16 %v183, %v183
    %v192 = vpack.c.bf16 %v184, %v184
    %v193 = vld [vmem:[#allocation5] sm:$0xff]
    %v194 = vld [vmem:[#allocation5 + $0x8] sm:$0xff]
    %v195 = vld [vmem:[#allocation5 + $0x10] sm:$0xff]
    %v196 = vld [vmem:[#allocation5 + $0x18] sm:$0xff]
    %v197 = vld [vmem:[#allocation5 + $0x20] sm:$0xff]
    %v198 = vld [vmem:[#allocation5 + $0x28] sm:$0xff]
    %v199 = vld [vmem:[#allocation5 + $0x30] sm:$0xff]
    %v200 = vld [vmem:[#allocation5 + $0x38] sm:$0xff]
    %v201 = vld [vmem:[#allocation5 + $0x40] sm:$0xff]
    %v202 = vld [vmem:[#allocation5 + $0x48] sm:$0xff]
    %v203 = vld [vmem:[#allocation5 + $0x50] sm:$0xff]
    %v204 = vld [vmem:[#allocation5 + $0x58] sm:$0xff]
    %v205 = vld [vmem:[#allocation5 + $0x60] sm:$0xff]
    %v206 = vld [vmem:[#allocation5 + $0x68] sm:$0xff]
    %v207 = vld [vmem:[#allocation5 + $0x70] sm:$0xff]
    %v208 = vld [vmem:[#allocation5 + $0x78] sm:$0xff]
    %v209 = vld [vmem:[#allocation5 + $0x80] sm:$0xff]
    %v210 = vld [vmem:[#allocation5 + $0x88] sm:$0xff]
    %v211 = vld [vmem:[#allocation5 + $0x90] sm:$0xff]
    %v212 = vld [vmem:[#allocation5 + $0x98] sm:$0xff]
    %v213 = vld [vmem:[#allocation5 + $0xa0] sm:$0xff]
    %v214 = vld [vmem:[#allocation5 + $0xa8] sm:$0xff]
    %v215 = vld [vmem:[#allocation5 + $0xb0] sm:$0xff]
    %v216 = vld [vmem:[#allocation5 + $0xb8] sm:$0xff]
    %v217 = vld [vmem:[#allocation5 + $0xc0] sm:$0xff]
    %v218 = vld [vmem:[#allocation5 + $0xc8] sm:$0xff]
    %v219 = vld [vmem:[#allocation5 + $0xd0] sm:$0xff]
    %v220 = vld [vmem:[#allocation5 + $0xd8] sm:$0xff]
    %v221 = vld [vmem:[#allocation5 + $0xe0] sm:$0xff]
    %v222 = vld [vmem:[#allocation5 + $0xe8] sm:$0xff]
    %v223 = vld [vmem:[#allocation5 + $0xf0] sm:$0xff]
    %v224 = vld [vmem:[#allocation5 + $0xf8] sm:$0xff]
    %v225 = vld [vmem:[#allocation5 + $0x100] sm:$0xff]
    %v226 = vld [vmem:[#allocation5 + $0x108] sm:$0xff]
    %v227 = vld [vmem:[#allocation5 + $0x110] sm:$0xff]
    %v228 = vld [vmem:[#allocation5 + $0x118] sm:$0xff]
    %v229 = vld [vmem:[#allocation5 + $0x120] sm:$0xff]
    %v230 = vld [vmem:[#allocation5 + $0x128] sm:$0xff]
    %v231 = vld [vmem:[#allocation5 + $0x130] sm:$0xff]
    %v232 = vld [vmem:[#allocation5 + $0x138] sm:$0xff]
    %v233 = vld [vmem:[#allocation5 + $0x140] sm:$0xff]
    %v234 = vld [vmem:[#allocation5 + $0x148] sm:$0xff]
    %v235 = vld [vmem:[#allocation5 + $0x150] sm:$0xff]
    %v236 = vld [vmem:[#allocation5 + $0x158] sm:$0xff]
    %v237 = vld [vmem:[#allocation5 + $0x160] sm:$0xff]
    %v238 = vld [vmem:[#allocation5 + $0x168] sm:$0xff]
    %v239 = vld [vmem:[#allocation5 + $0x170] sm:$0xff]
    %v240 = vld [vmem:[#allocation5 + $0x178] sm:$0xff]
    %v241 = vld [vmem:[#allocation5 + $0x180] sm:$0xff]
    %v242 = vld [vmem:[#allocation5 + $0x188] sm:$0xff]
    %v243 = vld [vmem:[#allocation5 + $0x190] sm:$0xff]
    %v244 = vld [vmem:[#allocation5 + $0x198] sm:$0xff]
    %v245 = vld [vmem:[#allocation5 + $0x1a0] sm:$0xff]
    %v246 = vld [vmem:[#allocation5 + $0x1a8] sm:$0xff]
    %v247 = vld [vmem:[#allocation5 + $0x1b0] sm:$0xff]
    %v248 = vld [vmem:[#allocation5 + $0x1b8] sm:$0xff]
    %v249 = vld [vmem:[#allocation5 + $0x1c0] sm:$0xff]
    %v250 = vld [vmem:[#allocation5 + $0x1c8] sm:$0xff]
    %v251 = vld [vmem:[#allocation5 + $0x1d0] sm:$0xff]
    %v252 = vld [vmem:[#allocation5 + $0x1d8] sm:$0xff]
    %v253 = vld [vmem:[#allocation5 + $0x1e0] sm:$0xff]
    %v254 = vld [vmem:[#allocation5 + $0x1e8] sm:$0xff]
    %v255 = vld [vmem:[#allocation5 + $0x1f0] sm:$0xff]
    %v256 = vld [vmem:[#allocation5 + $0x1f8] sm:$0xff]
    %v257 = vld [vmem:[#allocation5 + $0x200] sm:$0xff]
    %v258 = vld [vmem:[#allocation5 + $0x208] sm:$0xff]
    %v259 = vld [vmem:[#allocation5 + $0x210] sm:$0xff]
    %v260 = vld [vmem:[#allocation5 + $0x218] sm:$0xff]
    %v261 = vld [vmem:[#allocation5 + $0x220] sm:$0xff]
    %v262 = vld [vmem:[#allocation5 + $0x228] sm:$0xff]
    %v263 = vld [vmem:[#allocation5 + $0x230] sm:$0xff]
    %v264 = vld [vmem:[#allocation5 + $0x238] sm:$0xff]
    %v265 = vld [vmem:[#allocation5 + $0x240] sm:$0xff]
    %v266 = vld [vmem:[#allocation5 + $0x248] sm:$0xff]
    %v267 = vld [vmem:[#allocation5 + $0x250] sm:$0xff]
    %v268 = vld [vmem:[#allocation5 + $0x258] sm:$0xff]
    %v269 = vld [vmem:[#allocation5 + $0x260] sm:$0xff]
    %v270 = vld [vmem:[#allocation5 + $0x268] sm:$0xff]
    %v271 = vld [vmem:[#allocation5 + $0x270] sm:$0xff]
    %v272 = vld [vmem:[#allocation5 + $0x278] sm:$0xff]
    %v273 = vld [vmem:[#allocation5 + $0x280] sm:$0xff]
    %v274 = vld [vmem:[#allocation5 + $0x288] sm:$0xff]
    %v275 = vld [vmem:[#allocation5 + $0x290] sm:$0xff]
    %v276 = vld [vmem:[#allocation5 + $0x298] sm:$0xff]
    %v277 = vld [vmem:[#allocation5 + $0x2a0] sm:$0xff]
    %v278 = vld [vmem:[#allocation5 + $0x2a8] sm:$0xff]
    %v279 = vld [vmem:[#allocation5 + $0x2b0] sm:$0xff]
    %v280 = vld [vmem:[#allocation5 + $0x2b8] sm:$0xff]
    %v281 = vld [vmem:[#allocation5 + $0x2c0] sm:$0xff]
    %v282 = vld [vmem:[#allocation5 + $0x2c8] sm:$0xff]
    %v283 = vld [vmem:[#allocation5 + $0x2d0] sm:$0xff]
    %v284 = vld [vmem:[#allocation5 + $0x2d8] sm:$0xff]
    %v285 = vld [vmem:[#allocation5 + $0x2e0] sm:$0xff]
    %v286 = vld [vmem:[#allocation5 + $0x2e8] sm:$0xff]
    %v287 = vld [vmem:[#allocation5 + $0x2f0] sm:$0xff]
    %v288 = vld [vmem:[#allocation5 + $0x2f8] sm:$0xff]
    %v289 = vld [vmem:[#allocation5 + $0x300] sm:$0xff]
    %v290 = vld [vmem:[#allocation5 + $0x308] sm:$0xff]
    %v291 = vld [vmem:[#allocation5 + $0x310] sm:$0xff]
    %v292 = vld [vmem:[#allocation5 + $0x318] sm:$0xff]
    %v293 = vld [vmem:[#allocation5 + $0x320] sm:$0xff]
    %v294 = vld [vmem:[#allocation5 + $0x328] sm:$0xff]
    %v295 = vld [vmem:[#allocation5 + $0x330] sm:$0xff]
    %v296 = vld [vmem:[#allocation5 + $0x338] sm:$0xff]
    %v297 = vld [vmem:[#allocation5 + $0x340] sm:$0xff]
    %v298 = vld [vmem:[#allocation5 + $0x348] sm:$0xff]
    %v299 = vld [vmem:[#allocation5 + $0x350] sm:$0xff]
    %v300 = vld [vmem:[#allocation5 + $0x358] sm:$0xff]
    %v301 = vld [vmem:[#allocation5 + $0x360] sm:$0xff]
    %v302 = vld [vmem:[#allocation5 + $0x368] sm:$0xff]
    %v303 = vld [vmem:[#allocation5 + $0x370] sm:$0xff]
    %v304 = vld [vmem:[#allocation5 + $0x378] sm:$0xff]
    %v305 = vld [vmem:[#allocation5 + $0x380] sm:$0xff]
    %v306 = vld [vmem:[#allocation5 + $0x388] sm:$0xff]
    %v307 = vld [vmem:[#allocation5 + $0x390] sm:$0xff]
    %v308 = vld [vmem:[#allocation5 + $0x398] sm:$0xff]
    %v309 = vld [vmem:[#allocation5 + $0x3a0] sm:$0xff]
    %v310 = vld [vmem:[#allocation5 + $0x3a8] sm:$0xff]
    %v311 = vld [vmem:[#allocation5 + $0x3b0] sm:$0xff]
    %v312 = vld [vmem:[#allocation5 + $0x3b8] sm:$0xff]
    %v313 = vld [vmem:[#allocation5 + $0x3c0] sm:$0xff]
    %v314 = vld [vmem:[#allocation5 + $0x3c8] sm:$0xff]
    %v315 = vld [vmem:[#allocation5 + $0x3d0] sm:$0xff]
    %v316 = vld [vmem:[#allocation5 + $0x3d8] sm:$0xff]
    %v317 = vld [vmem:[#allocation5 + $0x3e0] sm:$0xff]
    %v318 = vld [vmem:[#allocation5 + $0x3e8] sm:$0xff]
    %v319 = vld [vmem:[#allocation5 + $0x3f0] sm:$0xff]
    %v320 = vld [vmem:[#allocation5 + $0x3f8] sm:$0xff]
    %v321 = vld [vmem:[#allocation5 + $0x400] sm:$0xff]
    %v322 = vld [vmem:[#allocation5 + $0x408] sm:$0xff]
    %v323 = vld [vmem:[#allocation5 + $0x410] sm:$0xff]
    %v324 = vld [vmem:[#allocation5 + $0x418] sm:$0xff]
    %v325 = vld [vmem:[#allocation5 + $0x420] sm:$0xff]
    %v326 = vld [vmem:[#allocation5 + $0x428] sm:$0xff]
    %v327 = vld [vmem:[#allocation5 + $0x430] sm:$0xff]
    %v328 = vld [vmem:[#allocation5 + $0x438] sm:$0xff]
    %v329 = vld [vmem:[#allocation5 + $0x440] sm:$0xff]
    %v330 = vld [vmem:[#allocation5 + $0x448] sm:$0xff]
    %v331 = vld [vmem:[#allocation5 + $0x450] sm:$0xff]
    %v332 = vld [vmem:[#allocation5 + $0x458] sm:$0xff]
    %v333 = vld [vmem:[#allocation5 + $0x460] sm:$0xff]
    %v334 = vld [vmem:[#allocation5 + $0x468] sm:$0xff]
    %v335 = vld [vmem:[#allocation5 + $0x470] sm:$0xff]
    %v336 = vld [vmem:[#allocation5 + $0x478] sm:$0xff]
    %v337 = vld [vmem:[#allocation5 + $0x480] sm:$0xff]
    %v338 = vld [vmem:[#allocation5 + $0x488] sm:$0xff]
    %v339 = vld [vmem:[#allocation5 + $0x490] sm:$0xff]
    %v340 = vld [vmem:[#allocation5 + $0x498] sm:$0xff]
    %v341 = vld [vmem:[#allocation5 + $0x4a0] sm:$0xff]
    %v342 = vld [vmem:[#allocation5 + $0x4a8] sm:$0xff]
    %v343 = vld [vmem:[#allocation5 + $0x4b0] sm:$0xff]
    %v344 = vld [vmem:[#allocation5 + $0x4b8] sm:$0xff]
    %v345 = vld [vmem:[#allocation5 + $0x4c0] sm:$0xff]
    %v346 = vld [vmem:[#allocation5 + $0x4c8] sm:$0xff]
    %v347 = vld [vmem:[#allocation5 + $0x4d0] sm:$0xff]
    %v348 = vld [vmem:[#allocation5 + $0x4d8] sm:$0xff]
    %v349 = vld [vmem:[#allocation5 + $0x4e0] sm:$0xff]
    %v350 = vld [vmem:[#allocation5 + $0x4e8] sm:$0xff]
    %v351 = vld [vmem:[#allocation5 + $0x4f0] sm:$0xff]
    %v352 = vld [vmem:[#allocation5 + $0x4f8] sm:$0xff]
    %v353 = vld [vmem:[#allocation5 + $0x500] sm:$0xff]
    %v354 = vld [vmem:[#allocation5 + $0x508] sm:$0xff]
    %v355 = vld [vmem:[#allocation5 + $0x510] sm:$0xff]
    %v356 = vld [vmem:[#allocation5 + $0x518] sm:$0xff]
    %v357 = vld [vmem:[#allocation5 + $0x520] sm:$0xff]
    %v358 = vld [vmem:[#allocation5 + $0x528] sm:$0xff]
    %v359 = vld [vmem:[#allocation5 + $0x530] sm:$0xff]
    %v360 = vld [vmem:[#allocation5 + $0x538] sm:$0xff]
    %v361 = vld [vmem:[#allocation5 + $0x540] sm:$0xff]
    %v362 = vld [vmem:[#allocation5 + $0x548] sm:$0xff]
    %v363 = vld [vmem:[#allocation5 + $0x550] sm:$0xff]
    %v364 = vld [vmem:[#allocation5 + $0x558] sm:$0xff]
    %v365 = vld [vmem:[#allocation5 + $0x560] sm:$0xff]
    %v366 = vld [vmem:[#allocation5 + $0x568] sm:$0xff]
    %v367 = vld [vmem:[#allocation5 + $0x570] sm:$0xff]
    %v368 = vld [vmem:[#allocation5 + $0x578] sm:$0xff]
    %v369 = vld [vmem:[#allocation5 + $0x580] sm:$0xff]
    %v370 = vld [vmem:[#allocation5 + $0x588] sm:$0xff]
    %v371 = vld [vmem:[#allocation5 + $0x590] sm:$0xff]
    %v372 = vld [vmem:[#allocation5 + $0x598] sm:$0xff]
    %v373 = vld [vmem:[#allocation5 + $0x5a0] sm:$0xff]
    %v374 = vld [vmem:[#allocation5 + $0x5a8] sm:$0xff]
    %v375 = vld [vmem:[#allocation5 + $0x5b0] sm:$0xff]
    %v376 = vld [vmem:[#allocation5 + $0x5b8] sm:$0xff]
    %v377 = vld [vmem:[#allocation5 + $0x5c0] sm:$0xff]
    %v378 = vld [vmem:[#allocation5 + $0x5c8] sm:$0xff]
    %v379 = vld [vmem:[#allocation5 + $0x5d0] sm:$0xff]
    %v380 = vld [vmem:[#allocation5 + $0x5d8] sm:$0xff]
    %v381 = vld [vmem:[#allocation5 + $0x5e0] sm:$0xff]
    %v382 = vld [vmem:[#allocation5 + $0x5e8] sm:$0xff]
    %v383 = vld [vmem:[#allocation5 + $0x5f0] sm:$0xff]
    %v384 = vld [vmem:[#allocation5 + $0x5f8] sm:$0xff]
    %v385 = vld [vmem:[#allocation5 + $0x600] sm:$0xff]
    %v386 = vld [vmem:[#allocation5 + $0x608] sm:$0xff]
    %v387 = vld [vmem:[#allocation5 + $0x610] sm:$0xff]
    %v388 = vld [vmem:[#allocation5 + $0x618] sm:$0xff]
    %v389 = vld [vmem:[#allocation5 + $0x620] sm:$0xff]
    %v390 = vld [vmem:[#allocation5 + $0x628] sm:$0xff]
    %v391 = vld [vmem:[#allocation5 + $0x630] sm:$0xff]
    %v392 = vld [vmem:[#allocation5 + $0x638] sm:$0xff]
    %v393 = vld [vmem:[#allocation5 + $0x640] sm:$0xff]
    %v394 = vld [vmem:[#allocation5 + $0x648] sm:$0xff]
    %v395 = vld [vmem:[#allocation5 + $0x650] sm:$0xff]
    %v396 = vld [vmem:[#allocation5 + $0x658] sm:$0xff]
    %v397 = vld [vmem:[#allocation5 + $0x660] sm:$0xff]
    %v398 = vld [vmem:[#allocation5 + $0x668] sm:$0xff]
    %v399 = vld [vmem:[#allocation5 + $0x670] sm:$0xff]
    %v400 = vld [vmem:[#allocation5 + $0x678] sm:$0xff]
    %v401 = vld [vmem:[#allocation5 + $0x680] sm:$0xff]
    %v402 = vld [vmem:[#allocation5 + $0x688] sm:$0xff]
    %v403 = vld [vmem:[#allocation5 + $0x690] sm:$0xff]
    %v404 = vld [vmem:[#allocation5 + $0x698] sm:$0xff]
    %v405 = vld [vmem:[#allocation5 + $0x6a0] sm:$0xff]
    %v406 = vld [vmem:[#allocation5 + $0x6a8] sm:$0xff]
    %v407 = vld [vmem:[#allocation5 + $0x6b0] sm:$0xff]
    %v408 = vld [vmem:[#allocation5 + $0x6b8] sm:$0xff]
    %v409 = vld [vmem:[#allocation5 + $0x6c0] sm:$0xff]
    %v410 = vld [vmem:[#allocation5 + $0x6c8] sm:$0xff]
    %v411 = vld [vmem:[#allocation5 + $0x6d0] sm:$0xff]
    %v412 = vld [vmem:[#allocation5 + $0x6d8] sm:$0xff]
    %v413 = vld [vmem:[#allocation5 + $0x6e0] sm:$0xff]
    %v414 = vld [vmem:[#allocation5 + $0x6e8] sm:$0xff]
    %v415 = vld [vmem:[#allocation5 + $0x6f0] sm:$0xff]
    %v416 = vld [vmem:[#allocation5 + $0x6f8] sm:$0xff]
    %v417 = vld [vmem:[#allocation5 + $0x700] sm:$0xff]
    %v418 = vld [vmem:[#allocation5 + $0x708] sm:$0xff]
    %v419 = vld [vmem:[#allocation5 + $0x710] sm:$0xff]
    %v420 = vld [vmem:[#allocation5 + $0x718] sm:$0xff]
    %v421 = vld [vmem:[#allocation5 + $0x720] sm:$0xff]
    %v422 = vld [vmem:[#allocation5 + $0x728] sm:$0xff]
    %v423 = vld [vmem:[#allocation5 + $0x730] sm:$0xff]
    %v424 = vld [vmem:[#allocation5 + $0x738] sm:$0xff]
    %v425 = vld [vmem:[#allocation5 + $0x740] sm:$0xff]
    %v426 = vld [vmem:[#allocation5 + $0x748] sm:$0xff]
    %v427 = vld [vmem:[#allocation5 + $0x750] sm:$0xff]
    %v428 = vld [vmem:[#allocation5 + $0x758] sm:$0xff]
    %v429 = vld [vmem:[#allocation5 + $0x760] sm:$0xff]
    %v430 = vld [vmem:[#allocation5 + $0x768] sm:$0xff]
    %v431 = vld [vmem:[#allocation5 + $0x770] sm:$0xff]
    %v432 = vld [vmem:[#allocation5 + $0x778] sm:$0xff]
    %v433 = vld [vmem:[#allocation5 + $0x780] sm:$0xff]
    %v434 = vld [vmem:[#allocation5 + $0x788] sm:$0xff]
    %v435 = vld [vmem:[#allocation5 + $0x790] sm:$0xff]
    %v436 = vld [vmem:[#allocation5 + $0x798] sm:$0xff]
    %v437 = vld [vmem:[#allocation5 + $0x7a0] sm:$0xff]
    %v438 = vld [vmem:[#allocation5 + $0x7a8] sm:$0xff]
    %v439 = vld [vmem:[#allocation5 + $0x7b0] sm:$0xff]
    %v440 = vld [vmem:[#allocation5 + $0x7b8] sm:$0xff]
    %v441 = vld [vmem:[#allocation5 + $0x7c0] sm:$0xff]
    %v442 = vld [vmem:[#allocation5 + $0x7c8] sm:$0xff]
    %v443 = vld [vmem:[#allocation5 + $0x7d0] sm:$0xff]
    %v444 = vld [vmem:[#allocation5 + $0x7d8] sm:$0xff]
    %v445 = vld [vmem:[#allocation5 + $0x7e0] sm:$0xff]
    %v446 = vld [vmem:[#allocation5 + $0x7e8] sm:$0xff]
    %v447 = vld [vmem:[#allocation5 + $0x7f0] sm:$0xff]
    %v448 = vld [vmem:[#allocation5 + $0x7f8] sm:$0xff]
    %v449 = vld [vmem:[#allocation5 + $0x800] sm:$0xff]
    %v450 = vld [vmem:[#allocation5 + $0x808] sm:$0xff]
    %v451 = vld [vmem:[#allocation5 + $0x810] sm:$0xff]
    %v452 = vld [vmem:[#allocation5 + $0x818] sm:$0xff]
    %v453 = vld [vmem:[#allocation5 + $0x820] sm:$0xff]
    %v454 = vld [vmem:[#allocation5 + $0x828] sm:$0xff]
    %v455 = vld [vmem:[#allocation5 + $0x830] sm:$0xff]
    %v456 = vld [vmem:[#allocation5 + $0x838] sm:$0xff]
    %v457 = vld [vmem:[#allocation5 + $0x840] sm:$0xff]
    %v458 = vld [vmem:[#allocation5 + $0x848] sm:$0xff]
    %v459 = vld [vmem:[#allocation5 + $0x850] sm:$0xff]
    %v460 = vld [vmem:[#allocation5 + $0x858] sm:$0xff]
    %v461 = vld [vmem:[#allocation5 + $0x860] sm:$0xff]
    %v462 = vld [vmem:[#allocation5 + $0x868] sm:$0xff]
    %v463 = vld [vmem:[#allocation5 + $0x870] sm:$0xff]
    %v464 = vld [vmem:[#allocation5 + $0x878] sm:$0xff]
    %v465 = vld [vmem:[#allocation5 + $0x880] sm:$0xff]
    %v466 = vld [vmem:[#allocation5 + $0x888] sm:$0xff]
    %v467 = vld [vmem:[#allocation5 + $0x890] sm:$0xff]
    %v468 = vld [vmem:[#allocation5 + $0x898] sm:$0xff]
    %v469 = vld [vmem:[#allocation5 + $0x8a0] sm:$0xff]
    %v470 = vld [vmem:[#allocation5 + $0x8a8] sm:$0xff]
    %v471 = vld [vmem:[#allocation5 + $0x8b0] sm:$0xff]
    %v472 = vld [vmem:[#allocation5 + $0x8b8] sm:$0xff]
    %v473 = vld [vmem:[#allocation5 + $0x8c0] sm:$0xff]
    %v474 = vld [vmem:[#allocation5 + $0x8c8] sm:$0xff]
    %v475 = vld [vmem:[#allocation5 + $0x8d0] sm:$0xff]
    %v476 = vld [vmem:[#allocation5 + $0x8d8] sm:$0xff]
    %v477 = vld [vmem:[#allocation5 + $0x8e0] sm:$0xff]
    %v478 = vld [vmem:[#allocation5 + $0x8e8] sm:$0xff]
    %v479 = vld [vmem:[#allocation5 + $0x8f0] sm:$0xff]
    %v480 = vld [vmem:[#allocation5 + $0x8f8] sm:$0xff]
    %v481 = vld [vmem:[#allocation5 + $0x900] sm:$0xff]
    %v482 = vld [vmem:[#allocation5 + $0x908] sm:$0xff]
    %v483 = vld [vmem:[#allocation5 + $0x910] sm:$0xff]
    %v484 = vld [vmem:[#allocation5 + $0x918] sm:$0xff]
    %v485 = vld [vmem:[#allocation5 + $0x920] sm:$0xff]
    %v486 = vld [vmem:[#allocation5 + $0x928] sm:$0xff]
    %v487 = vld [vmem:[#allocation5 + $0x930] sm:$0xff]
    %v488 = vld [vmem:[#allocation5 + $0x938] sm:$0xff]
    %v489 = vld [vmem:[#allocation5 + $0x940] sm:$0xff]
    %v490 = vld [vmem:[#allocation5 + $0x948] sm:$0xff]
    %v491 = vld [vmem:[#allocation5 + $0x950] sm:$0xff]
    %v492 = vld [vmem:[#allocation5 + $0x958] sm:$0xff]
    %v493 = vld [vmem:[#allocation5 + $0x960] sm:$0xff]
    %v494 = vld [vmem:[#allocation5 + $0x968] sm:$0xff]
    %v495 = vld [vmem:[#allocation5 + $0x970] sm:$0xff]
    %v496 = vld [vmem:[#allocation5 + $0x978] sm:$0xff]
    %v497 = vld [vmem:[#allocation5 + $0x980] sm:$0xff]
    %v498 = vld [vmem:[#allocation5 + $0x988] sm:$0xff]
    %v499 = vld [vmem:[#allocation5 + $0x990] sm:$0xff]
    %v500 = vld [vmem:[#allocation5 + $0x998] sm:$0xff]
    %v501 = vld [vmem:[#allocation5 + $0x9a0] sm:$0xff]
    %v502 = vld [vmem:[#allocation5 + $0x9a8] sm:$0xff]
    %v503 = vld [vmem:[#allocation5 + $0x9b0] sm:$0xff]
    %v504 = vld [vmem:[#allocation5 + $0x9b8] sm:$0xff]
    %v505 = vld [vmem:[#allocation5 + $0x9c0] sm:$0xff]
    %v506 = vld [vmem:[#allocation5 + $0x9c8] sm:$0xff]
    %v507 = vld [vmem:[#allocation5 + $0x9d0] sm:$0xff]
    %v508 = vld [vmem:[#allocation5 + $0x9d8] sm:$0xff]
    %v509 = vld [vmem:[#allocation5 + $0x9e0] sm:$0xff]
    %v510 = vld [vmem:[#allocation5 + $0x9e8] sm:$0xff]
    %v511 = vld [vmem:[#allocation5 + $0x9f0] sm:$0xff]
    %v512 = vld [vmem:[#allocation5 + $0x9f8] sm:$0xff]
    %v513 = vld [vmem:[#allocation5 + $0xa00] sm:$0xff]
    %v514 = vld [vmem:[#allocation5 + $0xa08] sm:$0xff]
    %v515 = vld [vmem:[#allocation5 + $0xa10] sm:$0xff]
    %v516 = vld [vmem:[#allocation5 + $0xa18] sm:$0xff]
    %v517 = vld [vmem:[#allocation5 + $0xa20] sm:$0xff]
    %v518 = vld [vmem:[#allocation5 + $0xa28] sm:$0xff]
    %v519 = vld [vmem:[#allocation5 + $0xa30] sm:$0xff]
    %v520 = vld [vmem:[#allocation5 + $0xa38] sm:$0xff]
    %v521 = vld [vmem:[#allocation5 + $0xa40] sm:$0xff]
    %v522 = vld [vmem:[#allocation5 + $0xa48] sm:$0xff]
    %v523 = vld [vmem:[#allocation5 + $0xa50] sm:$0xff]
    %v524 = vld [vmem:[#allocation5 + $0xa58] sm:$0xff]
    %v525 = vld [vmem:[#allocation5 + $0xa60] sm:$0xff]
    %v526 = vld [vmem:[#allocation5 + $0xa68] sm:$0xff]
    %v527 = vld [vmem:[#allocation5 + $0xa70] sm:$0xff]
    %v528 = vld [vmem:[#allocation5 + $0xa78] sm:$0xff]
    %v529 = vld [vmem:[#allocation5 + $0xa80] sm:$0xff]
    %v530 = vld [vmem:[#allocation5 + $0xa88] sm:$0xff]
    %v531 = vld [vmem:[#allocation5 + $0xa90] sm:$0xff]
    %v532 = vld [vmem:[#allocation5 + $0xa98] sm:$0xff]
    %v533 = vld [vmem:[#allocation5 + $0xaa0] sm:$0xff]
    %v534 = vld [vmem:[#allocation5 + $0xaa8] sm:$0xff]
    %v535 = vld [vmem:[#allocation5 + $0xab0] sm:$0xff]
    %v536 = vld [vmem:[#allocation5 + $0xab8] sm:$0xff]
    %v537 = vld [vmem:[#allocation5 + $0xac0] sm:$0xff]
    %v538 = vld [vmem:[#allocation5 + $0xac8] sm:$0xff]
    %v539 = vld [vmem:[#allocation5 + $0xad0] sm:$0xff]
    %v540 = vld [vmem:[#allocation5 + $0xad8] sm:$0xff]
    %v541 = vld [vmem:[#allocation5 + $0xae0] sm:$0xff]
    %v542 = vld [vmem:[#allocation5 + $0xae8] sm:$0xff]
    %v543 = vld [vmem:[#allocation5 + $0xaf0] sm:$0xff]
    %v544 = vld [vmem:[#allocation5 + $0xaf8] sm:$0xff]
    %v545 = vld [vmem:[#allocation5 + $0xb00] sm:$0xff]
    %v546 = vld [vmem:[#allocation5 + $0xb08] sm:$0xff]
    %v547 = vld [vmem:[#allocation5 + $0xb10] sm:$0xff]
    %v548 = vld [vmem:[#allocation5 + $0xb18] sm:$0xff]
    %v549 = vld [vmem:[#allocation5 + $0xb20] sm:$0xff]
    %v550 = vld [vmem:[#allocation5 + $0xb28] sm:$0xff]
    %v551 = vld [vmem:[#allocation5 + $0xb30] sm:$0xff]
    %v552 = vld [vmem:[#allocation5 + $0xb38] sm:$0xff]
    %v553 = vld [vmem:[#allocation5 + $0xb40] sm:$0xff]
    %v554 = vld [vmem:[#allocation5 + $0xb48] sm:$0xff]
    %v555 = vld [vmem:[#allocation5 + $0xb50] sm:$0xff]
    %v556 = vld [vmem:[#allocation5 + $0xb58] sm:$0xff]
    %v557 = vld [vmem:[#allocation5 + $0xb60] sm:$0xff]
    %v558 = vld [vmem:[#allocation5 + $0xb68] sm:$0xff]
    %v559 = vld [vmem:[#allocation5 + $0xb70] sm:$0xff]
    %v560 = vld [vmem:[#allocation5 + $0xb78] sm:$0xff]
    %v561 = vld [vmem:[#allocation5 + $0xb80] sm:$0xff]
    %v562 = vld [vmem:[#allocation5 + $0xb88] sm:$0xff]
    %v563 = vld [vmem:[#allocation5 + $0xb90] sm:$0xff]
    %v564 = vld [vmem:[#allocation5 + $0xb98] sm:$0xff]
    %v565 = vld [vmem:[#allocation5 + $0xba0] sm:$0xff]
    %v566 = vld [vmem:[#allocation5 + $0xba8] sm:$0xff]
    %v567 = vld [vmem:[#allocation5 + $0xbb0] sm:$0xff]
    %v568 = vld [vmem:[#allocation5 + $0xbb8] sm:$0xff]
    %v569 = vld [vmem:[#allocation5 + $0xbc0] sm:$0xff]
    %v570 = vld [vmem:[#allocation5 + $0xbc8] sm:$0xff]
    %v571 = vld [vmem:[#allocation5 + $0xbd0] sm:$0xff]
    %v572 = vld [vmem:[#allocation5 + $0xbd8] sm:$0xff]
    %v573 = vld [vmem:[#allocation5 + $0xbe0] sm:$0xff]
    %v574 = vld [vmem:[#allocation5 + $0xbe8] sm:$0xff]
    %v575 = vld [vmem:[#allocation5 + $0xbf0] sm:$0xff]
    %v576 = vld [vmem:[#allocation5 + $0xbf8] sm:$0xff]
    %v577 = vld [vmem:[#allocation5 + $0xc00] sm:$0xff]
    %v578 = vld [vmem:[#allocation5 + $0xc08] sm:$0xff]
    %v579 = vld [vmem:[#allocation5 + $0xc10] sm:$0xff]
    %v580 = vld [vmem:[#allocation5 + $0xc18] sm:$0xff]
    %v581 = vld [vmem:[#allocation5 + $0xc20] sm:$0xff]
    %v582 = vld [vmem:[#allocation5 + $0xc28] sm:$0xff]
    %v583 = vld [vmem:[#allocation5 + $0xc30] sm:$0xff]
    %v584 = vld [vmem:[#allocation5 + $0xc38] sm:$0xff]
    %v585 = vld [vmem:[#allocation5 + $0xc40] sm:$0xff]
    %v586 = vld [vmem:[#allocation5 + $0xc48] sm:$0xff]
    %v587 = vld [vmem:[#allocation5 + $0xc50] sm:$0xff]
    %v588 = vld [vmem:[#allocation5 + $0xc58] sm:$0xff]
    %v589 = vld [vmem:[#allocation5 + $0xc60] sm:$0xff]
    %v590 = vld [vmem:[#allocation5 + $0xc68] sm:$0xff]
    %v591 = vld [vmem:[#allocation5 + $0xc70] sm:$0xff]
    %v592 = vld [vmem:[#allocation5 + $0xc78] sm:$0xff]
    %v593 = vld [vmem:[#allocation5 + $0xc80] sm:$0xff]
    %v594 = vld [vmem:[#allocation5 + $0xc88] sm:$0xff]
    %v595 = vld [vmem:[#allocation5 + $0xc90] sm:$0xff]
    %v596 = vld [vmem:[#allocation5 + $0xc98] sm:$0xff]
    %v597 = vld [vmem:[#allocation5 + $0xca0] sm:$0xff]
    %v598 = vld [vmem:[#allocation5 + $0xca8] sm:$0xff]
    %v599 = vld [vmem:[#allocation5 + $0xcb0] sm:$0xff]
    %v600 = vld [vmem:[#allocation5 + $0xcb8] sm:$0xff]
    %v601 = vld [vmem:[#allocation5 + $0xcc0] sm:$0xff]
    %v602 = vld [vmem:[#allocation5 + $0xcc8] sm:$0xff]
    %v603 = vld [vmem:[#allocation5 + $0xcd0] sm:$0xff]
    %v604 = vld [vmem:[#allocation5 + $0xcd8] sm:$0xff]
    %v605 = vld [vmem:[#allocation5 + $0xce0] sm:$0xff]
    %v606 = vld [vmem:[#allocation5 + $0xce8] sm:$0xff]
    %v607 = vld [vmem:[#allocation5 + $0xcf0] sm:$0xff]
    %v608 = vld [vmem:[#allocation5 + $0xcf8] sm:$0xff]
    %v609 = vld [vmem:[#allocation5 + $0xd00] sm:$0xff]
    %v610 = vld [vmem:[#allocation5 + $0xd08] sm:$0xff]
    %v611 = vld [vmem:[#allocation5 + $0xd10] sm:$0xff]
    %v612 = vld [vmem:[#allocation5 + $0xd18] sm:$0xff]
    %v613 = vld [vmem:[#allocation5 + $0xd20] sm:$0xff]
    %v614 = vld [vmem:[#allocation5 + $0xd28] sm:$0xff]
    %v615 = vld [vmem:[#allocation5 + $0xd30] sm:$0xff]
    %v616 = vld [vmem:[#allocation5 + $0xd38] sm:$0xff]
    %v617 = vld [vmem:[#allocation5 + $0xd40] sm:$0xff]
    %v618 = vld [vmem:[#allocation5 + $0xd48] sm:$0xff]
    %v619 = vld [vmem:[#allocation5 + $0xd50] sm:$0xff]
    %v620 = vld [vmem:[#allocation5 + $0xd58] sm:$0xff]
    %v621 = vld [vmem:[#allocation5 + $0xd60] sm:$0xff]
    %v622 = vld [vmem:[#allocation5 + $0xd68] sm:$0xff]
    %v623 = vld [vmem:[#allocation5 + $0xd70] sm:$0xff]
    %v624 = vld [vmem:[#allocation5 + $0xd78] sm:$0xff]
    %v625 = vld [vmem:[#allocation5 + $0xd80] sm:$0xff]
    %v626 = vld [vmem:[#allocation5 + $0xd88] sm:$0xff]
    %v627 = vld [vmem:[#allocation5 + $0xd90] sm:$0xff]
    %v628 = vld [vmem:[#allocation5 + $0xd98] sm:$0xff]
    %v629 = vld [vmem:[#allocation5 + $0xda0] sm:$0xff]
    %v630 = vld [vmem:[#allocation5 + $0xda8] sm:$0xff]
    %v631 = vld [vmem:[#allocation5 + $0xdb0] sm:$0xff]
    %v632 = vld [vmem:[#allocation5 + $0xdb8] sm:$0xff]
    %v633 = vld [vmem:[#allocation5 + $0xdc0] sm:$0xff]
    %v634 = vld [vmem:[#allocation5 + $0xdc8] sm:$0xff]
    %v635 = vld [vmem:[#allocation5 + $0xdd0] sm:$0xff]
    %v636 = vld [vmem:[#allocation5 + $0xdd8] sm:$0xff]
    %v637 = vld [vmem:[#allocation5 + $0xde0] sm:$0xff]
    %v638 = vld [vmem:[#allocation5 + $0xde8] sm:$0xff]
    %v639 = vld [vmem:[#allocation5 + $0xdf0] sm:$0xff]
    %v640 = vld [vmem:[#allocation5 + $0xdf8] sm:$0xff]
    %v641 = vld [vmem:[#allocation5 + $0xe00] sm:$0xff]
    %v642 = vld [vmem:[#allocation5 + $0xe08] sm:$0xff]
    %v643 = vld [vmem:[#allocation5 + $0xe10] sm:$0xff]
    %v644 = vld [vmem:[#allocation5 + $0xe18] sm:$0xff]
    %v645 = vld [vmem:[#allocation5 + $0xe20] sm:$0xff]
    %v646 = vld [vmem:[#allocation5 + $0xe28] sm:$0xff]
    %v647 = vld [vmem:[#allocation5 + $0xe30] sm:$0xff]
    %v648 = vld [vmem:[#allocation5 + $0xe38] sm:$0xff]
    %v649 = vld [vmem:[#allocation5 + $0xe40] sm:$0xff]
    %v650 = vld [vmem:[#allocation5 + $0xe48] sm:$0xff]
    %v651 = vld [vmem:[#allocation5 + $0xe50] sm:$0xff]
    %v652 = vld [vmem:[#allocation5 + $0xe58] sm:$0xff]
    %v653 = vld [vmem:[#allocation5 + $0xe60] sm:$0xff]
    %v654 = vld [vmem:[#allocation5 + $0xe68] sm:$0xff]
    %v655 = vld [vmem:[#allocation5 + $0xe70] sm:$0xff]
    %v656 = vld [vmem:[#allocation5 + $0xe78] sm:$0xff]
    %v657 = vld [vmem:[#allocation5 + $0xe80] sm:$0xff]
    %v658 = vld [vmem:[#allocation5 + $0xe88] sm:$0xff]
    %v659 = vld [vmem:[#allocation5 + $0xe90] sm:$0xff]
    %v660 = vld [vmem:[#allocation5 + $0xe98] sm:$0xff]
    %v661 = vld [vmem:[#allocation5 + $0xea0] sm:$0xff]
    %v662 = vld [vmem:[#allocation5 + $0xea8] sm:$0xff]
    %v663 = vld [vmem:[#allocation5 + $0xeb0] sm:$0xff]
    %v664 = vld [vmem:[#allocation5 + $0xeb8] sm:$0xff]
    %v665 = vld [vmem:[#allocation5 + $0xec0] sm:$0xff]
    %v666 = vld [vmem:[#allocation5 + $0xec8] sm:$0xff]
    %v667 = vld [vmem:[#allocation5 + $0xed0] sm:$0xff]
    %v668 = vld [vmem:[#allocation5 + $0xed8] sm:$0xff]
    %v669 = vld [vmem:[#allocation5 + $0xee0] sm:$0xff]
    %v670 = vld [vmem:[#allocation5 + $0xee8] sm:$0xff]
    %v671 = vld [vmem:[#allocation5 + $0xef0] sm:$0xff]
    %v672 = vld [vmem:[#allocation5 + $0xef8] sm:$0xff]
    %v673 = vld [vmem:[#allocation5 + $0xf00] sm:$0xff]
    %v674 = vld [vmem:[#allocation5 + $0xf08] sm:$0xff]
    %v675 = vld [vmem:[#allocation5 + $0xf10] sm:$0xff]
    %v676 = vld [vmem:[#allocation5 + $0xf18] sm:$0xff]
    %v677 = vld [vmem:[#allocation5 + $0xf20] sm:$0xff]
    %v678 = vld [vmem:[#allocation5 + $0xf28] sm:$0xff]
    %v679 = vld [vmem:[#allocation5 + $0xf30] sm:$0xff]
    %v680 = vld [vmem:[#allocation5 + $0xf38] sm:$0xff]
    %v681 = vld [vmem:[#allocation5 + $0xf40] sm:$0xff]
    %v682 = vld [vmem:[#allocation5 + $0xf48] sm:$0xff]
    %v683 = vld [vmem:[#allocation5 + $0xf50] sm:$0xff]
    %v684 = vld [vmem:[#allocation5 + $0xf58] sm:$0xff]
    %v685 = vld [vmem:[#allocation5 + $0xf60] sm:$0xff]
    %v686 = vld [vmem:[#allocation5 + $0xf68] sm:$0xff]
    %v687 = vld [vmem:[#allocation5 + $0xf70] sm:$0xff]
    %v688 = vld [vmem:[#allocation5 + $0xf78] sm:$0xff]
    %v689 = vld [vmem:[#allocation5 + $0xf80] sm:$0xff]
    %v690 = vld [vmem:[#allocation5 + $0xf88] sm:$0xff]
    %v691 = vld [vmem:[#allocation5 + $0xf90] sm:$0xff]
    %v692 = vld [vmem:[#allocation5 + $0xf98] sm:$0xff]
    %v693 = vld [vmem:[#allocation5 + $0xfa0] sm:$0xff]
    %v694 = vld [vmem:[#allocation5 + $0xfa8] sm:$0xff]
    %v695 = vld [vmem:[#allocation5 + $0xfb0] sm:$0xff]
    %v696 = vld [vmem:[#allocation5 + $0xfb8] sm:$0xff]
    %v697 = vld [vmem:[#allocation5 + $0xfc0] sm:$0xff]
    %v698 = vld [vmem:[#allocation5 + $0xfc8] sm:$0xff]
    %v699 = vld [vmem:[#allocation5 + $0xfd0] sm:$0xff]
    %v700 = vld [vmem:[#allocation5 + $0xfd8] sm:$0xff]
    %v701 = vld [vmem:[#allocation5 + $0xfe0] sm:$0xff]
    %v702 = vld [vmem:[#allocation5 + $0xfe8] sm:$0xff]
    %v703 = vld [vmem:[#allocation5 + $0xff0] sm:$0xff]
    %v704 = vld [vmem:[#allocation5 + $0xff8] sm:$0xff]
    %v1217 = vunpack.c.l.b16 %v193
    %v1218 = vunpack.c.h.b16 %v193
    %v1219 = vunpack.c.l.b16 %v194
    %v1220 = vunpack.c.h.b16 %v194
    %v1221 = vunpack.c.l.b16 %v195
    %v1222 = vunpack.c.h.b16 %v195
    %v1223 = vunpack.c.l.b16 %v196
    %v1224 = vunpack.c.h.b16 %v196
    %v1225 = vunpack.c.l.b16 %v197
    %v1226 = vunpack.c.h.b16 %v197
    %v1227 = vunpack.c.l.b16 %v198
    %v1228 = vunpack.c.h.b16 %v198
    %v1229 = vunpack.c.l.b16 %v199
    %v1230 = vunpack.c.h.b16 %v199
    %v1231 = vunpack.c.l.b16 %v200
    %v1232 = vunpack.c.h.b16 %v200
    %v1233 = vunpack.c.l.b16 %v201
    %v1234 = vunpack.c.h.b16 %v201
    %v1235 = vunpack.c.l.b16 %v202
    %v1236 = vunpack.c.h.b16 %v202
    %v1237 = vunpack.c.l.b16 %v203
    %v1238 = vunpack.c.h.b16 %v203
    %v1239 = vunpack.c.l.b16 %v204
    %v1240 = vunpack.c.h.b16 %v204
    %v1241 = vunpack.c.l.b16 %v205
    %v1242 = vunpack.c.h.b16 %v205
    %v1243 = vunpack.c.l.b16 %v206
    %v1244 = vunpack.c.h.b16 %v206
    %v1245 = vunpack.c.l.b16 %v207
    %v1246 = vunpack.c.h.b16 %v207
    %v1247 = vunpack.c.l.b16 %v208
    %v1248 = vunpack.c.h.b16 %v208
    %v1249 = vunpack.c.l.b16 %v209
    %v1250 = vunpack.c.h.b16 %v209
    %v1251 = vunpack.c.l.b16 %v210
    %v1252 = vunpack.c.h.b16 %v210
    %v1253 = vunpack.c.l.b16 %v211
    %v1254 = vunpack.c.h.b16 %v211
    %v1255 = vunpack.c.l.b16 %v212
    %v1256 = vunpack.c.h.b16 %v212
    %v1257 = vunpack.c.l.b16 %v213
    %v1258 = vunpack.c.h.b16 %v213
    %v1259 = vunpack.c.l.b16 %v214
    %v1260 = vunpack.c.h.b16 %v214
    %v1261 = vunpack.c.l.b16 %v215
    %v1262 = vunpack.c.h.b16 %v215
    %v1263 = vunpack.c.l.b16 %v216
    %v1264 = vunpack.c.h.b16 %v216
    %v1265 = vunpack.c.l.b16 %v217
    %v1266 = vunpack.c.h.b16 %v217
    %v1267 = vunpack.c.l.b16 %v218
    %v1268 = vunpack.c.h.b16 %v218
    %v1269 = vunpack.c.l.b16 %v219
    %v1270 = vunpack.c.h.b16 %v219
    %v1271 = vunpack.c.l.b16 %v220
    %v1272 = vunpack.c.h.b16 %v220
    %v1273 = vunpack.c.l.b16 %v221
    %v1274 = vunpack.c.h.b16 %v221
    %v1275 = vunpack.c.l.b16 %v222
    %v1276 = vunpack.c.h.b16 %v222
    %v1277 = vunpack.c.l.b16 %v223
    %v1278 = vunpack.c.h.b16 %v223
    %v1279 = vunpack.c.l.b16 %v224
    %v1280 = vunpack.c.h.b16 %v224
    %v1281 = vunpack.c.l.b16 %v225
    %v1282 = vunpack.c.h.b16 %v225
    %v1283 = vunpack.c.l.b16 %v226
    %v1284 = vunpack.c.h.b16 %v226
    %v1285 = vunpack.c.l.b16 %v227
    %v1286 = vunpack.c.h.b16 %v227
    %v1287 = vunpack.c.l.b16 %v228
    %v1288 = vunpack.c.h.b16 %v228
    %v1289 = vunpack.c.l.b16 %v229
    %v1290 = vunpack.c.h.b16 %v229
    %v1291 = vunpack.c.l.b16 %v230
    %v1292 = vunpack.c.h.b16 %v230
    %v1293 = vunpack.c.l.b16 %v231
    %v1294 = vunpack.c.h.b16 %v231
    %v1295 = vunpack.c.l.b16 %v232
    %v1296 = vunpack.c.h.b16 %v232
    %v1297 = vunpack.c.l.b16 %v233
    %v1298 = vunpack.c.h.b16 %v233
    %v1299 = vunpack.c.l.b16 %v234
    %v1300 = vunpack.c.h.b16 %v234
    %v1301 = vunpack.c.l.b16 %v235
    %v1302 = vunpack.c.h.b16 %v235
    %v1303 = vunpack.c.l.b16 %v236
    %v1304 = vunpack.c.h.b16 %v236
    %v1305 = vunpack.c.l.b16 %v237
    %v1306 = vunpack.c.h.b16 %v237
    %v1307 = vunpack.c.l.b16 %v238
    %v1308 = vunpack.c.h.b16 %v238
    %v1309 = vunpack.c.l.b16 %v239
    %v1310 = vunpack.c.h.b16 %v239
    %v1311 = vunpack.c.l.b16 %v240
    %v1312 = vunpack.c.h.b16 %v240
    %v1313 = vunpack.c.l.b16 %v241
    %v1314 = vunpack.c.h.b16 %v241
    %v1315 = vunpack.c.l.b16 %v242
    %v1316 = vunpack.c.h.b16 %v242
    %v1317 = vunpack.c.l.b16 %v243
    %v1318 = vunpack.c.h.b16 %v243
    %v1319 = vunpack.c.l.b16 %v244
    %v1320 = vunpack.c.h.b16 %v244
    %v1321 = vunpack.c.l.b16 %v245
    %v1322 = vunpack.c.h.b16 %v245
    %v1323 = vunpack.c.l.b16 %v246
    %v1324 = vunpack.c.h.b16 %v246
    %v1325 = vunpack.c.l.b16 %v247
    %v1326 = vunpack.c.h.b16 %v247
    %v1327 = vunpack.c.l.b16 %v248
    %v1328 = vunpack.c.h.b16 %v248
    %v1329 = vunpack.c.l.b16 %v249
    %v1330 = vunpack.c.h.b16 %v249
    %v1331 = vunpack.c.l.b16 %v250
    %v1332 = vunpack.c.h.b16 %v250
    %v1333 = vunpack.c.l.b16 %v251
    %v1334 = vunpack.c.h.b16 %v251
    %v1335 = vunpack.c.l.b16 %v252
    %v1336 = vunpack.c.h.b16 %v252
    %v1337 = vunpack.c.l.b16 %v253
    %v1338 = vunpack.c.h.b16 %v253
    %v1339 = vunpack.c.l.b16 %v254
    %v1340 = vunpack.c.h.b16 %v254
    %v1341 = vunpack.c.l.b16 %v255
    %v1342 = vunpack.c.h.b16 %v255
    %v1343 = vunpack.c.l.b16 %v256
    %v1344 = vunpack.c.h.b16 %v256
    %v1345 = vunpack.c.l.b16 %v257
    %v1346 = vunpack.c.h.b16 %v257
    %v1347 = vunpack.c.l.b16 %v258
    %v1348 = vunpack.c.h.b16 %v258
    %v1349 = vunpack.c.l.b16 %v259
    %v1350 = vunpack.c.h.b16 %v259
    %v1351 = vunpack.c.l.b16 %v260
    %v1352 = vunpack.c.h.b16 %v260
    %v1353 = vunpack.c.l.b16 %v261
    %v1354 = vunpack.c.h.b16 %v261
    %v1355 = vunpack.c.l.b16 %v262
    %v1356 = vunpack.c.h.b16 %v262
    %v1357 = vunpack.c.l.b16 %v263
    %v1358 = vunpack.c.h.b16 %v263
    %v1359 = vunpack.c.l.b16 %v264
    %v1360 = vunpack.c.h.b16 %v264
    %v1361 = vunpack.c.l.b16 %v265
    %v1362 = vunpack.c.h.b16 %v265
    %v1363 = vunpack.c.l.b16 %v266
    %v1364 = vunpack.c.h.b16 %v266
    %v1365 = vunpack.c.l.b16 %v267
    %v1366 = vunpack.c.h.b16 %v267
    %v1367 = vunpack.c.l.b16 %v268
    %v1368 = vunpack.c.h.b16 %v268
    %v1369 = vunpack.c.l.b16 %v269
    %v1370 = vunpack.c.h.b16 %v269
    %v1371 = vunpack.c.l.b16 %v270
    %v1372 = vunpack.c.h.b16 %v270
    %v1373 = vunpack.c.l.b16 %v271
    %v1374 = vunpack.c.h.b16 %v271
    %v1375 = vunpack.c.l.b16 %v272
    %v1376 = vunpack.c.h.b16 %v272
    %v1377 = vunpack.c.l.b16 %v273
    %v1378 = vunpack.c.h.b16 %v273
    %v1379 = vunpack.c.l.b16 %v274
    %v1380 = vunpack.c.h.b16 %v274
    %v1381 = vunpack.c.l.b16 %v275
    %v1382 = vunpack.c.h.b16 %v275
    %v1383 = vunpack.c.l.b16 %v276
    %v1384 = vunpack.c.h.b16 %v276
    %v1385 = vunpack.c.l.b16 %v277
    %v1386 = vunpack.c.h.b16 %v277
    %v1387 = vunpack.c.l.b16 %v278
    %v1388 = vunpack.c.h.b16 %v278
    %v1389 = vunpack.c.l.b16 %v279
    %v1390 = vunpack.c.h.b16 %v279
    %v1391 = vunpack.c.l.b16 %v280
    %v1392 = vunpack.c.h.b16 %v280
    %v1393 = vunpack.c.l.b16 %v281
    %v1394 = vunpack.c.h.b16 %v281
    %v1395 = vunpack.c.l.b16 %v282
    %v1396 = vunpack.c.h.b16 %v282
    %v1397 = vunpack.c.l.b16 %v283
    %v1398 = vunpack.c.h.b16 %v283
    %v1399 = vunpack.c.l.b16 %v284
    %v1400 = vunpack.c.h.b16 %v284
    %v1401 = vunpack.c.l.b16 %v285
    %v1402 = vunpack.c.h.b16 %v285
    %v1403 = vunpack.c.l.b16 %v286
    %v1404 = vunpack.c.h.b16 %v286
    %v1405 = vunpack.c.l.b16 %v287
    %v1406 = vunpack.c.h.b16 %v287
    %v1407 = vunpack.c.l.b16 %v288
    %v1408 = vunpack.c.h.b16 %v288
    %v1409 = vunpack.c.l.b16 %v289
    %v1410 = vunpack.c.h.b16 %v289
    %v1411 = vunpack.c.l.b16 %v290
    %v1412 = vunpack.c.h.b16 %v290
    %v1413 = vunpack.c.l.b16 %v291
    %v1414 = vunpack.c.h.b16 %v291
    %v1415 = vunpack.c.l.b16 %v292
    %v1416 = vunpack.c.h.b16 %v292
    %v1417 = vunpack.c.l.b16 %v293
    %v1418 = vunpack.c.h.b16 %v293
    %v1419 = vunpack.c.l.b16 %v294
    %v1420 = vunpack.c.h.b16 %v294
    %v1421 = vunpack.c.l.b16 %v295
    %v1422 = vunpack.c.h.b16 %v295
    %v1423 = vunpack.c.l.b16 %v296
    %v1424 = vunpack.c.h.b16 %v296
    %v1425 = vunpack.c.l.b16 %v297
    %v1426 = vunpack.c.h.b16 %v297
    %v1427 = vunpack.c.l.b16 %v298
    %v1428 = vunpack.c.h.b16 %v298
    %v1429 = vunpack.c.l.b16 %v299
    %v1430 = vunpack.c.h.b16 %v299
    %v1431 = vunpack.c.l.b16 %v300
    %v1432 = vunpack.c.h.b16 %v300
    %v1433 = vunpack.c.l.b16 %v301
    %v1434 = vunpack.c.h.b16 %v301
    %v1435 = vunpack.c.l.b16 %v302
    %v1436 = vunpack.c.h.b16 %v302
    %v1437 = vunpack.c.l.b16 %v303
    %v1438 = vunpack.c.h.b16 %v303
    %v1439 = vunpack.c.l.b16 %v304
    %v1440 = vunpack.c.h.b16 %v304
    %v1441 = vunpack.c.l.b16 %v305
    %v1442 = vunpack.c.h.b16 %v305
    %v1443 = vunpack.c.l.b16 %v306
    %v1444 = vunpack.c.h.b16 %v306
    %v1445 = vunpack.c.l.b16 %v307
    %v1446 = vunpack.c.h.b16 %v307
    %v1447 = vunpack.c.l.b16 %v308
    %v1448 = vunpack.c.h.b16 %v308
    %v1449 = vunpack.c.l.b16 %v309
    %v1450 = vunpack.c.h.b16 %v309
    %v1451 = vunpack.c.l.b16 %v310
    %v1452 = vunpack.c.h.b16 %v310
    %v1453 = vunpack.c.l.b16 %v311
    %v1454 = vunpack.c.h.b16 %v311
    %v1455 = vunpack.c.l.b16 %v312
    %v1456 = vunpack.c.h.b16 %v312
    %v1457 = vunpack.c.l.b16 %v313
    %v1458 = vunpack.c.h.b16 %v313
    %v1459 = vunpack.c.l.b16 %v314
    %v1460 = vunpack.c.h.b16 %v314
    %v1461 = vunpack.c.l.b16 %v315
    %v1462 = vunpack.c.h.b16 %v315
    %v1463 = vunpack.c.l.b16 %v316
    %v1464 = vunpack.c.h.b16 %v316
    %v1465 = vunpack.c.l.b16 %v317
    %v1466 = vunpack.c.h.b16 %v317
    %v1467 = vunpack.c.l.b16 %v318
    %v1468 = vunpack.c.h.b16 %v318
    %v1469 = vunpack.c.l.b16 %v319
    %v1470 = vunpack.c.h.b16 %v319
    %v1471 = vunpack.c.l.b16 %v320
    %v1472 = vunpack.c.h.b16 %v320
    %v1473 = vunpack.c.l.b16 %v321
    %v1474 = vunpack.c.h.b16 %v321
    %v1475 = vunpack.c.l.b16 %v322
    %v1476 = vunpack.c.h.b16 %v322
    %v1477 = vunpack.c.l.b16 %v323
    %v1478 = vunpack.c.h.b16 %v323
    %v1479 = vunpack.c.l.b16 %v324
    %v1480 = vunpack.c.h.b16 %v324
    %v1481 = vunpack.c.l.b16 %v325
    %v1482 = vunpack.c.h.b16 %v325
    %v1483 = vunpack.c.l.b16 %v326
    %v1484 = vunpack.c.h.b16 %v326
    %v1485 = vunpack.c.l.b16 %v327
    %v1486 = vunpack.c.h.b16 %v327
    %v1487 = vunpack.c.l.b16 %v328
    %v1488 = vunpack.c.h.b16 %v328
    %v1489 = vunpack.c.l.b16 %v329
    %v1490 = vunpack.c.h.b16 %v329
    %v1491 = vunpack.c.l.b16 %v330
    %v1492 = vunpack.c.h.b16 %v330
    %v1493 = vunpack.c.l.b16 %v331
    %v1494 = vunpack.c.h.b16 %v331
    %v1495 = vunpack.c.l.b16 %v332
    %v1496 = vunpack.c.h.b16 %v332
    %v1497 = vunpack.c.l.b16 %v333
    %v1498 = vunpack.c.h.b16 %v333
    %v1499 = vunpack.c.l.b16 %v334
    %v1500 = vunpack.c.h.b16 %v334
    %v1501 = vunpack.c.l.b16 %v335
    %v1502 = vunpack.c.h.b16 %v335
    %v1503 = vunpack.c.l.b16 %v336
    %v1504 = vunpack.c.h.b16 %v336
    %v1505 = vunpack.c.l.b16 %v337
    %v1506 = vunpack.c.h.b16 %v337
    %v1507 = vunpack.c.l.b16 %v338
    %v1508 = vunpack.c.h.b16 %v338
    %v1509 = vunpack.c.l.b16 %v339
    %v1510 = vunpack.c.h.b16 %v339
    %v1511 = vunpack.c.l.b16 %v340
    %v1512 = vunpack.c.h.b16 %v340
    %v1513 = vunpack.c.l.b16 %v341
    %v1514 = vunpack.c.h.b16 %v341
    %v1515 = vunpack.c.l.b16 %v342
    %v1516 = vunpack.c.h.b16 %v342
    %v1517 = vunpack.c.l.b16 %v343
    %v1518 = vunpack.c.h.b16 %v343
    %v1519 = vunpack.c.l.b16 %v344
    %v1520 = vunpack.c.h.b16 %v344
    %v1521 = vunpack.c.l.b16 %v345
    %v1522 = vunpack.c.h.b16 %v345
    %v1523 = vunpack.c.l.b16 %v346
    %v1524 = vunpack.c.h.b16 %v346
    %v1525 = vunpack.c.l.b16 %v347
    %v1526 = vunpack.c.h.b16 %v347
    %v1527 = vunpack.c.l.b16 %v348
    %v1528 = vunpack.c.h.b16 %v348
    %v1529 = vunpack.c.l.b16 %v349
    %v1530 = vunpack.c.h.b16 %v349
    %v1531 = vunpack.c.l.b16 %v350
    %v1532 = vunpack.c.h.b16 %v350
    %v1533 = vunpack.c.l.b16 %v351
    %v1534 = vunpack.c.h.b16 %v351
    %v1535 = vunpack.c.l.b16 %v352
    %v1536 = vunpack.c.h.b16 %v352
    %v1537 = vunpack.c.l.b16 %v353
    %v1538 = vunpack.c.h.b16 %v353
    %v1539 = vunpack.c.l.b16 %v354
    %v1540 = vunpack.c.h.b16 %v354
    %v1541 = vunpack.c.l.b16 %v355
    %v1542 = vunpack.c.h.b16 %v355
    %v1543 = vunpack.c.l.b16 %v356
    %v1544 = vunpack.c.h.b16 %v356
    %v1545 = vunpack.c.l.b16 %v357
    %v1546 = vunpack.c.h.b16 %v357
    %v1547 = vunpack.c.l.b16 %v358
    %v1548 = vunpack.c.h.b16 %v358
    %v1549 = vunpack.c.l.b16 %v359
    %v1550 = vunpack.c.h.b16 %v359
    %v1551 = vunpack.c.l.b16 %v360
    %v1552 = vunpack.c.h.b16 %v360
    %v1553 = vunpack.c.l.b16 %v361
    %v1554 = vunpack.c.h.b16 %v361
    %v1555 = vunpack.c.l.b16 %v362
    %v1556 = vunpack.c.h.b16 %v362
    %v1557 = vunpack.c.l.b16 %v363
    %v1558 = vunpack.c.h.b16 %v363
    %v1559 = vunpack.c.l.b16 %v364
    %v1560 = vunpack.c.h.b16 %v364
    %v1561 = vunpack.c.l.b16 %v365
    %v1562 = vunpack.c.h.b16 %v365
    %v1563 = vunpack.c.l.b16 %v366
    %v1564 = vunpack.c.h.b16 %v366
    %v1565 = vunpack.c.l.b16 %v367
    %v1566 = vunpack.c.h.b16 %v367
    %v1567 = vunpack.c.l.b16 %v368
    %v1568 = vunpack.c.h.b16 %v368
    %v1569 = vunpack.c.l.b16 %v369
    %v1570 = vunpack.c.h.b16 %v369
    %v1571 = vunpack.c.l.b16 %v370
    %v1572 = vunpack.c.h.b16 %v370
    %v1573 = vunpack.c.l.b16 %v371
    %v1574 = vunpack.c.h.b16 %v371
    %v1575 = vunpack.c.l.b16 %v372
    %v1576 = vunpack.c.h.b16 %v372
    %v1577 = vunpack.c.l.b16 %v373
    %v1578 = vunpack.c.h.b16 %v373
    %v1579 = vunpack.c.l.b16 %v374
    %v1580 = vunpack.c.h.b16 %v374
    %v1581 = vunpack.c.l.b16 %v375
    %v1582 = vunpack.c.h.b16 %v375
    %v1583 = vunpack.c.l.b16 %v376
    %v1584 = vunpack.c.h.b16 %v376
    %v1585 = vunpack.c.l.b16 %v377
    %v1586 = vunpack.c.h.b16 %v377
    %v1587 = vunpack.c.l.b16 %v378
    %v1588 = vunpack.c.h.b16 %v378
    %v1589 = vunpack.c.l.b16 %v379
    %v1590 = vunpack.c.h.b16 %v379
    %v1591 = vunpack.c.l.b16 %v380
    %v1592 = vunpack.c.h.b16 %v380
    %v1593 = vunpack.c.l.b16 %v381
    %v1594 = vunpack.c.h.b16 %v381
    %v1595 = vunpack.c.l.b16 %v382
    %v1596 = vunpack.c.h.b16 %v382
    %v1597 = vunpack.c.l.b16 %v383
    %v1598 = vunpack.c.h.b16 %v383
    %v1599 = vunpack.c.l.b16 %v384
    %v1600 = vunpack.c.h.b16 %v384
    %v1601 = vunpack.c.l.b16 %v385
    %v1602 = vunpack.c.h.b16 %v385
    %v1603 = vunpack.c.l.b16 %v386
    %v1604 = vunpack.c.h.b16 %v386
    %v1605 = vunpack.c.l.b16 %v387
    %v1606 = vunpack.c.h.b16 %v387
    %v1607 = vunpack.c.l.b16 %v388
    %v1608 = vunpack.c.h.b16 %v388
    %v1609 = vunpack.c.l.b16 %v389
    %v1610 = vunpack.c.h.b16 %v389
    %v1611 = vunpack.c.l.b16 %v390
    %v1612 = vunpack.c.h.b16 %v390
    %v1613 = vunpack.c.l.b16 %v391
    %v1614 = vunpack.c.h.b16 %v391
    %v1615 = vunpack.c.l.b16 %v392
    %v1616 = vunpack.c.h.b16 %v392
    %v1617 = vunpack.c.l.b16 %v393
    %v1618 = vunpack.c.h.b16 %v393
    %v1619 = vunpack.c.l.b16 %v394
    %v1620 = vunpack.c.h.b16 %v394
    %v1621 = vunpack.c.l.b16 %v395
    %v1622 = vunpack.c.h.b16 %v395
    %v1623 = vunpack.c.l.b16 %v396
    %v1624 = vunpack.c.h.b16 %v396
    %v1625 = vunpack.c.l.b16 %v397
    %v1626 = vunpack.c.h.b16 %v397
    %v1627 = vunpack.c.l.b16 %v398
    %v1628 = vunpack.c.h.b16 %v398
    %v1629 = vunpack.c.l.b16 %v399
    %v1630 = vunpack.c.h.b16 %v399
    %v1631 = vunpack.c.l.b16 %v400
    %v1632 = vunpack.c.h.b16 %v400
    %v1633 = vunpack.c.l.b16 %v401
    %v1634 = vunpack.c.h.b16 %v401
    %v1635 = vunpack.c.l.b16 %v402
    %v1636 = vunpack.c.h.b16 %v402
    %v1637 = vunpack.c.l.b16 %v403
    %v1638 = vunpack.c.h.b16 %v403
    %v1639 = vunpack.c.l.b16 %v404
    %v1640 = vunpack.c.h.b16 %v404
    %v1641 = vunpack.c.l.b16 %v405
    %v1642 = vunpack.c.h.b16 %v405
    %v1643 = vunpack.c.l.b16 %v406
    %v1644 = vunpack.c.h.b16 %v406
    %v1645 = vunpack.c.l.b16 %v407
    %v1646 = vunpack.c.h.b16 %v407
    %v1647 = vunpack.c.l.b16 %v408
    %v1648 = vunpack.c.h.b16 %v408
    %v1649 = vunpack.c.l.b16 %v409
    %v1650 = vunpack.c.h.b16 %v409
    %v1651 = vunpack.c.l.b16 %v410
    %v1652 = vunpack.c.h.b16 %v410
    %v1653 = vunpack.c.l.b16 %v411
    %v1654 = vunpack.c.h.b16 %v411
    %v1655 = vunpack.c.l.b16 %v412
    %v1656 = vunpack.c.h.b16 %v412
    %v1657 = vunpack.c.l.b16 %v413
    %v1658 = vunpack.c.h.b16 %v413
    %v1659 = vunpack.c.l.b16 %v414
    %v1660 = vunpack.c.h.b16 %v414
    %v1661 = vunpack.c.l.b16 %v415
    %v1662 = vunpack.c.h.b16 %v415
    %v1663 = vunpack.c.l.b16 %v416
    %v1664 = vunpack.c.h.b16 %v416
    %v1665 = vunpack.c.l.b16 %v417
    %v1666 = vunpack.c.h.b16 %v417
    %v1667 = vunpack.c.l.b16 %v418
    %v1668 = vunpack.c.h.b16 %v418
    %v1669 = vunpack.c.l.b16 %v419
    %v1670 = vunpack.c.h.b16 %v419
    %v1671 = vunpack.c.l.b16 %v420
    %v1672 = vunpack.c.h.b16 %v420
    %v1673 = vunpack.c.l.b16 %v421
    %v1674 = vunpack.c.h.b16 %v421
    %v1675 = vunpack.c.l.b16 %v422
    %v1676 = vunpack.c.h.b16 %v422
    %v1677 = vunpack.c.l.b16 %v423
    %v1678 = vunpack.c.h.b16 %v423
    %v1679 = vunpack.c.l.b16 %v424
    %v1680 = vunpack.c.h.b16 %v424
    %v1681 = vunpack.c.l.b16 %v425
    %v1682 = vunpack.c.h.b16 %v425
    %v1683 = vunpack.c.l.b16 %v426
    %v1684 = vunpack.c.h.b16 %v426
    %v1685 = vunpack.c.l.b16 %v427
    %v1686 = vunpack.c.h.b16 %v427
    %v1687 = vunpack.c.l.b16 %v428
    %v1688 = vunpack.c.h.b16 %v428
    %v1689 = vunpack.c.l.b16 %v429
    %v1690 = vunpack.c.h.b16 %v429
    %v1691 = vunpack.c.l.b16 %v430
    %v1692 = vunpack.c.h.b16 %v430
    %v1693 = vunpack.c.l.b16 %v431
    %v1694 = vunpack.c.h.b16 %v431
    %v1695 = vunpack.c.l.b16 %v432
    %v1696 = vunpack.c.h.b16 %v432
    %v1697 = vunpack.c.l.b16 %v433
    %v1698 = vunpack.c.h.b16 %v433
    %v1699 = vunpack.c.l.b16 %v434
    %v1700 = vunpack.c.h.b16 %v434
    %v1701 = vunpack.c.l.b16 %v435
    %v1702 = vunpack.c.h.b16 %v435
    %v1703 = vunpack.c.l.b16 %v436
    %v1704 = vunpack.c.h.b16 %v436
    %v1705 = vunpack.c.l.b16 %v437
    %v1706 = vunpack.c.h.b16 %v437
    %v1707 = vunpack.c.l.b16 %v438
    %v1708 = vunpack.c.h.b16 %v438
    %v1709 = vunpack.c.l.b16 %v439
    %v1710 = vunpack.c.h.b16 %v439
    %v1711 = vunpack.c.l.b16 %v440
    %v1712 = vunpack.c.h.b16 %v440
    %v1713 = vunpack.c.l.b16 %v441
    %v1714 = vunpack.c.h.b16 %v441
    %v1715 = vunpack.c.l.b16 %v442
    %v1716 = vunpack.c.h.b16 %v442
    %v1717 = vunpack.c.l.b16 %v443
    %v1718 = vunpack.c.h.b16 %v443
    %v1719 = vunpack.c.l.b16 %v444
    %v1720 = vunpack.c.h.b16 %v444
    %v1721 = vunpack.c.l.b16 %v445
    %v1722 = vunpack.c.h.b16 %v445
    %v1723 = vunpack.c.l.b16 %v446
    %v1724 = vunpack.c.h.b16 %v446
    %v1725 = vunpack.c.l.b16 %v447
    %v1726 = vunpack.c.h.b16 %v447
    %v1727 = vunpack.c.l.b16 %v448
    %v1728 = vunpack.c.h.b16 %v448
    %v1729 = vunpack.c.l.b16 %v449
    %v1730 = vunpack.c.h.b16 %v449
    %v1731 = vunpack.c.l.b16 %v450
    %v1732 = vunpack.c.h.b16 %v450
    %v1733 = vunpack.c.l.b16 %v451
    %v1734 = vunpack.c.h.b16 %v451
    %v1735 = vunpack.c.l.b16 %v452
    %v1736 = vunpack.c.h.b16 %v452
    %v1737 = vunpack.c.l.b16 %v453
    %v1738 = vunpack.c.h.b16 %v453
    %v1739 = vunpack.c.l.b16 %v454
    %v1740 = vunpack.c.h.b16 %v454
    %v1741 = vunpack.c.l.b16 %v455
    %v1742 = vunpack.c.h.b16 %v455
    %v1743 = vunpack.c.l.b16 %v456
    %v1744 = vunpack.c.h.b16 %v456
    %v1745 = vunpack.c.l.b16 %v457
    %v1746 = vunpack.c.h.b16 %v457
    %v1747 = vunpack.c.l.b16 %v458
    %v1748 = vunpack.c.h.b16 %v458
    %v1749 = vunpack.c.l.b16 %v459
    %v1750 = vunpack.c.h.b16 %v459
    %v1751 = vunpack.c.l.b16 %v460
    %v1752 = vunpack.c.h.b16 %v460
    %v1753 = vunpack.c.l.b16 %v461
    %v1754 = vunpack.c.h.b16 %v461
    %v1755 = vunpack.c.l.b16 %v462
    %v1756 = vunpack.c.h.b16 %v462
    %v1757 = vunpack.c.l.b16 %v463
    %v1758 = vunpack.c.h.b16 %v463
    %v1759 = vunpack.c.l.b16 %v464
    %v1760 = vunpack.c.h.b16 %v464
    %v1761 = vunpack.c.l.b16 %v465
    %v1762 = vunpack.c.h.b16 %v465
    %v1763 = vunpack.c.l.b16 %v466
    %v1764 = vunpack.c.h.b16 %v466
    %v1765 = vunpack.c.l.b16 %v467
    %v1766 = vunpack.c.h.b16 %v467
    %v1767 = vunpack.c.l.b16 %v468
    %v1768 = vunpack.c.h.b16 %v468
    %v1769 = vunpack.c.l.b16 %v469
    %v1770 = vunpack.c.h.b16 %v469
    %v1771 = vunpack.c.l.b16 %v470
    %v1772 = vunpack.c.h.b16 %v470
    %v1773 = vunpack.c.l.b16 %v471
    %v1774 = vunpack.c.h.b16 %v471
    %v1775 = vunpack.c.l.b16 %v472
    %v1776 = vunpack.c.h.b16 %v472
    %v1777 = vunpack.c.l.b16 %v473
    %v1778 = vunpack.c.h.b16 %v473
    %v1779 = vunpack.c.l.b16 %v474
    %v1780 = vunpack.c.h.b16 %v474
    %v1781 = vunpack.c.l.b16 %v475
    %v1782 = vunpack.c.h.b16 %v475
    %v1783 = vunpack.c.l.b16 %v476
    %v1784 = vunpack.c.h.b16 %v476
    %v1785 = vunpack.c.l.b16 %v477
    %v1786 = vunpack.c.h.b16 %v477
    %v1787 = vunpack.c.l.b16 %v478
    %v1788 = vunpack.c.h.b16 %v478
    %v1789 = vunpack.c.l.b16 %v479
    %v1790 = vunpack.c.h.b16 %v479
    %v1791 = vunpack.c.l.b16 %v480
    %v1792 = vunpack.c.h.b16 %v480
    %v1793 = vunpack.c.l.b16 %v481
    %v1794 = vunpack.c.h.b16 %v481
    %v1795 = vunpack.c.l.b16 %v482
    %v1796 = vunpack.c.h.b16 %v482
    %v1797 = vunpack.c.l.b16 %v483
    %v1798 = vunpack.c.h.b16 %v483
    %v1799 = vunpack.c.l.b16 %v484
    %v1800 = vunpack.c.h.b16 %v484
    %v1801 = vunpack.c.l.b16 %v485
    %v1802 = vunpack.c.h.b16 %v485
    %v1803 = vunpack.c.l.b16 %v486
    %v1804 = vunpack.c.h.b16 %v486
    %v1805 = vunpack.c.l.b16 %v487
    %v1806 = vunpack.c.h.b16 %v487
    %v1807 = vunpack.c.l.b16 %v488
    %v1808 = vunpack.c.h.b16 %v488
    %v1809 = vunpack.c.l.b16 %v489
    %v1810 = vunpack.c.h.b16 %v489
    %v1811 = vunpack.c.l.b16 %v490
    %v1812 = vunpack.c.h.b16 %v490
    %v1813 = vunpack.c.l.b16 %v491
    %v1814 = vunpack.c.h.b16 %v491
    %v1815 = vunpack.c.l.b16 %v492
    %v1816 = vunpack.c.h.b16 %v492
    %v1817 = vunpack.c.l.b16 %v493
    %v1818 = vunpack.c.h.b16 %v493
    %v1819 = vunpack.c.l.b16 %v494
    %v1820 = vunpack.c.h.b16 %v494
    %v1821 = vunpack.c.l.b16 %v495
    %v1822 = vunpack.c.h.b16 %v495
    %v1823 = vunpack.c.l.b16 %v496
    %v1824 = vunpack.c.h.b16 %v496
    %v1825 = vunpack.c.l.b16 %v497
    %v1826 = vunpack.c.h.b16 %v497
    %v1827 = vunpack.c.l.b16 %v498
    %v1828 = vunpack.c.h.b16 %v498
    %v1829 = vunpack.c.l.b16 %v499
    %v1830 = vunpack.c.h.b16 %v499
    %v1831 = vunpack.c.l.b16 %v500
    %v1832 = vunpack.c.h.b16 %v500
    %v1833 = vunpack.c.l.b16 %v501
    %v1834 = vunpack.c.h.b16 %v501
    %v1835 = vunpack.c.l.b16 %v502
    %v1836 = vunpack.c.h.b16 %v502
    %v1837 = vunpack.c.l.b16 %v503
    %v1838 = vunpack.c.h.b16 %v503
    %v1839 = vunpack.c.l.b16 %v504
    %v1840 = vunpack.c.h.b16 %v504
    %v1841 = vunpack.c.l.b16 %v505
    %v1842 = vunpack.c.h.b16 %v505
    %v1843 = vunpack.c.l.b16 %v506
    %v1844 = vunpack.c.h.b16 %v506
    %v1845 = vunpack.c.l.b16 %v507
    %v1846 = vunpack.c.h.b16 %v507
    %v1847 = vunpack.c.l.b16 %v508
    %v1848 = vunpack.c.h.b16 %v508
    %v1849 = vunpack.c.l.b16 %v509
    %v1850 = vunpack.c.h.b16 %v509
    %v1851 = vunpack.c.l.b16 %v510
    %v1852 = vunpack.c.h.b16 %v510
    %v1853 = vunpack.c.l.b16 %v511
    %v1854 = vunpack.c.h.b16 %v511
    %v1855 = vunpack.c.l.b16 %v512
    %v1856 = vunpack.c.h.b16 %v512
    %v1857 = vunpack.c.l.b16 %v513
    %v1858 = vunpack.c.h.b16 %v513
    %v1859 = vunpack.c.l.b16 %v514
    %v1860 = vunpack.c.h.b16 %v514
    %v1861 = vunpack.c.l.b16 %v515
    %v1862 = vunpack.c.h.b16 %v515
    %v1863 = vunpack.c.l.b16 %v516
    %v1864 = vunpack.c.h.b16 %v516
    %v1865 = vunpack.c.l.b16 %v517
    %v1866 = vunpack.c.h.b16 %v517
    %v1867 = vunpack.c.l.b16 %v518
    %v1868 = vunpack.c.h.b16 %v518
    %v1869 = vunpack.c.l.b16 %v519
    %v1870 = vunpack.c.h.b16 %v519
    %v1871 = vunpack.c.l.b16 %v520
    %v1872 = vunpack.c.h.b16 %v520
    %v1873 = vunpack.c.l.b16 %v521
    %v1874 = vunpack.c.h.b16 %v521
    %v1875 = vunpack.c.l.b16 %v522
    %v1876 = vunpack.c.h.b16 %v522
    %v1877 = vunpack.c.l.b16 %v523
    %v1878 = vunpack.c.h.b16 %v523
    %v1879 = vunpack.c.l.b16 %v524
    %v1880 = vunpack.c.h.b16 %v524
    %v1881 = vunpack.c.l.b16 %v525
    %v1882 = vunpack.c.h.b16 %v525
    %v1883 = vunpack.c.l.b16 %v526
    %v1884 = vunpack.c.h.b16 %v526
    %v1885 = vunpack.c.l.b16 %v527
    %v1886 = vunpack.c.h.b16 %v527
    %v1887 = vunpack.c.l.b16 %v528
    %v1888 = vunpack.c.h.b16 %v528
    %v1889 = vunpack.c.l.b16 %v529
    %v1890 = vunpack.c.h.b16 %v529
    %v1891 = vunpack.c.l.b16 %v530
    %v1892 = vunpack.c.h.b16 %v530
    %v1893 = vunpack.c.l.b16 %v531
    %v1894 = vunpack.c.h.b16 %v531
    %v1895 = vunpack.c.l.b16 %v532
    %v1896 = vunpack.c.h.b16 %v532
    %v1897 = vunpack.c.l.b16 %v533
    %v1898 = vunpack.c.h.b16 %v533
    %v1899 = vunpack.c.l.b16 %v534
    %v1900 = vunpack.c.h.b16 %v534
    %v1901 = vunpack.c.l.b16 %v535
    %v1902 = vunpack.c.h.b16 %v535
    %v1903 = vunpack.c.l.b16 %v536
    %v1904 = vunpack.c.h.b16 %v536
    %v1905 = vunpack.c.l.b16 %v537
    %v1906 = vunpack.c.h.b16 %v537
    %v1907 = vunpack.c.l.b16 %v538
    %v1908 = vunpack.c.h.b16 %v538
    %v1909 = vunpack.c.l.b16 %v539
    %v1910 = vunpack.c.h.b16 %v539
    %v1911 = vunpack.c.l.b16 %v540
    %v1912 = vunpack.c.h.b16 %v540
    %v1913 = vunpack.c.l.b16 %v541
    %v1914 = vunpack.c.h.b16 %v541
    %v1915 = vunpack.c.l.b16 %v542
    %v1916 = vunpack.c.h.b16 %v542
    %v1917 = vunpack.c.l.b16 %v543
    %v1918 = vunpack.c.h.b16 %v543
    %v1919 = vunpack.c.l.b16 %v544
    %v1920 = vunpack.c.h.b16 %v544
    %v1921 = vunpack.c.l.b16 %v545
    %v1922 = vunpack.c.h.b16 %v545
    %v1923 = vunpack.c.l.b16 %v546
    %v1924 = vunpack.c.h.b16 %v546
    %v1925 = vunpack.c.l.b16 %v547
    %v1926 = vunpack.c.h.b16 %v547
    %v1927 = vunpack.c.l.b16 %v548
    %v1928 = vunpack.c.h.b16 %v548
    %v1929 = vunpack.c.l.b16 %v549
    %v1930 = vunpack.c.h.b16 %v549
    %v1931 = vunpack.c.l.b16 %v550
    %v1932 = vunpack.c.h.b16 %v550
    %v1933 = vunpack.c.l.b16 %v551
    %v1934 = vunpack.c.h.b16 %v551
    %v1935 = vunpack.c.l.b16 %v552
    %v1936 = vunpack.c.h.b16 %v552
    %v1937 = vunpack.c.l.b16 %v553
    %v1938 = vunpack.c.h.b16 %v553
    %v1939 = vunpack.c.l.b16 %v554
    %v1940 = vunpack.c.h.b16 %v554
    %v1941 = vunpack.c.l.b16 %v555
    %v1942 = vunpack.c.h.b16 %v555
    %v1943 = vunpack.c.l.b16 %v556
    %v1944 = vunpack.c.h.b16 %v556
    %v1945 = vunpack.c.l.b16 %v557
    %v1946 = vunpack.c.h.b16 %v557
    %v1947 = vunpack.c.l.b16 %v558
    %v1948 = vunpack.c.h.b16 %v558
    %v1949 = vunpack.c.l.b16 %v559
    %v1950 = vunpack.c.h.b16 %v559
    %v1951 = vunpack.c.l.b16 %v560
    %v1952 = vunpack.c.h.b16 %v560
    %v1953 = vunpack.c.l.b16 %v561
    %v1954 = vunpack.c.h.b16 %v561
    %v1955 = vunpack.c.l.b16 %v562
    %v1956 = vunpack.c.h.b16 %v562
    %v1957 = vunpack.c.l.b16 %v563
    %v1958 = vunpack.c.h.b16 %v563
    %v1959 = vunpack.c.l.b16 %v564
    %v1960 = vunpack.c.h.b16 %v564
    %v1961 = vunpack.c.l.b16 %v565
    %v1962 = vunpack.c.h.b16 %v565
    %v1963 = vunpack.c.l.b16 %v566
    %v1964 = vunpack.c.h.b16 %v566
    %v1965 = vunpack.c.l.b16 %v567
    %v1966 = vunpack.c.h.b16 %v567
    %v1967 = vunpack.c.l.b16 %v568
    %v1968 = vunpack.c.h.b16 %v568
    %v1969 = vunpack.c.l.b16 %v569
    %v1970 = vunpack.c.h.b16 %v569
    %v1971 = vunpack.c.l.b16 %v570
    %v1972 = vunpack.c.h.b16 %v570
    %v1973 = vunpack.c.l.b16 %v571
    %v1974 = vunpack.c.h.b16 %v571
    %v1975 = vunpack.c.l.b16 %v572
    %v1976 = vunpack.c.h.b16 %v572
    %v1977 = vunpack.c.l.b16 %v573
    %v1978 = vunpack.c.h.b16 %v573
    %v1979 = vunpack.c.l.b16 %v574
    %v1980 = vunpack.c.h.b16 %v574
    %v1981 = vunpack.c.l.b16 %v575
    %v1982 = vunpack.c.h.b16 %v575
    %v1983 = vunpack.c.l.b16 %v576
    %v1984 = vunpack.c.h.b16 %v576
    %v1985 = vunpack.c.l.b16 %v577
    %v1986 = vunpack.c.h.b16 %v577
    %v1987 = vunpack.c.l.b16 %v578
    %v1988 = vunpack.c.h.b16 %v578
    %v1989 = vunpack.c.l.b16 %v579
    %v1990 = vunpack.c.h.b16 %v579
    %v1991 = vunpack.c.l.b16 %v580
    %v1992 = vunpack.c.h.b16 %v580
    %v1993 = vunpack.c.l.b16 %v581
    %v1994 = vunpack.c.h.b16 %v581
    %v1995 = vunpack.c.l.b16 %v582
    %v1996 = vunpack.c.h.b16 %v582
    %v1997 = vunpack.c.l.b16 %v583
    %v1998 = vunpack.c.h.b16 %v583
    %v1999 = vunpack.c.l.b16 %v584
    %v2000 = vunpack.c.h.b16 %v584
    %v2001 = vunpack.c.l.b16 %v585
    %v2002 = vunpack.c.h.b16 %v585
    %v2003 = vunpack.c.l.b16 %v586
    %v2004 = vunpack.c.h.b16 %v586
    %v2005 = vunpack.c.l.b16 %v587
    %v2006 = vunpack.c.h.b16 %v587
    %v2007 = vunpack.c.l.b16 %v588
    %v2008 = vunpack.c.h.b16 %v588
    %v2009 = vunpack.c.l.b16 %v589
    %v2010 = vunpack.c.h.b16 %v589
    %v2011 = vunpack.c.l.b16 %v590
    %v2012 = vunpack.c.h.b16 %v590
    %v2013 = vunpack.c.l.b16 %v591
    %v2014 = vunpack.c.h.b16 %v591
    %v2015 = vunpack.c.l.b16 %v592
    %v2016 = vunpack.c.h.b16 %v592
    %v2017 = vunpack.c.l.b16 %v593
    %v2018 = vunpack.c.h.b16 %v593
    %v2019 = vunpack.c.l.b16 %v594
    %v2020 = vunpack.c.h.b16 %v594
    %v2021 = vunpack.c.l.b16 %v595
    %v2022 = vunpack.c.h.b16 %v595
    %v2023 = vunpack.c.l.b16 %v596
    %v2024 = vunpack.c.h.b16 %v596
    %v2025 = vunpack.c.l.b16 %v597
    %v2026 = vunpack.c.h.b16 %v597
    %v2027 = vunpack.c.l.b16 %v598
    %v2028 = vunpack.c.h.b16 %v598
    %v2029 = vunpack.c.l.b16 %v599
    %v2030 = vunpack.c.h.b16 %v599
    %v2031 = vunpack.c.l.b16 %v600
    %v2032 = vunpack.c.h.b16 %v600
    %v2033 = vunpack.c.l.b16 %v601
    %v2034 = vunpack.c.h.b16 %v601
    %v2035 = vunpack.c.l.b16 %v602
    %v2036 = vunpack.c.h.b16 %v602
    %v2037 = vunpack.c.l.b16 %v603
    %v2038 = vunpack.c.h.b16 %v603
    %v2039 = vunpack.c.l.b16 %v604
    %v2040 = vunpack.c.h.b16 %v604
    %v2041 = vunpack.c.l.b16 %v605
    %v2042 = vunpack.c.h.b16 %v605
    %v2043 = vunpack.c.l.b16 %v606
    %v2044 = vunpack.c.h.b16 %v606
    %v2045 = vunpack.c.l.b16 %v607
    %v2046 = vunpack.c.h.b16 %v607
    %v2047 = vunpack.c.l.b16 %v608
    %v2048 = vunpack.c.h.b16 %v608
    %v2049 = vunpack.c.l.b16 %v609
    %v2050 = vunpack.c.h.b16 %v609
    %v2051 = vunpack.c.l.b16 %v610
    %v2052 = vunpack.c.h.b16 %v610
    %v2053 = vunpack.c.l.b16 %v611
    %v2054 = vunpack.c.h.b16 %v611
    %v2055 = vunpack.c.l.b16 %v612
    %v2056 = vunpack.c.h.b16 %v612
    %v2057 = vunpack.c.l.b16 %v613
    %v2058 = vunpack.c.h.b16 %v613
    %v2059 = vunpack.c.l.b16 %v614
    %v2060 = vunpack.c.h.b16 %v614
    %v2061 = vunpack.c.l.b16 %v615
    %v2062 = vunpack.c.h.b16 %v615
    %v2063 = vunpack.c.l.b16 %v616
    %v2064 = vunpack.c.h.b16 %v616
    %v2065 = vunpack.c.l.b16 %v617
    %v2066 = vunpack.c.h.b16 %v617
    %v2067 = vunpack.c.l.b16 %v618
    %v2068 = vunpack.c.h.b16 %v618
    %v2069 = vunpack.c.l.b16 %v619
    %v2070 = vunpack.c.h.b16 %v619
    %v2071 = vunpack.c.l.b16 %v620
    %v2072 = vunpack.c.h.b16 %v620
    %v2073 = vunpack.c.l.b16 %v621
    %v2074 = vunpack.c.h.b16 %v621
    %v2075 = vunpack.c.l.b16 %v622
    %v2076 = vunpack.c.h.b16 %v622
    %v2077 = vunpack.c.l.b16 %v623
    %v2078 = vunpack.c.h.b16 %v623
    %v2079 = vunpack.c.l.b16 %v624
    %v2080 = vunpack.c.h.b16 %v624
    %v2081 = vunpack.c.l.b16 %v625
    %v2082 = vunpack.c.h.b16 %v625
    %v2083 = vunpack.c.l.b16 %v626
    %v2084 = vunpack.c.h.b16 %v626
    %v2085 = vunpack.c.l.b16 %v627
    %v2086 = vunpack.c.h.b16 %v627
    %v2087 = vunpack.c.l.b16 %v628
    %v2088 = vunpack.c.h.b16 %v628
    %v2089 = vunpack.c.l.b16 %v629
    %v2090 = vunpack.c.h.b16 %v629
    %v2091 = vunpack.c.l.b16 %v630
    %v2092 = vunpack.c.h.b16 %v630
    %v2093 = vunpack.c.l.b16 %v631
    %v2094 = vunpack.c.h.b16 %v631
    %v2095 = vunpack.c.l.b16 %v632
    %v2096 = vunpack.c.h.b16 %v632
    %v2097 = vunpack.c.l.b16 %v633
    %v2098 = vunpack.c.h.b16 %v633
    %v2099 = vunpack.c.l.b16 %v634
    %v2100 = vunpack.c.h.b16 %v634
    %v2101 = vunpack.c.l.b16 %v635
    %v2102 = vunpack.c.h.b16 %v635
    %v2103 = vunpack.c.l.b16 %v636
    %v2104 = vunpack.c.h.b16 %v636
    %v2105 = vunpack.c.l.b16 %v637
    %v2106 = vunpack.c.h.b16 %v637
    %v2107 = vunpack.c.l.b16 %v638
    %v2108 = vunpack.c.h.b16 %v638
    %v2109 = vunpack.c.l.b16 %v639
    %v2110 = vunpack.c.h.b16 %v639
    %v2111 = vunpack.c.l.b16 %v640
    %v2112 = vunpack.c.h.b16 %v640
    %v2113 = vunpack.c.l.b16 %v641
    %v2114 = vunpack.c.h.b16 %v641
    %v2115 = vunpack.c.l.b16 %v642
    %v2116 = vunpack.c.h.b16 %v642
    %v2117 = vunpack.c.l.b16 %v643
    %v2118 = vunpack.c.h.b16 %v643
    %v2119 = vunpack.c.l.b16 %v644
    %v2120 = vunpack.c.h.b16 %v644
    %v2121 = vunpack.c.l.b16 %v645
    %v2122 = vunpack.c.h.b16 %v645
    %v2123 = vunpack.c.l.b16 %v646
    %v2124 = vunpack.c.h.b16 %v646
    %v2125 = vunpack.c.l.b16 %v647
    %v2126 = vunpack.c.h.b16 %v647
    %v2127 = vunpack.c.l.b16 %v648
    %v2128 = vunpack.c.h.b16 %v648
    %v2129 = vunpack.c.l.b16 %v649
    %v2130 = vunpack.c.h.b16 %v649
    %v2131 = vunpack.c.l.b16 %v650
    %v2132 = vunpack.c.h.b16 %v650
    %v2133 = vunpack.c.l.b16 %v651
    %v2134 = vunpack.c.h.b16 %v651
    %v2135 = vunpack.c.l.b16 %v652
    %v2136 = vunpack.c.h.b16 %v652
    %v2137 = vunpack.c.l.b16 %v653
    %v2138 = vunpack.c.h.b16 %v653
    %v2139 = vunpack.c.l.b16 %v654
    %v2140 = vunpack.c.h.b16 %v654
    %v2141 = vunpack.c.l.b16 %v655
    %v2142 = vunpack.c.h.b16 %v655
    %v2143 = vunpack.c.l.b16 %v656
    %v2144 = vunpack.c.h.b16 %v656
    %v2145 = vunpack.c.l.b16 %v657
    %v2146 = vunpack.c.h.b16 %v657
    %v2147 = vunpack.c.l.b16 %v658
    %v2148 = vunpack.c.h.b16 %v658
    %v2149 = vunpack.c.l.b16 %v659
    %v2150 = vunpack.c.h.b16 %v659
    %v2151 = vunpack.c.l.b16 %v660
    %v2152 = vunpack.c.h.b16 %v660
    %v2153 = vunpack.c.l.b16 %v661
    %v2154 = vunpack.c.h.b16 %v661
    %v2155 = vunpack.c.l.b16 %v662
    %v2156 = vunpack.c.h.b16 %v662
    %v2157 = vunpack.c.l.b16 %v663
    %v2158 = vunpack.c.h.b16 %v663
    %v2159 = vunpack.c.l.b16 %v664
    %v2160 = vunpack.c.h.b16 %v664
    %v2161 = vunpack.c.l.b16 %v665
    %v2162 = vunpack.c.h.b16 %v665
    %v2163 = vunpack.c.l.b16 %v666
    %v2164 = vunpack.c.h.b16 %v666
    %v2165 = vunpack.c.l.b16 %v667
    %v2166 = vunpack.c.h.b16 %v667
    %v2167 = vunpack.c.l.b16 %v668
    %v2168 = vunpack.c.h.b16 %v668
    %v2169 = vunpack.c.l.b16 %v669
    %v2170 = vunpack.c.h.b16 %v669
    %v2171 = vunpack.c.l.b16 %v670
    %v2172 = vunpack.c.h.b16 %v670
    %v2173 = vunpack.c.l.b16 %v671
    %v2174 = vunpack.c.h.b16 %v671
    %v2175 = vunpack.c.l.b16 %v672
    %v2176 = vunpack.c.h.b16 %v672
    %v2177 = vunpack.c.l.b16 %v673
    %v2178 = vunpack.c.h.b16 %v673
    %v2179 = vunpack.c.l.b16 %v674
    %v2180 = vunpack.c.h.b16 %v674
    %v2181 = vunpack.c.l.b16 %v675
    %v2182 = vunpack.c.h.b16 %v675
    %v2183 = vunpack.c.l.b16 %v676
    %v2184 = vunpack.c.h.b16 %v676
    %v2185 = vunpack.c.l.b16 %v677
    %v2186 = vunpack.c.h.b16 %v677
    %v2187 = vunpack.c.l.b16 %v678
    %v2188 = vunpack.c.h.b16 %v678
    %v2189 = vunpack.c.l.b16 %v679
    %v2190 = vunpack.c.h.b16 %v679
    %v2191 = vunpack.c.l.b16 %v680
    %v2192 = vunpack.c.h.b16 %v680
    %v2193 = vunpack.c.l.b16 %v681
    %v2194 = vunpack.c.h.b16 %v681
    %v2195 = vunpack.c.l.b16 %v682
    %v2196 = vunpack.c.h.b16 %v682
    %v2197 = vunpack.c.l.b16 %v683
    %v2198 = vunpack.c.h.b16 %v683
    %v2199 = vunpack.c.l.b16 %v684
    %v2200 = vunpack.c.h.b16 %v684
    %v2201 = vunpack.c.l.b16 %v685
    %v2202 = vunpack.c.h.b16 %v685
    %v2203 = vunpack.c.l.b16 %v686
    %v2204 = vunpack.c.h.b16 %v686
    %v2205 = vunpack.c.l.b16 %v687
    %v2206 = vunpack.c.h.b16 %v687
    %v2207 = vunpack.c.l.b16 %v688
    %v2208 = vunpack.c.h.b16 %v688
    %v2209 = vunpack.c.l.b16 %v689
    %v2210 = vunpack.c.h.b16 %v689
    %v2211 = vunpack.c.l.b16 %v690
    %v2212 = vunpack.c.h.b16 %v690
    %v2213 = vunpack.c.l.b16 %v691
    %v2214 = vunpack.c.h.b16 %v691
    %v2215 = vunpack.c.l.b16 %v692
    %v2216 = vunpack.c.h.b16 %v692
    %v2217 = vunpack.c.l.b16 %v693
    %v2218 = vunpack.c.h.b16 %v693
    %v2219 = vunpack.c.l.b16 %v694
    %v2220 = vunpack.c.h.b16 %v694
    %v2221 = vunpack.c.l.b16 %v695
    %v2222 = vunpack.c.h.b16 %v695
    %v2223 = vunpack.c.l.b16 %v696
    %v2224 = vunpack.c.h.b16 %v696
    %v2225 = vunpack.c.l.b16 %v697
    %v2226 = vunpack.c.h.b16 %v697
    %v2227 = vunpack.c.l.b16 %v698
    %v2228 = vunpack.c.h.b16 %v698
    %v2229 = vunpack.c.l.b16 %v699
    %v2230 = vunpack.c.h.b16 %v699
    %v2231 = vunpack.c.l.b16 %v700
    %v2232 = vunpack.c.h.b16 %v700
    %v2233 = vunpack.c.l.b16 %v701
    %v2234 = vunpack.c.h.b16 %v701
    %v2235 = vunpack.c.l.b16 %v702
    %v2236 = vunpack.c.h.b16 %v702
    %v2237 = vunpack.c.l.b16 %v703
    %v2238 = vunpack.c.h.b16 %v703
    %v2239 = vunpack.c.l.b16 %v704
    %v2240 = vunpack.c.h.b16 %v704
    %v2241 = vpack.c.b16 %v1225, %v1217
    %v2242 = vpack.c.b16 %v1226, %v1218
    %v2243 = vpack.c.b16 %v1227, %v1219
    %v2244 = vpack.c.b16 %v1228, %v1220
    %v2245 = vpack.c.b16 %v1229, %v1221
    %v2246 = vpack.c.b16 %v1230, %v1222
    %v2247 = vpack.c.b16 %v1231, %v1223
    %v2248 = vpack.c.b16 %v1232, %v1224
    %v2249 = vpack.c.b16 %v1241, %v1233
    %v2250 = vpack.c.b16 %v1242, %v1234
    %v2251 = vpack.c.b16 %v1243, %v1235
    %v2252 = vpack.c.b16 %v1244, %v1236
    %v2253 = vpack.c.b16 %v1245, %v1237
    %v2254 = vpack.c.b16 %v1246, %v1238
    %v2255 = vpack.c.b16 %v1247, %v1239
    %v2256 = vpack.c.b16 %v1248, %v1240
    %v2257 = vpack.c.b16 %v1257, %v1249
    %v2258 = vpack.c.b16 %v1258, %v1250
    %v2259 = vpack.c.b16 %v1259, %v1251
    %v2260 = vpack.c.b16 %v1260, %v1252
    %v2261 = vpack.c.b16 %v1261, %v1253
    %v2262 = vpack.c.b16 %v1262, %v1254
    %v2263 = vpack.c.b16 %v1263, %v1255
    %v2264 = vpack.c.b16 %v1264, %v1256
    %v2265 = vpack.c.b16 %v1273, %v1265
    %v2266 = vpack.c.b16 %v1274, %v1266
    %v2267 = vpack.c.b16 %v1275, %v1267
    %v2268 = vpack.c.b16 %v1276, %v1268
    %v2269 = vpack.c.b16 %v1277, %v1269
    %v2270 = vpack.c.b16 %v1278, %v1270
    %v2271 = vpack.c.b16 %v1279, %v1271
    %v2272 = vpack.c.b16 %v1280, %v1272
    %v2273 = vpack.c.b16 %v1289, %v1281
    %v2274 = vpack.c.b16 %v1290, %v1282
    %v2275 = vpack.c.b16 %v1291, %v1283
    %v2276 = vpack.c.b16 %v1292, %v1284
    %v2277 = vpack.c.b16 %v1293, %v1285
    %v2278 = vpack.c.b16 %v1294, %v1286
    %v2279 = vpack.c.b16 %v1295, %v1287
    %v2280 = vpack.c.b16 %v1296, %v1288
    %v2281 = vpack.c.b16 %v1305, %v1297
    %v2282 = vpack.c.b16 %v1306, %v1298
    %v2283 = vpack.c.b16 %v1307, %v1299
    %v2284 = vpack.c.b16 %v1308, %v1300
    %v2285 = vpack.c.b16 %v1309, %v1301
    %v2286 = vpack.c.b16 %v1310, %v1302
    %v2287 = vpack.c.b16 %v1311, %v1303
    %v2288 = vpack.c.b16 %v1312, %v1304
    %v2289 = vpack.c.b16 %v1321, %v1313
    %v2290 = vpack.c.b16 %v1322, %v1314
    %v2291 = vpack.c.b16 %v1323, %v1315
    %v2292 = vpack.c.b16 %v1324, %v1316
    %v2293 = vpack.c.b16 %v1325, %v1317
    %v2294 = vpack.c.b16 %v1326, %v1318
    %v2295 = vpack.c.b16 %v1327, %v1319
    %v2296 = vpack.c.b16 %v1328, %v1320
    %v2297 = vpack.c.b16 %v1337, %v1329
    %v2298 = vpack.c.b16 %v1338, %v1330
    %v2299 = vpack.c.b16 %v1339, %v1331
    %v2300 = vpack.c.b16 %v1340, %v1332
    %v2301 = vpack.c.b16 %v1341, %v1333
    %v2302 = vpack.c.b16 %v1342, %v1334
    %v2303 = vpack.c.b16 %v1343, %v1335
    %v2304 = vpack.c.b16 %v1344, %v1336
    %v2305 = vpack.c.b16 %v1353, %v1345
    %v2306 = vpack.c.b16 %v1354, %v1346
    %v2307 = vpack.c.b16 %v1355, %v1347
    %v2308 = vpack.c.b16 %v1356, %v1348
    %v2309 = vpack.c.b16 %v1357, %v1349
    %v2310 = vpack.c.b16 %v1358, %v1350
    %v2311 = vpack.c.b16 %v1359, %v1351
    %v2312 = vpack.c.b16 %v1360, %v1352
    %v2313 = vpack.c.b16 %v1369, %v1361
    %v2314 = vpack.c.b16 %v1370, %v1362
    %v2315 = vpack.c.b16 %v1371, %v1363
    %v2316 = vpack.c.b16 %v1372, %v1364
    %v2317 = vpack.c.b16 %v1373, %v1365
    %v2318 = vpack.c.b16 %v1374, %v1366
    %v2319 = vpack.c.b16 %v1375, %v1367
    %v2320 = vpack.c.b16 %v1376, %v1368
    %v2321 = vpack.c.b16 %v1385, %v1377
    %v2322 = vpack.c.b16 %v1386, %v1378
    %v2323 = vpack.c.b16 %v1387, %v1379
    %v2324 = vpack.c.b16 %v1388, %v1380
    %v2325 = vpack.c.b16 %v1389, %v1381
    %v2326 = vpack.c.b16 %v1390, %v1382
    %v2327 = vpack.c.b16 %v1391, %v1383
    %v2328 = vpack.c.b16 %v1392, %v1384
    %v2329 = vpack.c.b16 %v1401, %v1393
    %v2330 = vpack.c.b16 %v1402, %v1394
    %v2331 = vpack.c.b16 %v1403, %v1395
    %v2332 = vpack.c.b16 %v1404, %v1396
    %v2333 = vpack.c.b16 %v1405, %v1397
    %v2334 = vpack.c.b16 %v1406, %v1398
    %v2335 = vpack.c.b16 %v1407, %v1399
    %v2336 = vpack.c.b16 %v1408, %v1400
    %v2337 = vpack.c.b16 %v1417, %v1409
    %v2338 = vpack.c.b16 %v1418, %v1410
    %v2339 = vpack.c.b16 %v1419, %v1411
    %v2340 = vpack.c.b16 %v1420, %v1412
    %v2341 = vpack.c.b16 %v1421, %v1413
    %v2342 = vpack.c.b16 %v1422, %v1414
    %v2343 = vpack.c.b16 %v1423, %v1415
    %v2344 = vpack.c.b16 %v1424, %v1416
    %v2345 = vpack.c.b16 %v1433, %v1425
    %v2346 = vpack.c.b16 %v1434, %v1426
    %v2347 = vpack.c.b16 %v1435, %v1427
    %v2348 = vpack.c.b16 %v1436, %v1428
    %v2349 = vpack.c.b16 %v1437, %v1429
    %v2350 = vpack.c.b16 %v1438, %v1430
    %v2351 = vpack.c.b16 %v1439, %v1431
    %v2352 = vpack.c.b16 %v1440, %v1432
    %v2353 = vpack.c.b16 %v1449, %v1441
    %v2354 = vpack.c.b16 %v1450, %v1442
    %v2355 = vpack.c.b16 %v1451, %v1443
    %v2356 = vpack.c.b16 %v1452, %v1444
    %v2357 = vpack.c.b16 %v1453, %v1445
    %v2358 = vpack.c.b16 %v1454, %v1446
    %v2359 = vpack.c.b16 %v1455, %v1447
    %v2360 = vpack.c.b16 %v1456, %v1448
    %v2361 = vpack.c.b16 %v1465, %v1457
    %v2362 = vpack.c.b16 %v1466, %v1458
    %v2363 = vpack.c.b16 %v1467, %v1459
    %v2364 = vpack.c.b16 %v1468, %v1460
    %v2365 = vpack.c.b16 %v1469, %v1461
    %v2366 = vpack.c.b16 %v1470, %v1462
    %v2367 = vpack.c.b16 %v1471, %v1463
    %v2368 = vpack.c.b16 %v1472, %v1464
    %v2369 = vpack.c.b16 %v1481, %v1473
    %v2370 = vpack.c.b16 %v1482, %v1474
    %v2371 = vpack.c.b16 %v1483, %v1475
    %v2372 = vpack.c.b16 %v1484, %v1476
    %v2373 = vpack.c.b16 %v1485, %v1477
    %v2374 = vpack.c.b16 %v1486, %v1478
    %v2375 = vpack.c.b16 %v1487, %v1479
    %v2376 = vpack.c.b16 %v1488, %v1480
    %v2377 = vpack.c.b16 %v1497, %v1489
    %v2378 = vpack.c.b16 %v1498, %v1490
    %v2379 = vpack.c.b16 %v1499, %v1491
    %v2380 = vpack.c.b16 %v1500, %v1492
    %v2381 = vpack.c.b16 %v1501, %v1493
    %v2382 = vpack.c.b16 %v1502, %v1494
    %v2383 = vpack.c.b16 %v1503, %v1495
    %v2384 = vpack.c.b16 %v1504, %v1496
    %v2385 = vpack.c.b16 %v1513, %v1505
    %v2386 = vpack.c.b16 %v1514, %v1506
    %v2387 = vpack.c.b16 %v1515, %v1507
    %v2388 = vpack.c.b16 %v1516, %v1508
    %v2389 = vpack.c.b16 %v1517, %v1509
    %v2390 = vpack.c.b16 %v1518, %v1510
    %v2391 = vpack.c.b16 %v1519, %v1511
    %v2392 = vpack.c.b16 %v1520, %v1512
    %v2393 = vpack.c.b16 %v1529, %v1521
    %v2394 = vpack.c.b16 %v1530, %v1522
    %v2395 = vpack.c.b16 %v1531, %v1523
    %v2396 = vpack.c.b16 %v1532, %v1524
    %v2397 = vpack.c.b16 %v1533, %v1525
    %v2398 = vpack.c.b16 %v1534, %v1526
    %v2399 = vpack.c.b16 %v1535, %v1527
    %v2400 = vpack.c.b16 %v1536, %v1528
    %v2401 = vpack.c.b16 %v1545, %v1537
    %v2402 = vpack.c.b16 %v1546, %v1538
    %v2403 = vpack.c.b16 %v1547, %v1539
    %v2404 = vpack.c.b16 %v1548, %v1540
    %v2405 = vpack.c.b16 %v1549, %v1541
    %v2406 = vpack.c.b16 %v1550, %v1542
    %v2407 = vpack.c.b16 %v1551, %v1543
    %v2408 = vpack.c.b16 %v1552, %v1544
    %v2409 = vpack.c.b16 %v1561, %v1553
    %v2410 = vpack.c.b16 %v1562, %v1554
    %v2411 = vpack.c.b16 %v1563, %v1555
    %v2412 = vpack.c.b16 %v1564, %v1556
    %v2413 = vpack.c.b16 %v1565, %v1557
    %v2414 = vpack.c.b16 %v1566, %v1558
    %v2415 = vpack.c.b16 %v1567, %v1559
    %v2416 = vpack.c.b16 %v1568, %v1560
    %v2417 = vpack.c.b16 %v1577, %v1569
    %v2418 = vpack.c.b16 %v1578, %v1570
    %v2419 = vpack.c.b16 %v1579, %v1571
    %v2420 = vpack.c.b16 %v1580, %v1572
    %v2421 = vpack.c.b16 %v1581, %v1573
    %v2422 = vpack.c.b16 %v1582, %v1574
    %v2423 = vpack.c.b16 %v1583, %v1575
    %v2424 = vpack.c.b16 %v1584, %v1576
    %v2425 = vpack.c.b16 %v1593, %v1585
    %v2426 = vpack.c.b16 %v1594, %v1586
    %v2427 = vpack.c.b16 %v1595, %v1587
    %v2428 = vpack.c.b16 %v1596, %v1588
    %v2429 = vpack.c.b16 %v1597, %v1589
    %v2430 = vpack.c.b16 %v1598, %v1590
    %v2431 = vpack.c.b16 %v1599, %v1591
    %v2432 = vpack.c.b16 %v1600, %v1592
    %v2433 = vpack.c.b16 %v1609, %v1601
    %v2434 = vpack.c.b16 %v1610, %v1602
    %v2435 = vpack.c.b16 %v1611, %v1603
    %v2436 = vpack.c.b16 %v1612, %v1604
    %v2437 = vpack.c.b16 %v1613, %v1605
    %v2438 = vpack.c.b16 %v1614, %v1606
    %v2439 = vpack.c.b16 %v1615, %v1607
    %v2440 = vpack.c.b16 %v1616, %v1608
    %v2441 = vpack.c.b16 %v1625, %v1617
    %v2442 = vpack.c.b16 %v1626, %v1618
    %v2443 = vpack.c.b16 %v1627, %v1619
    %v2444 = vpack.c.b16 %v1628, %v1620
    %v2445 = vpack.c.b16 %v1629, %v1621
    %v2446 = vpack.c.b16 %v1630, %v1622
    %v2447 = vpack.c.b16 %v1631, %v1623
    %v2448 = vpack.c.b16 %v1632, %v1624
    %v2449 = vpack.c.b16 %v1641, %v1633
    %v2450 = vpack.c.b16 %v1642, %v1634
    %v2451 = vpack.c.b16 %v1643, %v1635
    %v2452 = vpack.c.b16 %v1644, %v1636
    %v2453 = vpack.c.b16 %v1645, %v1637
    %v2454 = vpack.c.b16 %v1646, %v1638
    %v2455 = vpack.c.b16 %v1647, %v1639
    %v2456 = vpack.c.b16 %v1648, %v1640
    %v2457 = vpack.c.b16 %v1657, %v1649
    %v2458 = vpack.c.b16 %v1658, %v1650
    %v2459 = vpack.c.b16 %v1659, %v1651
    %v2460 = vpack.c.b16 %v1660, %v1652
    %v2461 = vpack.c.b16 %v1661, %v1653
    %v2462 = vpack.c.b16 %v1662, %v1654
    %v2463 = vpack.c.b16 %v1663, %v1655
    %v2464 = vpack.c.b16 %v1664, %v1656
    %v2465 = vpack.c.b16 %v1673, %v1665
    %v2466 = vpack.c.b16 %v1674, %v1666
    %v2467 = vpack.c.b16 %v1675, %v1667
    %v2468 = vpack.c.b16 %v1676, %v1668
    %v2469 = vpack.c.b16 %v1677, %v1669
    %v2470 = vpack.c.b16 %v1678, %v1670
    %v2471 = vpack.c.b16 %v1679, %v1671
    %v2472 = vpack.c.b16 %v1680, %v1672
    %v2473 = vpack.c.b16 %v1689, %v1681
    %v2474 = vpack.c.b16 %v1690, %v1682
    %v2475 = vpack.c.b16 %v1691, %v1683
    %v2476 = vpack.c.b16 %v1692, %v1684
    %v2477 = vpack.c.b16 %v1693, %v1685
    %v2478 = vpack.c.b16 %v1694, %v1686
    %v2479 = vpack.c.b16 %v1695, %v1687
    %v2480 = vpack.c.b16 %v1696, %v1688
    %v2481 = vpack.c.b16 %v1705, %v1697
    %v2482 = vpack.c.b16 %v1706, %v1698
    %v2483 = vpack.c.b16 %v1707, %v1699
    %v2484 = vpack.c.b16 %v1708, %v1700
    %v2485 = vpack.c.b16 %v1709, %v1701
    %v2486 = vpack.c.b16 %v1710, %v1702
    %v2487 = vpack.c.b16 %v1711, %v1703
    %v2488 = vpack.c.b16 %v1712, %v1704
    %v2489 = vpack.c.b16 %v1721, %v1713
    %v2490 = vpack.c.b16 %v1722, %v1714
    %v2491 = vpack.c.b16 %v1723, %v1715
    %v2492 = vpack.c.b16 %v1724, %v1716
    %v2493 = vpack.c.b16 %v1725, %v1717
    %v2494 = vpack.c.b16 %v1726, %v1718
    %v2495 = vpack.c.b16 %v1727, %v1719
    %v2496 = vpack.c.b16 %v1728, %v1720
    %v2497 = vpack.c.b16 %v1737, %v1729
    %v2498 = vpack.c.b16 %v1738, %v1730
    %v2499 = vpack.c.b16 %v1739, %v1731
    %v2500 = vpack.c.b16 %v1740, %v1732
    %v2501 = vpack.c.b16 %v1741, %v1733
    %v2502 = vpack.c.b16 %v1742, %v1734
    %v2503 = vpack.c.b16 %v1743, %v1735
    %v2504 = vpack.c.b16 %v1744, %v1736
    %v2505 = vpack.c.b16 %v1753, %v1745
    %v2506 = vpack.c.b16 %v1754, %v1746
    %v2507 = vpack.c.b16 %v1755, %v1747
    %v2508 = vpack.c.b16 %v1756, %v1748
    %v2509 = vpack.c.b16 %v1757, %v1749
    %v2510 = vpack.c.b16 %v1758, %v1750
    %v2511 = vpack.c.b16 %v1759, %v1751
    %v2512 = vpack.c.b16 %v1760, %v1752
    %v2513 = vpack.c.b16 %v1769, %v1761
    %v2514 = vpack.c.b16 %v1770, %v1762
    %v2515 = vpack.c.b16 %v1771, %v1763
    %v2516 = vpack.c.b16 %v1772, %v1764
    %v2517 = vpack.c.b16 %v1773, %v1765
    %v2518 = vpack.c.b16 %v1774, %v1766
    %v2519 = vpack.c.b16 %v1775, %v1767
    %v2520 = vpack.c.b16 %v1776, %v1768
    %v2521 = vpack.c.b16 %v1785, %v1777
    %v2522 = vpack.c.b16 %v1786, %v1778
    %v2523 = vpack.c.b16 %v1787, %v1779
    %v2524 = vpack.c.b16 %v1788, %v1780
    %v2525 = vpack.c.b16 %v1789, %v1781
    %v2526 = vpack.c.b16 %v1790, %v1782
    %v2527 = vpack.c.b16 %v1791, %v1783
    %v2528 = vpack.c.b16 %v1792, %v1784
    %v2529 = vpack.c.b16 %v1801, %v1793
    %v2530 = vpack.c.b16 %v1802, %v1794
    %v2531 = vpack.c.b16 %v1803, %v1795
    %v2532 = vpack.c.b16 %v1804, %v1796
    %v2533 = vpack.c.b16 %v1805, %v1797
    %v2534 = vpack.c.b16 %v1806, %v1798
    %v2535 = vpack.c.b16 %v1807, %v1799
    %v2536 = vpack.c.b16 %v1808, %v1800
    %v2537 = vpack.c.b16 %v1817, %v1809
    %v2538 = vpack.c.b16 %v1818, %v1810
    %v2539 = vpack.c.b16 %v1819, %v1811
    %v2540 = vpack.c.b16 %v1820, %v1812
    %v2541 = vpack.c.b16 %v1821, %v1813
    %v2542 = vpack.c.b16 %v1822, %v1814
    %v2543 = vpack.c.b16 %v1823, %v1815
    %v2544 = vpack.c.b16 %v1824, %v1816
    %v2545 = vpack.c.b16 %v1833, %v1825
    %v2546 = vpack.c.b16 %v1834, %v1826
    %v2547 = vpack.c.b16 %v1835, %v1827
    %v2548 = vpack.c.b16 %v1836, %v1828
    %v2549 = vpack.c.b16 %v1837, %v1829
    %v2550 = vpack.c.b16 %v1838, %v1830
    %v2551 = vpack.c.b16 %v1839, %v1831
    %v2552 = vpack.c.b16 %v1840, %v1832
    %v2553 = vpack.c.b16 %v1849, %v1841
    %v2554 = vpack.c.b16 %v1850, %v1842
    %v2555 = vpack.c.b16 %v1851, %v1843
    %v2556 = vpack.c.b16 %v1852, %v1844
    %v2557 = vpack.c.b16 %v1853, %v1845
    %v2558 = vpack.c.b16 %v1854, %v1846
    %v2559 = vpack.c.b16 %v1855, %v1847
    %v2560 = vpack.c.b16 %v1856, %v1848
    %v2561 = vpack.c.b16 %v1865, %v1857
    %v2562 = vpack.c.b16 %v1866, %v1858
    %v2563 = vpack.c.b16 %v1867, %v1859
    %v2564 = vpack.c.b16 %v1868, %v1860
    %v2565 = vpack.c.b16 %v1869, %v1861
    %v2566 = vpack.c.b16 %v1870, %v1862
    %v2567 = vpack.c.b16 %v1871, %v1863
    %v2568 = vpack.c.b16 %v1872, %v1864
    %v2569 = vpack.c.b16 %v1881, %v1873
    %v2570 = vpack.c.b16 %v1882, %v1874
    %v2571 = vpack.c.b16 %v1883, %v1875
    %v2572 = vpack.c.b16 %v1884, %v1876
    %v2573 = vpack.c.b16 %v1885, %v1877
    %v2574 = vpack.c.b16 %v1886, %v1878
    %v2575 = vpack.c.b16 %v1887, %v1879
    %v2576 = vpack.c.b16 %v1888, %v1880
    %v2577 = vpack.c.b16 %v1897, %v1889
    %v2578 = vpack.c.b16 %v1898, %v1890
    %v2579 = vpack.c.b16 %v1899, %v1891
    %v2580 = vpack.c.b16 %v1900, %v1892
    %v2581 = vpack.c.b16 %v1901, %v1893
    %v2582 = vpack.c.b16 %v1902, %v1894
    %v2583 = vpack.c.b16 %v1903, %v1895
    %v2584 = vpack.c.b16 %v1904, %v1896
    %v2585 = vpack.c.b16 %v1913, %v1905
    %v2586 = vpack.c.b16 %v1914, %v1906
    %v2587 = vpack.c.b16 %v1915, %v1907
    %v2588 = vpack.c.b16 %v1916, %v1908
    %v2589 = vpack.c.b16 %v1917, %v1909
    %v2590 = vpack.c.b16 %v1918, %v1910
    %v2591 = vpack.c.b16 %v1919, %v1911
    %v2592 = vpack.c.b16 %v1920, %v1912
    %v2593 = vpack.c.b16 %v1929, %v1921
    %v2594 = vpack.c.b16 %v1930, %v1922
    %v2595 = vpack.c.b16 %v1931, %v1923
    %v2596 = vpack.c.b16 %v1932, %v1924
    %v2597 = vpack.c.b16 %v1933, %v1925
    %v2598 = vpack.c.b16 %v1934, %v1926
    %v2599 = vpack.c.b16 %v1935, %v1927
    %v2600 = vpack.c.b16 %v1936, %v1928
    %v2601 = vpack.c.b16 %v1945, %v1937
    %v2602 = vpack.c.b16 %v1946, %v1938
    %v2603 = vpack.c.b16 %v1947, %v1939
    %v2604 = vpack.c.b16 %v1948, %v1940
    %v2605 = vpack.c.b16 %v1949, %v1941
    %v2606 = vpack.c.b16 %v1950, %v1942
    %v2607 = vpack.c.b16 %v1951, %v1943
    %v2608 = vpack.c.b16 %v1952, %v1944
    %v2609 = vpack.c.b16 %v1961, %v1953
    %v2610 = vpack.c.b16 %v1962, %v1954
    %v2611 = vpack.c.b16 %v1963, %v1955
    %v2612 = vpack.c.b16 %v1964, %v1956
    %v2613 = vpack.c.b16 %v1965, %v1957
    %v2614 = vpack.c.b16 %v1966, %v1958
    %v2615 = vpack.c.b16 %v1967, %v1959
    %v2616 = vpack.c.b16 %v1968, %v1960
    %v2617 = vpack.c.b16 %v1977, %v1969
    %v2618 = vpack.c.b16 %v1978, %v1970
    %v2619 = vpack.c.b16 %v1979, %v1971
    %v2620 = vpack.c.b16 %v1980, %v1972
    %v2621 = vpack.c.b16 %v1981, %v1973
    %v2622 = vpack.c.b16 %v1982, %v1974
    %v2623 = vpack.c.b16 %v1983, %v1975
    %v2624 = vpack.c.b16 %v1984, %v1976
    %v2625 = vpack.c.b16 %v1993, %v1985
    %v2626 = vpack.c.b16 %v1994, %v1986
    %v2627 = vpack.c.b16 %v1995, %v1987
    %v2628 = vpack.c.b16 %v1996, %v1988
    %v2629 = vpack.c.b16 %v1997, %v1989
    %v2630 = vpack.c.b16 %v1998, %v1990
    %v2631 = vpack.c.b16 %v1999, %v1991
    %v2632 = vpack.c.b16 %v2000, %v1992
    %v2633 = vpack.c.b16 %v2009, %v2001
    %v2634 = vpack.c.b16 %v2010, %v2002
    %v2635 = vpack.c.b16 %v2011, %v2003
    %v2636 = vpack.c.b16 %v2012, %v2004
    %v2637 = vpack.c.b16 %v2013, %v2005
    %v2638 = vpack.c.b16 %v2014, %v2006
    %v2639 = vpack.c.b16 %v2015, %v2007
    %v2640 = vpack.c.b16 %v2016, %v2008
    %v2641 = vpack.c.b16 %v2025, %v2017
    %v2642 = vpack.c.b16 %v2026, %v2018
    %v2643 = vpack.c.b16 %v2027, %v2019
    %v2644 = vpack.c.b16 %v2028, %v2020
    %v2645 = vpack.c.b16 %v2029, %v2021
    %v2646 = vpack.c.b16 %v2030, %v2022
    %v2647 = vpack.c.b16 %v2031, %v2023
    %v2648 = vpack.c.b16 %v2032, %v2024
    %v2649 = vpack.c.b16 %v2041, %v2033
    %v2650 = vpack.c.b16 %v2042, %v2034
    %v2651 = vpack.c.b16 %v2043, %v2035
    %v2652 = vpack.c.b16 %v2044, %v2036
    %v2653 = vpack.c.b16 %v2045, %v2037
    %v2654 = vpack.c.b16 %v2046, %v2038
    %v2655 = vpack.c.b16 %v2047, %v2039
    %v2656 = vpack.c.b16 %v2048, %v2040
    %v2657 = vpack.c.b16 %v2057, %v2049
    %v2658 = vpack.c.b16 %v2058, %v2050
    %v2659 = vpack.c.b16 %v2059, %v2051
    %v2660 = vpack.c.b16 %v2060, %v2052
    %v2661 = vpack.c.b16 %v2061, %v2053
    %v2662 = vpack.c.b16 %v2062, %v2054
    %v2663 = vpack.c.b16 %v2063, %v2055
    %v2664 = vpack.c.b16 %v2064, %v2056
    %v2665 = vpack.c.b16 %v2073, %v2065
    %v2666 = vpack.c.b16 %v2074, %v2066
    %v2667 = vpack.c.b16 %v2075, %v2067
    %v2668 = vpack.c.b16 %v2076, %v2068
    %v2669 = vpack.c.b16 %v2077, %v2069
    %v2670 = vpack.c.b16 %v2078, %v2070
    %v2671 = vpack.c.b16 %v2079, %v2071
    %v2672 = vpack.c.b16 %v2080, %v2072
    %v2673 = vpack.c.b16 %v2089, %v2081
    %v2674 = vpack.c.b16 %v2090, %v2082
    %v2675 = vpack.c.b16 %v2091, %v2083
    %v2676 = vpack.c.b16 %v2092, %v2084
    %v2677 = vpack.c.b16 %v2093, %v2085
    %v2678 = vpack.c.b16 %v2094, %v2086
    %v2679 = vpack.c.b16 %v2095, %v2087
    %v2680 = vpack.c.b16 %v2096, %v2088
    %v2681 = vpack.c.b16 %v2105, %v2097
    %v2682 = vpack.c.b16 %v2106, %v2098
    %v2683 = vpack.c.b16 %v2107, %v2099
    %v2684 = vpack.c.b16 %v2108, %v2100
    %v2685 = vpack.c.b16 %v2109, %v2101
    %v2686 = vpack.c.b16 %v2110, %v2102
    %v2687 = vpack.c.b16 %v2111, %v2103
    %v2688 = vpack.c.b16 %v2112, %v2104
    %v2689 = vpack.c.b16 %v2121, %v2113
    %v2690 = vpack.c.b16 %v2122, %v2114
    %v2691 = vpack.c.b16 %v2123, %v2115
    %v2692 = vpack.c.b16 %v2124, %v2116
    %v2693 = vpack.c.b16 %v2125, %v2117
    %v2694 = vpack.c.b16 %v2126, %v2118
    %v2695 = vpack.c.b16 %v2127, %v2119
    %v2696 = vpack.c.b16 %v2128, %v2120
    %v2697 = vpack.c.b16 %v2137, %v2129
    %v2698 = vpack.c.b16 %v2138, %v2130
    %v2699 = vpack.c.b16 %v2139, %v2131
    %v2700 = vpack.c.b16 %v2140, %v2132
    %v2701 = vpack.c.b16 %v2141, %v2133
    %v2702 = vpack.c.b16 %v2142, %v2134
    %v2703 = vpack.c.b16 %v2143, %v2135
    %v2704 = vpack.c.b16 %v2144, %v2136
    %v2705 = vpack.c.b16 %v2153, %v2145
    %v2706 = vpack.c.b16 %v2154, %v2146
    %v2707 = vpack.c.b16 %v2155, %v2147
    %v2708 = vpack.c.b16 %v2156, %v2148
    %v2709 = vpack.c.b16 %v2157, %v2149
    %v2710 = vpack.c.b16 %v2158, %v2150
    %v2711 = vpack.c.b16 %v2159, %v2151
    %v2712 = vpack.c.b16 %v2160, %v2152
    %v2713 = vpack.c.b16 %v2169, %v2161
    %v2714 = vpack.c.b16 %v2170, %v2162
    %v2715 = vpack.c.b16 %v2171, %v2163
    %v2716 = vpack.c.b16 %v2172, %v2164
    %v2717 = vpack.c.b16 %v2173, %v2165
    %v2718 = vpack.c.b16 %v2174, %v2166
    %v2719 = vpack.c.b16 %v2175, %v2167
    %v2720 = vpack.c.b16 %v2176, %v2168
    %v2721 = vpack.c.b16 %v2185, %v2177
    %v2722 = vpack.c.b16 %v2186, %v2178
    %v2723 = vpack.c.b16 %v2187, %v2179
    %v2724 = vpack.c.b16 %v2188, %v2180
    %v2725 = vpack.c.b16 %v2189, %v2181
    %v2726 = vpack.c.b16 %v2190, %v2182
    %v2727 = vpack.c.b16 %v2191, %v2183
    %v2728 = vpack.c.b16 %v2192, %v2184
    %v2729 = vpack.c.b16 %v2201, %v2193
    %v2730 = vpack.c.b16 %v2202, %v2194
    %v2731 = vpack.c.b16 %v2203, %v2195
    %v2732 = vpack.c.b16 %v2204, %v2196
    %v2733 = vpack.c.b16 %v2205, %v2197
    %v2734 = vpack.c.b16 %v2206, %v2198
    %v2735 = vpack.c.b16 %v2207, %v2199
    %v2736 = vpack.c.b16 %v2208, %v2200
    %v2737 = vpack.c.b16 %v2217, %v2209
    %v2738 = vpack.c.b16 %v2218, %v2210
    %v2739 = vpack.c.b16 %v2219, %v2211
    %v2740 = vpack.c.b16 %v2220, %v2212
    %v2741 = vpack.c.b16 %v2221, %v2213
    %v2742 = vpack.c.b16 %v2222, %v2214
    %v2743 = vpack.c.b16 %v2223, %v2215
    %v2744 = vpack.c.b16 %v2224, %v2216
    %v2745 = vpack.c.b16 %v2233, %v2225
    %v2746 = vpack.c.b16 %v2234, %v2226
    %v2747 = vpack.c.b16 %v2235, %v2227
    %v2748 = vpack.c.b16 %v2236, %v2228
    %v2749 = vpack.c.b16 %v2237, %v2229
    %v2750 = vpack.c.b16 %v2238, %v2230
    %v2751 = vpack.c.b16 %v2239, %v2231
    %v2752 = vpack.c.b16 %v2240, %v2232
    %3265 = vmatprep.subr.bf16.mxu0 %v2242
    %3266 = vmatpush1.bf16.msra.mxu0 %v2241
    %3267 = vmatprep.subr.bf16.mxu0 %v2250
    %3268 = vmatpush1.bf16.msra.mxu0 %v2249
    %3269 = vmatprep.subr.bf16.mxu0 %v2258
    %3270 = vmatpush1.bf16.msra.mxu0 %v2257
    %3271 = vmatprep.subr.bf16.mxu0 %v2266
    %3272 = vmatpush1.bf16.msra.mxu0 %v2265
    %3273 = vmatprep.subr.bf16.mxu0 %v2274
    %3274 = vmatpush1.bf16.msra.mxu0 %v2273
    %3275 = vmatprep.subr.bf16.mxu0 %v2282
    %3276 = vmatpush1.bf16.msra.mxu0 %v2281
    %3277 = vmatprep.subr.bf16.mxu0 %v2290
    %3278 = vmatpush1.bf16.msra.mxu0 %v2289
    %3279 = vmatprep.subr.bf16.mxu0 %v2298
    %3280 = vmatpush1.bf16.msra.mxu0 %v2297
    %3281 = vmatprep.subr.bf16.mxu0 %v2306
    %3282 = vmatpush1.bf16.msra.mxu0 %v2305
    %3283 = vmatprep.subr.bf16.mxu0 %v2314
    %3284 = vmatpush1.bf16.msra.mxu0 %v2313
    %3285 = vmatprep.subr.bf16.mxu0 %v2322
    %3286 = vmatpush1.bf16.msra.mxu0 %v2321
    %3287 = vmatprep.subr.bf16.mxu0 %v2330
    %3288 = vmatpush1.bf16.msra.mxu0 %v2329
    %3289 = vmatprep.subr.bf16.mxu0 %v2338
    %3290 = vmatpush1.bf16.msra.mxu0 %v2337
    %3291 = vmatprep.subr.bf16.mxu0 %v2346
    %3292 = vmatpush1.bf16.msra.mxu0 %v2345
    %3293 = vmatprep.subr.bf16.mxu0 %v2354
    %3294 = vmatpush1.bf16.msra.mxu0 %v2353
    %3295 = vmatprep.subr.bf16.mxu0 %v2362
    %3296 = vmatpush1.bf16.msra.mxu0 %v2361
    %3297 = vmatprep.mubr.bf16.mxu0 %v186
    %3298 = vmatmul.mubr.bf16.gmra.mrb[0].mxu0 %v185
    %v3299 = vpop.f32.mrb[0].mxu0
    %v3300 = vadd.f32 0.0, %v3299
    %v3301 = vpop.f32.mrb[0].mxu0
    %v3302 = vadd.f32 0.0, %v3301
    %v3303 = vpop.f32.mrb[0].mxu0
    %v3304 = vpop.f32.mrb[0].mxu0
    %3305 = vdwg.mxu0
    %3306 = vmatprep.subr.bf16.mxu0 %v2370
    %3307 = vmatpush1.bf16.msra.mxu0 %v2369
    %3308 = vmatprep.subr.bf16.mxu0 %v2378
    %3309 = vmatpush1.bf16.msra.mxu0 %v2377
    %3310 = vmatprep.subr.bf16.mxu0 %v2386
    %3311 = vmatpush1.bf16.msra.mxu0 %v2385
    %3312 = vmatprep.subr.bf16.mxu0 %v2394
    %3313 = vmatpush1.bf16.msra.mxu0 %v2393
    %3314 = vmatprep.subr.bf16.mxu0 %v2402
    %3315 = vmatpush1.bf16.msra.mxu0 %v2401
    %3316 = vmatprep.subr.bf16.mxu0 %v2410
    %3317 = vmatpush1.bf16.msra.mxu0 %v2409
    %3318 = vmatprep.subr.bf16.mxu0 %v2418
    %3319 = vmatpush1.bf16.msra.mxu0 %v2417
    %3320 = vmatprep.subr.bf16.mxu0 %v2426
    %3321 = vmatpush1.bf16.msra.mxu0 %v2425
    %3322 = vmatprep.subr.bf16.mxu0 %v2434
    %3323 = vmatpush1.bf16.msra.mxu0 %v2433
    %3324 = vmatprep.subr.bf16.mxu0 %v2442
    %3325 = vmatpush1.bf16.msra.mxu0 %v2441
    %3326 = vmatprep.subr.bf16.mxu0 %v2450
    %3327 = vmatpush1.bf16.msra.mxu0 %v2449
    %3328 = vmatprep.subr.bf16.mxu0 %v2458
    %3329 = vmatpush1.bf16.msra.mxu0 %v2457
    %3330 = vmatprep.subr.bf16.mxu0 %v2466
    %3331 = vmatpush1.bf16.msra.mxu0 %v2465
    %3332 = vmatprep.subr.bf16.mxu0 %v2474
    %3333 = vmatpush1.bf16.msra.mxu0 %v2473
    %3334 = vmatprep.subr.bf16.mxu0 %v2482
    %3335 = vmatpush1.bf16.msra.mxu0 %v2481
    %3336 = vmatprep.subr.bf16.mxu0 %v2490
    %3337 = vmatpush1.bf16.msra.mxu0 %v2489
    %3338 = vmatprep.mubr.bf16.mxu0 %v188
    %3339 = vmatmul.mubr.bf16.gmra.mrb[0].mxu0 %v187
    %v3340 = vpop.f32.mrb[0].mxu0
    %v3341 = vadd.f32 %v3300, %v3340
    %v3342 = vpop.f32.mrb[0].mxu0
    %v3343 = vadd.f32 %v3302, %v3342
    %v3344 = vpop.f32.mrb[0].mxu0
    %v3345 = vpop.f32.mrb[0].mxu0
    %3346 = vdwg.mxu0
    %3347 = vmatprep.subr.bf16.mxu0 %v2498
    %3348 = vmatpush1.bf16.msra.mxu0 %v2497
    %3349 = vmatprep.subr.bf16.mxu0 %v2506
    %3350 = vmatpush1.bf16.msra.mxu0 %v2505
    %3351 = vmatprep.subr.bf16.mxu0 %v2514
    %3352 = vmatpush1.bf16.msra.mxu0 %v2513
    %3353 = vmatprep.subr.bf16.mxu0 %v2522
    %3354 = vmatpush1.bf16.msra.mxu0 %v2521
    %3355 = vmatprep.subr.bf16.mxu0 %v2530
    %3356 = vmatpush1.bf16.msra.mxu0 %v2529
    %3357 = vmatprep.subr.bf16.mxu0 %v2538
    %3358 = vmatpush1.bf16.msra.mxu0 %v2537
    %3359 = vmatprep.subr.bf16.mxu0 %v2546
    %3360 = vmatpush1.bf16.msra.mxu0 %v2545
    %3361 = vmatprep.subr.bf16.mxu0 %v2554
    %3362 = vmatpush1.bf16.msra.mxu0 %v2553
    %3363 = vmatprep.subr.bf16.mxu0 %v2562
    %3364 = vmatpush1.bf16.msra.mxu0 %v2561
    %3365 = vmatprep.subr.bf16.mxu0 %v2570
    %3366 = vmatpush1.bf16.msra.mxu0 %v2569
    %3367 = vmatprep.subr.bf16.mxu0 %v2578
    %3368 = vmatpush1.bf16.msra.mxu0 %v2577
    %3369 = vmatprep.subr.bf16.mxu0 %v2586
    %3370 = vmatpush1.bf16.msra.mxu0 %v2585
    %3371 = vmatprep.subr.bf16.mxu0 %v2594
    %3372 = vmatpush1.bf16.msra.mxu0 %v2593
    %3373 = vmatprep.subr.bf16.mxu0 %v2602
    %3374 = vmatpush1.bf16.msra.mxu0 %v2601
    %3375 = vmatprep.subr.bf16.mxu0 %v2610
    %3376 = vmatpush1.bf16.msra.mxu0 %v2609
    %3377 = vmatprep.subr.bf16.mxu0 %v2618
    %3378 = vmatpush1.bf16.msra.mxu0 %v2617
    %3379 = vmatprep.mubr.bf16.mxu0 %v190
    %3380 = vmatmul.mubr.bf16.gmra.mrb[0].mxu0 %v189
    %v3381 = vpop.f32.mrb[0].mxu0
    %v3382 = vadd.f32 %v3341, %v3381
    %v3383 = vpop.f32.mrb[0].mxu0
    %v3384 = vadd.f32 %v3343, %v3383
    %v3385 = vpop.f32.mrb[0].mxu0
    %v3386 = vpop.f32.mrb[0].mxu0
    %3387 = vdwg.mxu0
    %3388 = vmatprep.subr.bf16.mxu0 %v2626
    %3389 = vmatpush1.bf16.msra.mxu0 %v2625
    %3390 = vmatprep.subr.bf16.mxu0 %v2634
    %3391 = vmatpush1.bf16.msra.mxu0 %v2633
    %3392 = vmatprep.subr.bf16.mxu0 %v2642
    %3393 = vmatpush1.bf16.msra.mxu0 %v2641
    %3394 = vmatprep.subr.bf16.mxu0 %v2650
    %3395 = vmatpush1.bf16.msra.mxu0 %v2649
    %3396 = vmatprep.subr.bf16.mxu0 %v2658
    %3397 = vmatpush1.bf16.msra.mxu0 %v2657
    %3398 = vmatprep.subr.bf16.mxu0 %v2666
    %3399 = vmatpush1.bf16.msra.mxu0 %v2665
    %3400 = vmatprep.subr.bf16.mxu0 %v2674
    %3401 = vmatpush1.bf16.msra.mxu0 %v2673
    %3402 = vmatprep.subr.bf16.mxu0 %v2682
    %3403 = vmatpush1.bf16.msra.mxu0 %v2681
    %3404 = vmatprep.subr.bf16.mxu0 %v2690
    %3405 = vmatpush1.bf16.msra.mxu0 %v2689
    %3406 = vmatprep.subr.bf16.mxu0 %v2698
    %3407 = vmatpush1.bf16.msra.mxu0 %v2697
    %3408 = vmatprep.subr.bf16.mxu0 %v2706
    %3409 = vmatpush1.bf16.msra.mxu0 %v2705
    %3410 = vmatprep.subr.bf16.mxu0 %v2714
    %3411 = vmatpush1.bf16.msra.mxu0 %v2713
    %3412 = vmatprep.subr.bf16.mxu0 %v2722
    %3413 = vmatpush1.bf16.msra.mxu0 %v2721
    %3414 = vmatprep.subr.bf16.mxu0 %v2730
    %3415 = vmatpush1.bf16.msra.mxu0 %v2729
    %3416 = vmatprep.subr.bf16.mxu0 %v2738
    %3417 = vmatpush1.bf16.msra.mxu0 %v2737
    %3418 = vmatprep.subr.bf16.mxu0 %v2746
    %3419 = vmatpush1.bf16.msra.mxu0 %v2745
    %3420 = vmatprep.mubr.bf16.mxu0 %v192
    %3421 = vmatmul.mubr.bf16.gmra.mrb[0].mxu0 %v191
    %v3422 = vpop.f32.mrb[0].mxu0
    %v3423 = vadd.f32 %v3382, %v3422
    %v3424 = vpop.f32.mrb[0].mxu0
    %v3425 = vadd.f32 %v3384, %v3424
    %v3426 = vpop.f32.mrb[0].mxu0
    %v3427 = vpop.f32.mrb[0].mxu0
    %3428 = vdwg.mxu0
    %3429 = vmatprep.subr.bf16.mxu0 %v2244
    %3430 = vmatpush1.bf16.msra.mxu0 %v2243
    %3431 = vmatprep.subr.bf16.mxu0 %v2252
    %3432 = vmatpush1.bf16.msra.mxu0 %v2251
    %3433 = vmatprep.subr.bf16.mxu0 %v2260
    %3434 = vmatpush1.bf16.msra.mxu0 %v2259
    %3435 = vmatprep.subr.bf16.mxu0 %v2268
    %3436 = vmatpush1.bf16.msra.mxu0 %v2267
    %3437 = vmatprep.subr.bf16.mxu0 %v2276
    %3438 = vmatpush1.bf16.msra.mxu0 %v2275
    %3439 = vmatprep.subr.bf16.mxu0 %v2284
    %3440 = vmatpush1.bf16.msra.mxu0 %v2283
    %3441 = vmatprep.subr.bf16.mxu0 %v2292
    %3442 = vmatpush1.bf16.msra.mxu0 %v2291
    %3443 = vmatprep.subr.bf16.mxu0 %v2300
    %3444 = vmatpush1.bf16.msra.mxu0 %v2299
    %3445 = vmatprep.subr.bf16.mxu0 %v2308
    %3446 = vmatpush1.bf16.msra.mxu0 %v2307
    %3447 = vmatprep.subr.bf16.mxu0 %v2316
    %3448 = vmatpush1.bf16.msra.mxu0 %v2315
    %3449 = vmatprep.subr.bf16.mxu0 %v2324
    %3450 = vmatpush1.bf16.msra.mxu0 %v2323
    %3451 = vmatprep.subr.bf16.mxu0 %v2332
    %3452 = vmatpush1.bf16.msra.mxu0 %v2331
    %3453 = vmatprep.subr.bf16.mxu0 %v2340
    %3454 = vmatpush1.bf16.msra.mxu0 %v2339
    %3455 = vmatprep.subr.bf16.mxu0 %v2348
    %3456 = vmatpush1.bf16.msra.mxu0 %v2347
    %3457 = vmatprep.subr.bf16.mxu0 %v2356
    %3458 = vmatpush1.bf16.msra.mxu0 %v2355
    %3459 = vmatprep.subr.bf16.mxu0 %v2364
    %3460 = vmatpush1.bf16.msra.mxu0 %v2363
    %3461 = vmatprep.mubr.bf16.mxu0 %v186
    %3462 = vmatmul.mubr.bf16.gmra.mrb[0].mxu0 %v185
    %v3463 = vpop.f32.mrb[0].mxu0
    %v3464 = vadd.f32 0.0, %v3463
    %v3465 = vpop.f32.mrb[0].mxu0
    %v3466 = vadd.f32 0.0, %v3465
    %v3467 = vpop.f32.mrb[0].mxu0
    %v3468 = vpop.f32.mrb[0].mxu0
    %3469 = vdwg.mxu0
    %3470 = vmatprep.subr.bf16.mxu0 %v2372
    %3471 = vmatpush1.bf16.msra.mxu0 %v2371
    %3472 = vmatprep.subr.bf16.mxu0 %v2380
    %3473 = vmatpush1.bf16.msra.mxu0 %v2379
    %3474 = vmatprep.subr.bf16.mxu0 %v2388
    %3475 = vmatpush1.bf16.msra.mxu0 %v2387
    %3476 = vmatprep.subr.bf16.mxu0 %v2396
    %3477 = vmatpush1.bf16.msra.mxu0 %v2395
    %3478 = vmatprep.subr.bf16.mxu0 %v2404
    %3479 = vmatpush1.bf16.msra.mxu0 %v2403
    %3480 = vmatprep.subr.bf16.mxu0 %v2412
    %3481 = vmatpush1.bf16.msra.mxu0 %v2411
    %3482 = vmatprep.subr.bf16.mxu0 %v2420
    %3483 = vmatpush1.bf16.msra.mxu0 %v2419
    %3484 = vmatprep.subr.bf16.mxu0 %v2428
    %3485 = vmatpush1.bf16.msra.mxu0 %v2427
    %3486 = vmatprep.subr.bf16.mxu0 %v2436
    %3487 = vmatpush1.bf16.msra.mxu0 %v2435
    %3488 = vmatprep.subr.bf16.mxu0 %v2444
    %3489 = vmatpush1.bf16.msra.mxu0 %v2443
    %3490 = vmatprep.subr.bf16.mxu0 %v2452
    %3491 = vmatpush1.bf16.msra.mxu0 %v2451
    %3492 = vmatprep.subr.bf16.mxu0 %v2460
    %3493 = vmatpush1.bf16.msra.mxu0 %v2459
    %3494 = vmatprep.subr.bf16.mxu0 %v2468
    %3495 = vmatpush1.bf16.msra.mxu0 %v2467
    %3496 = vmatprep.subr.bf16.mxu0 %v2476
    %3497 = vmatpush1.bf16.msra.mxu0 %v2475
    %3498 = vmatprep.subr.bf16.mxu0 %v2484
    %3499 = vmatpush1.bf16.msra.mxu0 %v2483
    %3500 = vmatprep.subr.bf16.mxu0 %v2492
    %3501 = vmatpush1.bf16.msra.mxu0 %v2491
    %3502 = vmatprep.mubr.bf16.mxu0 %v188
    %3503 = vmatmul.mubr.bf16.gmra.mrb[0].mxu0 %v187
    %v3504 = vpop.f32.mrb[0].mxu0
    %v3505 = vadd.f32 %v3464, %v3504
    %v3506 = vpop.f32.mrb[0].mxu0
    %v3507 = vadd.f32 %v3466, %v3506
    %v3508 = vpop.f32.mrb[0].mxu0
    %v3509 = vpop.f32.mrb[0].mxu0
    %3510 = vdwg.mxu0
    %3511 = vmatprep.subr.bf16.mxu0 %v2500
    %3512 = vmatpush1.bf16.msra.mxu0 %v2499
    %3513 = vmatprep.subr.bf16.mxu0 %v2508
    %3514 = vmatpush1.bf16.msra.mxu0 %v2507
    %3515 = vmatprep.subr.bf16.mxu0 %v2516
    %3516 = vmatpush1.bf16.msra.mxu0 %v2515
    %3517 = vmatprep.subr.bf16.mxu0 %v2524
    %3518 = vmatpush1.bf16.msra.mxu0 %v2523
    %3519 = vmatprep.subr.bf16.mxu0 %v2532
    %3520 = vmatpush1.bf16.msra.mxu0 %v2531
    %3521 = vmatprep.subr.bf16.mxu0 %v2540
    %3522 = vmatpush1.bf16.msra.mxu0 %v2539
    %3523 = vmatprep.subr.bf16.mxu0 %v2548
    %3524 = vmatpush1.bf16.msra.mxu0 %v2547
    %3525 = vmatprep.subr.bf16.mxu0 %v2556
    %3526 = vmatpush1.bf16.msra.mxu0 %v2555
    %3527 = vmatprep.subr.bf16.mxu0 %v2564
    %3528 = vmatpush1.bf16.msra.mxu0 %v2563
    %3529 = vmatprep.subr.bf16.mxu0 %v2572
    %3530 = vmatpush1.bf16.msra.mxu0 %v2571
    %3531 = vmatprep.subr.bf16.mxu0 %v2580
    %3532 = vmatpush1.bf16.msra.mxu0 %v2579
    %3533 = vmatprep.subr.bf16.mxu0 %v2588
    %3534 = vmatpush1.bf16.msra.mxu0 %v2587
    %3535 = vmatprep.subr.bf16.mxu0 %v2596
    %3536 = vmatpush1.bf16.msra.mxu0 %v2595
    %3537 = vmatprep.subr.bf16.mxu0 %v2604
    %3538 = vmatpush1.bf16.msra.mxu0 %v2603
    %3539 = vmatprep.subr.bf16.mxu0 %v2612
    %3540 = vmatpush1.bf16.msra.mxu0 %v2611
    %3541 = vmatprep.subr.bf16.mxu0 %v2620
    %3542 = vmatpush1.bf16.msra.mxu0 %v2619
    %3543 = vmatprep.mubr.bf16.mxu0 %v190
    %3544 = vmatmul.mubr.bf16.gmra.mrb[0].mxu0 %v189
    %v3545 = vpop.f32.mrb[0].mxu0
    %v3546 = vadd.f32 %v3505, %v3545
    %v3547 = vpop.f32.mrb[0].mxu0
    %v3548 = vadd.f32 %v3507, %v3547
    %v3549 = vpop.f32.mrb[0].mxu0
    %v3550 = vpop.f32.mrb[0].mxu0
    %3551 = vdwg.mxu0
    %3552 = vmatprep.subr.bf16.mxu0 %v2628
    %3553 = vmatpush1.bf16.msra.mxu0 %v2627
    %3554 = vmatprep.subr.bf16.mxu0 %v2636
    %3555 = vmatpush1.bf16.msra.mxu0 %v2635
    %3556 = vmatprep.subr.bf16.mxu0 %v2644
    %3557 = vmatpush1.bf16.msra.mxu0 %v2643
    %3558 = vmatprep.subr.bf16.mxu0 %v2652
    %3559 = vmatpush1.bf16.msra.mxu0 %v2651
    %3560 = vmatprep.subr.bf16.mxu0 %v2660
    %3561 = vmatpush1.bf16.msra.mxu0 %v2659
    %3562 = vmatprep.subr.bf16.mxu0 %v2668
    %3563 = vmatpush1.bf16.msra.mxu0 %v2667
    %3564 = vmatprep.subr.bf16.mxu0 %v2676
    %3565 = vmatpush1.bf16.msra.mxu0 %v2675
    %3566 = vmatprep.subr.bf16.mxu0 %v2684
    %3567 = vmatpush1.bf16.msra.mxu0 %v2683
    %3568 = vmatprep.subr.bf16.mxu0 %v2692
    %3569 = vmatpush1.bf16.msra.mxu0 %v2691
    %3570 = vmatprep.subr.bf16.mxu0 %v2700
    %3571 = vmatpush1.bf16.msra.mxu0 %v2699
    %3572 = vmatprep.subr.bf16.mxu0 %v2708
    %3573 = vmatpush1.bf16.msra.mxu0 %v2707
    %3574 = vmatprep.subr.bf16.mxu0 %v2716
    %3575 = vmatpush1.bf16.msra.mxu0 %v2715
    %3576 = vmatprep.subr.bf16.mxu0 %v2724
    %3577 = vmatpush1.bf16.msra.mxu0 %v2723
    %3578 = vmatprep.subr.bf16.mxu0 %v2732
    %3579 = vmatpush1.bf16.msra.mxu0 %v2731
    %3580 = vmatprep.subr.bf16.mxu0 %v2740
    %3581 = vmatpush1.bf16.msra.mxu0 %v2739
    %3582 = vmatprep.subr.bf16.mxu0 %v2748
    %3583 = vmatpush1.bf16.msra.mxu0 %v2747
    %3584 = vmatprep.mubr.bf16.mxu0 %v192
    %3585 = vmatmul.mubr.bf16.gmra.mrb[0].mxu0 %v191
    %v3586 = vpop.f32.mrb[0].mxu0
    %v3587 = vadd.f32 %v3546, %v3586
    %v3588 = vpop.f32.mrb[0].mxu0
    %v3589 = vadd.f32 %v3548, %v3588
    %v3590 = vpop.f32.mrb[0].mxu0
    %v3591 = vpop.f32.mrb[0].mxu0
    %3592 = vdwg.mxu0
    %3593 = vmatprep.subr.bf16.mxu0 %v2246
    %3594 = vmatpush1.bf16.msra.mxu0 %v2245
    %3595 = vmatprep.subr.bf16.mxu0 %v2254
    %3596 = vmatpush1.bf16.msra.mxu0 %v2253
    %3597 = vmatprep.subr.bf16.mxu0 %v2262
    %3598 = vmatpush1.bf16.msra.mxu0 %v2261
    %3599 = vmatprep.subr.bf16.mxu0 %v2270
    %3600 = vmatpush1.bf16.msra.mxu0 %v2269
    %3601 = vmatprep.subr.bf16.mxu0 %v2278
    %3602 = vmatpush1.bf16.msra.mxu0 %v2277
    %3603 = vmatprep.subr.bf16.mxu0 %v2286
    %3604 = vmatpush1.bf16.msra.mxu0 %v2285
    %3605 = vmatprep.subr.bf16.mxu0 %v2294
    %3606 = vmatpush1.bf16.msra.mxu0 %v2293
    %3607 = vmatprep.subr.bf16.mxu0 %v2302
    %3608 = vmatpush1.bf16.msra.mxu0 %v2301
    %3609 = vmatprep.subr.bf16.mxu0 %v2310
    %3610 = vmatpush1.bf16.msra.mxu0 %v2309
    %3611 = vmatprep.subr.bf16.mxu0 %v2318
    %3612 = vmatpush1.bf16.msra.mxu0 %v2317
    %3613 = vmatprep.subr.bf16.mxu0 %v2326
    %3614 = vmatpush1.bf16.msra.mxu0 %v2325
    %3615 = vmatprep.subr.bf16.mxu0 %v2334
    %3616 = vmatpush1.bf16.msra.mxu0 %v2333
    %3617 = vmatprep.subr.bf16.mxu0 %v2342
    %3618 = vmatpush1.bf16.msra.mxu0 %v2341
    %3619 = vmatprep.subr.bf16.mxu0 %v2350
    %3620 = vmatpush1.bf16.msra.mxu0 %v2349
    %3621 = vmatprep.subr.bf16.mxu0 %v2358
    %3622 = vmatpush1.bf16.msra.mxu0 %v2357
    %3623 = vmatprep.subr.bf16.mxu0 %v2366
    %3624 = vmatpush1.bf16.msra.mxu0 %v2365
    %3625 = vmatprep.mubr.bf16.mxu0 %v186
    %3626 = vmatmul.mubr.bf16.gmra.mrb[0].mxu0 %v185
    %v3627 = vpop.f32.mrb[0].mxu0
    %v3628 = vadd.f32 0.0, %v3627
    %v3629 = vpop.f32.mrb[0].mxu0
    %v3630 = vadd.f32 0.0, %v3629
    %v3631 = vpop.f32.mrb[0].mxu0
    %v3632 = vpop.f32.mrb[0].mxu0
    %3633 = vdwg.mxu0
    %3634 = vmatprep.subr.bf16.mxu0 %v2374
    %3635 = vmatpush1.bf16.msra.mxu0 %v2373
    %3636 = vmatprep.subr.bf16.mxu0 %v2382
    %3637 = vmatpush1.bf16.msra.mxu0 %v2381
    %3638 = vmatprep.subr.bf16.mxu0 %v2390
    %3639 = vmatpush1.bf16.msra.mxu0 %v2389
    %3640 = vmatprep.subr.bf16.mxu0 %v2398
    %3641 = vmatpush1.bf16.msra.mxu0 %v2397
    %3642 = vmatprep.subr.bf16.mxu0 %v2406
    %3643 = vmatpush1.bf16.msra.mxu0 %v2405
    %3644 = vmatprep.subr.bf16.mxu0 %v2414
    %3645 = vmatpush1.bf16.msra.mxu0 %v2413
    %3646 = vmatprep.subr.bf16.mxu0 %v2422
    %3647 = vmatpush1.bf16.msra.mxu0 %v2421
    %3648 = vmatprep.subr.bf16.mxu0 %v2430
    %3649 = vmatpush1.bf16.msra.mxu0 %v2429
    %3650 = vmatprep.subr.bf16.mxu0 %v2438
    %3651 = vmatpush1.bf16.msra.mxu0 %v2437
    %3652 = vmatprep.subr.bf16.mxu0 %v2446
    %3653 = vmatpush1.bf16.msra.mxu0 %v2445
    %3654 = vmatprep.subr.bf16.mxu0 %v2454
    %3655 = vmatpush1.bf16.msra.mxu0 %v2453
    %3656 = vmatprep.subr.bf16.mxu0 %v2462
    %3657 = vmatpush1.bf16.msra.mxu0 %v2461
    %3658 = vmatprep.subr.bf16.mxu0 %v2470
    %3659 = vmatpush1.bf16.msra.mxu0 %v2469
    %3660 = vmatprep.subr.bf16.mxu0 %v2478
    %3661 = vmatpush1.bf16.msra.mxu0 %v2477
    %3662 = vmatprep.subr.bf16.mxu0 %v2486
    %3663 = vmatpush1.bf16.msra.mxu0 %v2485
    %3664 = vmatprep.subr.bf16.mxu0 %v2494
    %3665 = vmatpush1.bf16.msra.mxu0 %v2493
    %3666 = vmatprep.mubr.bf16.mxu0 %v188
    %3667 = vmatmul.mubr.bf16.gmra.mrb[0].mxu0 %v187
    %v3668 = vpop.f32.mrb[0].mxu0
    %v3669 = vadd.f32 %v3628, %v3668
    %v3670 = vpop.f32.mrb[0].mxu0
    %v3671 = vadd.f32 %v3630, %v3670
    %v3672 = vpop.f32.mrb[0].mxu0
    %v3673 = vpop.f32.mrb[0].mxu0
    %3674 = vdwg.mxu0
    %3675 = vmatprep.subr.bf16.mxu0 %v2502
    %3676 = vmatpush1.bf16.msra.mxu0 %v2501
    %3677 = vmatprep.subr.bf16.mxu0 %v2510
    %3678 = vmatpush1.bf16.msra.mxu0 %v2509
    %3679 = vmatprep.subr.bf16.mxu0 %v2518
    %3680 = vmatpush1.bf16.msra.mxu0 %v2517
    %3681 = vmatprep.subr.bf16.mxu0 %v2526
    %3682 = vmatpush1.bf16.msra.mxu0 %v2525
    %3683 = vmatprep.subr.bf16.mxu0 %v2534
    %3684 = vmatpush1.bf16.msra.mxu0 %v2533
    %3685 = vmatprep.subr.bf16.mxu0 %v2542
    %3686 = vmatpush1.bf16.msra.mxu0 %v2541
    %3687 = vmatprep.subr.bf16.mxu0 %v2550
    %3688 = vmatpush1.bf16.msra.mxu0 %v2549
    %3689 = vmatprep.subr.bf16.mxu0 %v2558
    %3690 = vmatpush1.bf16.msra.mxu0 %v2557
    %3691 = vmatprep.subr.bf16.mxu0 %v2566
    %3692 = vmatpush1.bf16.msra.mxu0 %v2565
    %3693 = vmatprep.subr.bf16.mxu0 %v2574
    %3694 = vmatpush1.bf16.msra.mxu0 %v2573
    %3695 = vmatprep.subr.bf16.mxu0 %v2582
    %3696 = vmatpush1.bf16.msra.mxu0 %v2581
    %3697 = vmatprep.subr.bf16.mxu0 %v2590
    %3698 = vmatpush1.bf16.msra.mxu0 %v2589
    %3699 = vmatprep.subr.bf16.mxu0 %v2598
    %3700 = vmatpush1.bf16.msra.mxu0 %v2597
    %3701 = vmatprep.subr.bf16.mxu0 %v2606
    %3702 = vmatpush1.bf16.msra.mxu0 %v2605
    %3703 = vmatprep.subr.bf16.mxu0 %v2614
    %3704 = vmatpush1.bf16.msra.mxu0 %v2613
    %3705 = vmatprep.subr.bf16.mxu0 %v2622
    %3706 = vmatpush1.bf16.msra.mxu0 %v2621
    %3707 = vmatprep.mubr.bf16.mxu0 %v190
    %3708 = vmatmul.mubr.bf16.gmra.mrb[0].mxu0 %v189
    %v3709 = vpop.f32.mrb[0].mxu0
    %v3710 = vadd.f32 %v3669, %v3709
    %v3711 = vpop.f32.mrb[0].mxu0
    %v3712 = vadd.f32 %v3671, %v3711
    %v3713 = vpop.f32.mrb[0].mxu0
    %v3714 = vpop.f32.mrb[0].mxu0
    %3715 = vdwg.mxu0
    %3716 = vmatprep.subr.bf16.mxu0 %v2630
    %3717 = vmatpush1.bf16.msra.mxu0 %v2629
    %3718 = vmatprep.subr.bf16.mxu0 %v2638
    %3719 = vmatpush1.bf16.msra.mxu0 %v2637
    %3720 = vmatprep.subr.bf16.mxu0 %v2646
    %3721 = vmatpush1.bf16.msra.mxu0 %v2645
    %3722 = vmatprep.subr.bf16.mxu0 %v2654
    %3723 = vmatpush1.bf16.msra.mxu0 %v2653
    %3724 = vmatprep.subr.bf16.mxu0 %v2662
    %3725 = vmatpush1.bf16.msra.mxu0 %v2661
    %3726 = vmatprep.subr.bf16.mxu0 %v2670
    %3727 = vmatpush1.bf16.msra.mxu0 %v2669
    %3728 = vmatprep.subr.bf16.mxu0 %v2678
    %3729 = vmatpush1.bf16.msra.mxu0 %v2677
    %3730 = vmatprep.subr.bf16.mxu0 %v2686
    %3731 = vmatpush1.bf16.msra.mxu0 %v2685
    %3732 = vmatprep.subr.bf16.mxu0 %v2694
    %3733 = vmatpush1.bf16.msra.mxu0 %v2693
    %3734 = vmatprep.subr.bf16.mxu0 %v2702
    %3735 = vmatpush1.bf16.msra.mxu0 %v2701
    %3736 = vmatprep.subr.bf16.mxu0 %v2710
    %3737 = vmatpush1.bf16.msra.mxu0 %v2709
    %3738 = vmatprep.subr.bf16.mxu0 %v2718
    %3739 = vmatpush1.bf16.msra.mxu0 %v2717
    %3740 = vmatprep.subr.bf16.mxu0 %v2726
    %3741 = vmatpush1.bf16.msra.mxu0 %v2725
    %3742 = vmatprep.subr.bf16.mxu0 %v2734
    %3743 = vmatpush1.bf16.msra.mxu0 %v2733
    %3744 = vmatprep.subr.bf16.mxu0 %v2742
    %3745 = vmatpush1.bf16.msra.mxu0 %v2741
    %3746 = vmatprep.subr.bf16.mxu0 %v2750
    %3747 = vmatpush1.bf16.msra.mxu0 %v2749
    %3748 = vmatprep.mubr.bf16.mxu0 %v192
    %3749 = vmatmul.mubr.bf16.gmra.mrb[0].mxu0 %v191
    %v3750 = vpop.f32.mrb[0].mxu0
    %v3751 = vadd.f32 %v3710, %v3750
    %v3752 = vpop.f32.mrb[0].mxu0
    %v3753 = vadd.f32 %v3712, %v3752
    %v3754 = vpop.f32.mrb[0].mxu0
    %v3755 = vpop.f32.mrb[0].mxu0
    %3756 = vdwg.mxu0
    %3757 = vmatprep.subr.bf16.mxu0 %v2248
    %3758 = vmatpush1.bf16.msra.mxu0 %v2247
    %3759 = vmatprep.subr.bf16.mxu0 %v2256
    %3760 = vmatpush1.bf16.msra.mxu0 %v2255
    %3761 = vmatprep.subr.bf16.mxu0 %v2264
    %3762 = vmatpush1.bf16.msra.mxu0 %v2263
    %3763 = vmatprep.subr.bf16.mxu0 %v2272
    %3764 = vmatpush1.bf16.msra.mxu0 %v2271
    %3765 = vmatprep.subr.bf16.mxu0 %v2280
    %3766 = vmatpush1.bf16.msra.mxu0 %v2279
    %3767 = vmatprep.subr.bf16.mxu0 %v2288
    %3768 = vmatpush1.bf16.msra.mxu0 %v2287
    %3769 = vmatprep.subr.bf16.mxu0 %v2296
    %3770 = vmatpush1.bf16.msra.mxu0 %v2295
    %3771 = vmatprep.subr.bf16.mxu0 %v2304
    %3772 = vmatpush1.bf16.msra.mxu0 %v2303
    %3773 = vmatprep.subr.bf16.mxu0 %v2312
    %3774 = vmatpush1.bf16.msra.mxu0 %v2311
    %3775 = vmatprep.subr.bf16.mxu0 %v2320
    %3776 = vmatpush1.bf16.msra.mxu0 %v2319
    %3777 = vmatprep.subr.bf16.mxu0 %v2328
    %3778 = vmatpush1.bf16.msra.mxu0 %v2327
    %3779 = vmatprep.subr.bf16.mxu0 %v2336
    %3780 = vmatpush1.bf16.msra.mxu0 %v2335
    %3781 = vmatprep.subr.bf16.mxu0 %v2344
    %3782 = vmatpush1.bf16.msra.mxu0 %v2343
    %3783 = vmatprep.subr.bf16.mxu0 %v2352
    %3784 = vmatpush1.bf16.msra.mxu0 %v2351
    %3785 = vmatprep.subr.bf16.mxu0 %v2360
    %3786 = vmatpush1.bf16.msra.mxu0 %v2359
    %3787 = vmatprep.subr.bf16.mxu0 %v2368
    %3788 = vmatpush1.bf16.msra.mxu0 %v2367
    %3789 = vmatprep.mubr.bf16.mxu0 %v186
    %3790 = vmatmul.mubr.bf16.gmra.mrb[0].mxu0 %v185
    %v3791 = vpop.f32.mrb[0].mxu0
    %v3792 = vadd.f32 0.0, %v3791
    %v3793 = vpop.f32.mrb[0].mxu0
    %v3794 = vadd.f32 0.0, %v3793
    %v3795 = vpop.f32.mrb[0].mxu0
    %v3796 = vpop.f32.mrb[0].mxu0
    %3797 = vdwg.mxu0
    %3798 = vmatprep.subr.bf16.mxu0 %v2376
    %3799 = vmatpush1.bf16.msra.mxu0 %v2375
    %3800 = vmatprep.subr.bf16.mxu0 %v2384
    %3801 = vmatpush1.bf16.msra.mxu0 %v2383
    %3802 = vmatprep.subr.bf16.mxu0 %v2392
    %3803 = vmatpush1.bf16.msra.mxu0 %v2391
    %3804 = vmatprep.subr.bf16.mxu0 %v2400
    %3805 = vmatpush1.bf16.msra.mxu0 %v2399
    %3806 = vmatprep.subr.bf16.mxu0 %v2408
    %3807 = vmatpush1.bf16.msra.mxu0 %v2407
    %3808 = vmatprep.subr.bf16.mxu0 %v2416
    %3809 = vmatpush1.bf16.msra.mxu0 %v2415
    %3810 = vmatprep.subr.bf16.mxu0 %v2424
    %3811 = vmatpush1.bf16.msra.mxu0 %v2423
    %3812 = vmatprep.subr.bf16.mxu0 %v2432
    %3813 = vmatpush1.bf16.msra.mxu0 %v2431
    %3814 = vmatprep.subr.bf16.mxu0 %v2440
    %3815 = vmatpush1.bf16.msra.mxu0 %v2439
    %3816 = vmatprep.subr.bf16.mxu0 %v2448
    %3817 = vmatpush1.bf16.msra.mxu0 %v2447
    %3818 = vmatprep.subr.bf16.mxu0 %v2456
    %3819 = vmatpush1.bf16.msra.mxu0 %v2455
    %3820 = vmatprep.subr.bf16.mxu0 %v2464
    %3821 = vmatpush1.bf16.msra.mxu0 %v2463
    %3822 = vmatprep.subr.bf16.mxu0 %v2472
    %3823 = vmatpush1.bf16.msra.mxu0 %v2471
    %3824 = vmatprep.subr.bf16.mxu0 %v2480
    %3825 = vmatpush1.bf16.msra.mxu0 %v2479
    %3826 = vmatprep.subr.bf16.mxu0 %v2488
    %3827 = vmatpush1.bf16.msra.mxu0 %v2487
    %3828 = vmatprep.subr.bf16.mxu0 %v2496
    %3829 = vmatpush1.bf16.msra.mxu0 %v2495
    %3830 = vmatprep.mubr.bf16.mxu0 %v188
    %3831 = vmatmul.mubr.bf16.gmra.mrb[0].mxu0 %v187
    %v3832 = vpop.f32.mrb[0].mxu0
    %v3833 = vadd.f32 %v3792, %v3832
    %v3834 = vpop.f32.mrb[0].mxu0
    %v3835 = vadd.f32 %v3794, %v3834
    %v3836 = vpop.f32.mrb[0].mxu0
    %v3837 = vpop.f32.mrb[0].mxu0
    %3838 = vdwg.mxu0
    %3839 = vmatprep.subr.bf16.mxu0 %v2504
    %3840 = vmatpush1.bf16.msra.mxu0 %v2503
    %3841 = vmatprep.subr.bf16.mxu0 %v2512
    %3842 = vmatpush1.bf16.msra.mxu0 %v2511
    %3843 = vmatprep.subr.bf16.mxu0 %v2520
    %3844 = vmatpush1.bf16.msra.mxu0 %v2519
    %3845 = vmatprep.subr.bf16.mxu0 %v2528
    %3846 = vmatpush1.bf16.msra.mxu0 %v2527
    %3847 = vmatprep.subr.bf16.mxu0 %v2536
    %3848 = vmatpush1.bf16.msra.mxu0 %v2535
    %3849 = vmatprep.subr.bf16.mxu0 %v2544
    %3850 = vmatpush1.bf16.msra.mxu0 %v2543
    %3851 = vmatprep.subr.bf16.mxu0 %v2552
    %3852 = vmatpush1.bf16.msra.mxu0 %v2551
    %3853 = vmatprep.subr.bf16.mxu0 %v2560
    %3854 = vmatpush1.bf16.msra.mxu0 %v2559
    %3855 = vmatprep.subr.bf16.mxu0 %v2568
    %3856 = vmatpush1.bf16.msra.mxu0 %v2567
    %3857 = vmatprep.subr.bf16.mxu0 %v2576
    %3858 = vmatpush1.bf16.msra.mxu0 %v2575
    %3859 = vmatprep.subr.bf16.mxu0 %v2584
    %3860 = vmatpush1.bf16.msra.mxu0 %v2583
    %3861 = vmatprep.subr.bf16.mxu0 %v2592
    %3862 = vmatpush1.bf16.msra.mxu0 %v2591
    %3863 = vmatprep.subr.bf16.mxu0 %v2600
    %3864 = vmatpush1.bf16.msra.mxu0 %v2599
    %3865 = vmatprep.subr.bf16.mxu0 %v2608
    %3866 = vmatpush1.bf16.msra.mxu0 %v2607
    %3867 = vmatprep.subr.bf16.mxu0 %v2616
    %3868 = vmatpush1.bf16.msra.mxu0 %v2615
    %3869 = vmatprep.subr.bf16.mxu0 %v2624
    %3870 = vmatpush1.bf16.msra.mxu0 %v2623
    %3871 = vmatprep.mubr.bf16.mxu0 %v190
    %3872 = vmatmul.mubr.bf16.gmra.mrb[0].mxu0 %v189
    %v3873 = vpop.f32.mrb[0].mxu0
    %v3874 = vadd.f32 %v3833, %v3873
    %v3875 = vpop.f32.mrb[0].mxu0
    %v3876 = vadd.f32 %v3835, %v3875
    %v3877 = vpop.f32.mrb[0].mxu0
    %v3878 = vpop.f32.mrb[0].mxu0
    %3879 = vdwg.mxu0
    %3880 = vmatprep.subr.bf16.mxu0 %v2632
    %3881 = vmatpush1.bf16.msra.mxu0 %v2631
    %3882 = vmatprep.subr.bf16.mxu0 %v2640
    %3883 = vmatpush1.bf16.msra.mxu0 %v2639
    %3884 = vmatprep.subr.bf16.mxu0 %v2648
    %3885 = vmatpush1.bf16.msra.mxu0 %v2647
    %3886 = vmatprep.subr.bf16.mxu0 %v2656
    %3887 = vmatpush1.bf16.msra.mxu0 %v2655
    %3888 = vmatprep.subr.bf16.mxu0 %v2664
    %3889 = vmatpush1.bf16.msra.mxu0 %v2663
    %3890 = vmatprep.subr.bf16.mxu0 %v2672
    %3891 = vmatpush1.bf16.msra.mxu0 %v2671
    %3892 = vmatprep.subr.bf16.mxu0 %v2680
    %3893 = vmatpush1.bf16.msra.mxu0 %v2679
    %3894 = vmatprep.subr.bf16.mxu0 %v2688
    %3895 = vmatpush1.bf16.msra.mxu0 %v2687
    %3896 = vmatprep.subr.bf16.mxu0 %v2696
    %3897 = vmatpush1.bf16.msra.mxu0 %v2695
    %3898 = vmatprep.subr.bf16.mxu0 %v2704
    %3899 = vmatpush1.bf16.msra.mxu0 %v2703
    %3900 = vmatprep.subr.bf16.mxu0 %v2712
    %3901 = vmatpush1.bf16.msra.mxu0 %v2711
    %3902 = vmatprep.subr.bf16.mxu0 %v2720
    %3903 = vmatpush1.bf16.msra.mxu0 %v2719
    %3904 = vmatprep.subr.bf16.mxu0 %v2728
    %3905 = vmatpush1.bf16.msra.mxu0 %v2727
    %3906 = vmatprep.subr.bf16.mxu0 %v2736
    %3907 = vmatpush1.bf16.msra.mxu0 %v2735
    %3908 = vmatprep.subr.bf16.mxu0 %v2744
    %3909 = vmatpush1.bf16.msra.mxu0 %v2743
    %3910 = vmatprep.subr.bf16.mxu0 %v2752
    %3911 = vmatpush1.bf16.msra.mxu0 %v2751
    %3912 = vmatprep.mubr.bf16.mxu0 %v192
    %3913 = vmatmul.mubr.bf16.gmra.mrb[0].mxu0 %v191
    %v3914 = vpop.f32.mrb[0].mxu0
    %v3915 = vadd.f32 %v3874, %v3914
    %v3916 = vpop.f32.mrb[0].mxu0
    %v3917 = vadd.f32 %v3876, %v3916
    %v3918 = vpop.f32.mrb[0].mxu0
    %v3919 = vpop.f32.mrb[0].mxu0
    %3920 = vdwg.mxu0
    %v3921 = vpack.c.bf16 %v3423, %v3423
    %v3922 = vpack.c.bf16 %v3425, %v3425
    %v3923 = vpack.c.bf16 %v3587, %v3587
    %v3924 = vpack.c.bf16 %v3589, %v3589
    %v3925 = vpack.c.bf16 %v3751, %v3751
    %v3926 = vpack.c.bf16 %v3753, %v3753
    %v3927 = vpack.c.bf16 %v3915, %v3915
    %v3928 = vpack.c.bf16 %v3917, %v3917
    %v3929 = vld [vmem:[#allocation7] sm:$0xff]
    %v3931 = vlaneseq
    %v3932 = vshrl.u32 %v3931, 7
    %v3933 = vsub.s32 0, %v3932
    %v3934 = vrot.slane %v3929, %v3933
    %v3935 = vlaneseq
    %v3936 = vshrl.u32 %v3935, 7
    %v3937 = vsub.s32 1, %v3936
    %v3938 = vrot.slane %v3929, %v3937
    %v3939 = vlaneseq
    %v3940 = vshrl.u32 %v3939, 7
    %v3941 = vsub.s32 2, %v3940
    %v3942 = vrot.slane %v3929, %v3941
    %v3943 = vlaneseq
    %v3944 = vshrl.u32 %v3943, 7
    %v3945 = vsub.s32 3, %v3944
    %v3946 = vrot.slane %v3929, %v3945
    %v3947 = vlaneseq
    %v3948 = vshrl.u32 %v3947, 7
    %v3949 = vsub.s32 4, %v3948
    %v3950 = vrot.slane %v3929, %v3949
    %v3951 = vlaneseq
    %v3952 = vshrl.u32 %v3951, 7
    %v3953 = vsub.s32 5, %v3952
    %v3954 = vrot.slane %v3929, %v3953
    %v3955 = vlaneseq
    %v3956 = vshrl.u32 %v3955, 7
    %v3957 = vsub.s32 6, %v3956
    %v3958 = vrot.slane %v3929, %v3957
    %v3959 = vlaneseq
    %v3960 = vshrl.u32 %v3959, 7
    %v3961 = vsub.s32 7, %v3960
    %v3962 = vrot.slane %v3929, %v3961
    %v3971 = vpack.c.bf16 %v3934, %v3934
    %v3972 = vpack.c.bf16 %v3938, %v3938
    %v3973 = vpack.c.bf16 %v3942, %v3942
    %v3974 = vpack.c.bf16 %v3946, %v3946
    %v3975 = vpack.c.bf16 %v3950, %v3950
    %v3976 = vpack.c.bf16 %v3954, %v3954
    %v3977 = vpack.c.bf16 %v3958, %v3958
    %v3978 = vpack.c.bf16 %v3962, %v3962
    %v3980 = vpack.i.b16 %v3971, %v3971
    %v3982 = vlaneseq
    %v3983 = vshrl.u32 %v3982, 7
    %v3984 = vsub.s32 0, %v3983
    %v3985 = vrot.slane %v3980, %v3984
    %v3987 = vpack.i.b16 %v3972, %v3972
    %v3989 = vlaneseq
    %v3990 = vshrl.u32 %v3989, 7
    %v3991 = vsub.s32 0, %v3990
    %v3992 = vrot.slane %v3987, %v3991
    %v3994 = vpack.i.b16 %v3973, %v3973
    %v3996 = vlaneseq
    %v3997 = vshrl.u32 %v3996, 7
    %v3998 = vsub.s32 0, %v3997
    %v3999 = vrot.slane %v3994, %v3998
    %v4001 = vpack.i.b16 %v3974, %v3974
    %v4003 = vlaneseq
    %v4004 = vshrl.u32 %v4003, 7
    %v4005 = vsub.s32 0, %v4004
    %v4006 = vrot.slane %v4001, %v4005
    %v4008 = vpack.i.b16 %v3975, %v3975
    %v4010 = vlaneseq
    %v4011 = vshrl.u32 %v4010, 7
    %v4012 = vsub.s32 0, %v4011
    %v4013 = vrot.slane %v4008, %v4012
    %v4015 = vpack.i.b16 %v3976, %v3976
    %v4017 = vlaneseq
    %v4018 = vshrl.u32 %v4017, 7
    %v4019 = vsub.s32 0, %v4018
    %v4020 = vrot.slane %v4015, %v4019
    %v4022 = vpack.i.b16 %v3977, %v3977
    %v4024 = vlaneseq
    %v4025 = vshrl.u32 %v4024, 7
    %v4026 = vsub.s32 0, %v4025
    %v4027 = vrot.slane %v4022, %v4026
    %v4029 = vpack.i.b16 %v3978, %v3978
    %v4031 = vlaneseq
    %v4032 = vshrl.u32 %v4031, 7
    %v4033 = vsub.s32 0, %v4032
    %v4034 = vrot.slane %v4029, %v4033
    %v4035 = vadd.bf16 %v3921, %v3985
    %v4036 = vadd.bf16 %v3922, %v3992
    %v4037 = vadd.bf16 %v3923, %v3999
    %v4038 = vadd.bf16 %v3924, %v4006
    %v4039 = vadd.bf16 %v3925, %v4013
    %v4040 = vadd.bf16 %v3926, %v4020
    %v4041 = vadd.bf16 %v3927, %v4027
    %v4042 = vadd.bf16 %v3928, %v4034
    %v4043 = vmax.bf16 %v4035, 0
    %v4044 = vmax.bf16 %v4036, 0
    %v4045 = vmax.bf16 %v4037, 0
    %v4046 = vmax.bf16 %v4038, 0
    %v4047 = vmax.bf16 %v4039, 0
    %v4048 = vmax.bf16 %v4040, 0
    %v4049 = vmax.bf16 %v4041, 0
    %v4050 = vmax.bf16 %v4042, 0
    %v4051 = vld [vmem:[#allocation8] sm:$0xff]
    %v4052 = vld [vmem:[#allocation8 + $0x8] sm:$0xff]
    %v4053 = vld [vmem:[#allocation8 + $0x10] sm:$0xff]
    %v4054 = vld [vmem:[#allocation8 + $0x18] sm:$0xff]
    %v4055 = vld [vmem:[#allocation8 + $0x20] sm:$0xff]
    %v4056 = vld [vmem:[#allocation8 + $0x28] sm:$0xff]
    %v4057 = vld [vmem:[#allocation8 + $0x30] sm:$0xff]
    %v4058 = vld [vmem:[#allocation8 + $0x38] sm:$0xff]
    %v4059 = vld [vmem:[#allocation8 + $0x40] sm:$0xff]
    %v4060 = vld [vmem:[#allocation8 + $0x48] sm:$0xff]
    %v4061 = vld [vmem:[#allocation8 + $0x50] sm:$0xff]
    %v4062 = vld [vmem:[#allocation8 + $0x58] sm:$0xff]
    %v4063 = vld [vmem:[#allocation8 + $0x60] sm:$0xff]
    %v4064 = vld [vmem:[#allocation8 + $0x68] sm:$0xff]
    %v4065 = vld [vmem:[#allocation8 + $0x70] sm:$0xff]
    %v4066 = vld [vmem:[#allocation8 + $0x78] sm:$0xff]
    %v4067 = vld [vmem:[#allocation8 + $0x80] sm:$0xff]
    %v4068 = vld [vmem:[#allocation8 + $0x88] sm:$0xff]
    %v4069 = vld [vmem:[#allocation8 + $0x90] sm:$0xff]
    %v4070 = vld [vmem:[#allocation8 + $0x98] sm:$0xff]
    %v4071 = vld [vmem:[#allocation8 + $0xa0] sm:$0xff]
    %v4072 = vld [vmem:[#allocation8 + $0xa8] sm:$0xff]
    %v4073 = vld [vmem:[#allocation8 + $0xb0] sm:$0xff]
    %v4074 = vld [vmem:[#allocation8 + $0xb8] sm:$0xff]
    %v4075 = vld [vmem:[#allocation8 + $0xc0] sm:$0xff]
    %v4076 = vld [vmem:[#allocation8 + $0xc8] sm:$0xff]
    %v4077 = vld [vmem:[#allocation8 + $0xd0] sm:$0xff]
    %v4078 = vld [vmem:[#allocation8 + $0xd8] sm:$0xff]
    %v4079 = vld [vmem:[#allocation8 + $0xe0] sm:$0xff]
    %v4080 = vld [vmem:[#allocation8 + $0xe8] sm:$0xff]
    %v4081 = vld [vmem:[#allocation8 + $0xf0] sm:$0xff]
    %v4082 = vld [vmem:[#allocation8 + $0xf8] sm:$0xff]
    %v4083 = vld [vmem:[#allocation8 + $0x100] sm:$0xff]
    %v4084 = vld [vmem:[#allocation8 + $0x108] sm:$0xff]
    %v4085 = vld [vmem:[#allocation8 + $0x110] sm:$0xff]
    %v4086 = vld [vmem:[#allocation8 + $0x118] sm:$0xff]
    %v4087 = vld [vmem:[#allocation8 + $0x120] sm:$0xff]
    %v4088 = vld [vmem:[#allocation8 + $0x128] sm:$0xff]
    %v4089 = vld [vmem:[#allocation8 + $0x130] sm:$0xff]
    %v4090 = vld [vmem:[#allocation8 + $0x138] sm:$0xff]
    %v4091 = vld [vmem:[#allocation8 + $0x140] sm:$0xff]
    %v4092 = vld [vmem:[#allocation8 + $0x148] sm:$0xff]
    %v4093 = vld [vmem:[#allocation8 + $0x150] sm:$0xff]
    %v4094 = vld [vmem:[#allocation8 + $0x158] sm:$0xff]
    %v4095 = vld [vmem:[#allocation8 + $0x160] sm:$0xff]
    %v4096 = vld [vmem:[#allocation8 + $0x168] sm:$0xff]
    %v4097 = vld [vmem:[#allocation8 + $0x170] sm:$0xff]
    %v4098 = vld [vmem:[#allocation8 + $0x178] sm:$0xff]
    %v4099 = vld [vmem:[#allocation8 + $0x180] sm:$0xff]
    %v4100 = vld [vmem:[#allocation8 + $0x188] sm:$0xff]
    %v4101 = vld [vmem:[#allocation8 + $0x190] sm:$0xff]
    %v4102 = vld [vmem:[#allocation8 + $0x198] sm:$0xff]
    %v4103 = vld [vmem:[#allocation8 + $0x1a0] sm:$0xff]
    %v4104 = vld [vmem:[#allocation8 + $0x1a8] sm:$0xff]
    %v4105 = vld [vmem:[#allocation8 + $0x1b0] sm:$0xff]
    %v4106 = vld [vmem:[#allocation8 + $0x1b8] sm:$0xff]
    %v4107 = vld [vmem:[#allocation8 + $0x1c0] sm:$0xff]
    %v4108 = vld [vmem:[#allocation8 + $0x1c8] sm:$0xff]
    %v4109 = vld [vmem:[#allocation8 + $0x1d0] sm:$0xff]
    %v4110 = vld [vmem:[#allocation8 + $0x1d8] sm:$0xff]
    %v4111 = vld [vmem:[#allocation8 + $0x1e0] sm:$0xff]
    %v4112 = vld [vmem:[#allocation8 + $0x1e8] sm:$0xff]
    %v4113 = vld [vmem:[#allocation8 + $0x1f0] sm:$0xff]
    %v4114 = vld [vmem:[#allocation8 + $0x1f8] sm:$0xff]
    %v4115 = vld [vmem:[#allocation8 + $0x200] sm:$0xff]
    %v4116 = vld [vmem:[#allocation8 + $0x208] sm:$0xff]
    %v4117 = vld [vmem:[#allocation8 + $0x210] sm:$0xff]
    %v4118 = vld [vmem:[#allocation8 + $0x218] sm:$0xff]
    %v4119 = vld [vmem:[#allocation8 + $0x220] sm:$0xff]
    %v4120 = vld [vmem:[#allocation8 + $0x228] sm:$0xff]
    %v4121 = vld [vmem:[#allocation8 + $0x230] sm:$0xff]
    %v4122 = vld [vmem:[#allocation8 + $0x238] sm:$0xff]
    %v4123 = vld [vmem:[#allocation8 + $0x240] sm:$0xff]
    %v4124 = vld [vmem:[#allocation8 + $0x248] sm:$0xff]
    %v4125 = vld [vmem:[#allocation8 + $0x250] sm:$0xff]
    %v4126 = vld [vmem:[#allocation8 + $0x258] sm:$0xff]
    %v4127 = vld [vmem:[#allocation8 + $0x260] sm:$0xff]
    %v4128 = vld [vmem:[#allocation8 + $0x268] sm:$0xff]
    %v4129 = vld [vmem:[#allocation8 + $0x270] sm:$0xff]
    %v4130 = vld [vmem:[#allocation8 + $0x278] sm:$0xff]
    %v4131 = vld [vmem:[#allocation8 + $0x280] sm:$0xff]
    %v4132 = vld [vmem:[#allocation8 + $0x288] sm:$0xff]
    %v4133 = vld [vmem:[#allocation8 + $0x290] sm:$0xff]
    %v4134 = vld [vmem:[#allocation8 + $0x298] sm:$0xff]
    %v4135 = vld [vmem:[#allocation8 + $0x2a0] sm:$0xff]
    %v4136 = vld [vmem:[#allocation8 + $0x2a8] sm:$0xff]
    %v4137 = vld [vmem:[#allocation8 + $0x2b0] sm:$0xff]
    %v4138 = vld [vmem:[#allocation8 + $0x2b8] sm:$0xff]
    %v4139 = vld [vmem:[#allocation8 + $0x2c0] sm:$0xff]
    %v4140 = vld [vmem:[#allocation8 + $0x2c8] sm:$0xff]
    %v4141 = vld [vmem:[#allocation8 + $0x2d0] sm:$0xff]
    %v4142 = vld [vmem:[#allocation8 + $0x2d8] sm:$0xff]
    %v4143 = vld [vmem:[#allocation8 + $0x2e0] sm:$0xff]
    %v4144 = vld [vmem:[#allocation8 + $0x2e8] sm:$0xff]
    %v4145 = vld [vmem:[#allocation8 + $0x2f0] sm:$0xff]
    %v4146 = vld [vmem:[#allocation8 + $0x2f8] sm:$0xff]
    %v4147 = vld [vmem:[#allocation8 + $0x300] sm:$0xff]
    %v4148 = vld [vmem:[#allocation8 + $0x308] sm:$0xff]
    %v4149 = vld [vmem:[#allocation8 + $0x310] sm:$0xff]
    %v4150 = vld [vmem:[#allocation8 + $0x318] sm:$0xff]
    %v4151 = vld [vmem:[#allocation8 + $0x320] sm:$0xff]
    %v4152 = vld [vmem:[#allocation8 + $0x328] sm:$0xff]
    %v4153 = vld [vmem:[#allocation8 + $0x330] sm:$0xff]
    %v4154 = vld [vmem:[#allocation8 + $0x338] sm:$0xff]
    %v4155 = vld [vmem:[#allocation8 + $0x340] sm:$0xff]
    %v4156 = vld [vmem:[#allocation8 + $0x348] sm:$0xff]
    %v4157 = vld [vmem:[#allocation8 + $0x350] sm:$0xff]
    %v4158 = vld [vmem:[#allocation8 + $0x358] sm:$0xff]
    %v4159 = vld [vmem:[#allocation8 + $0x360] sm:$0xff]
    %v4160 = vld [vmem:[#allocation8 + $0x368] sm:$0xff]
    %v4161 = vld [vmem:[#allocation8 + $0x370] sm:$0xff]
    %v4162 = vld [vmem:[#allocation8 + $0x378] sm:$0xff]
    %v4163 = vld [vmem:[#allocation8 + $0x380] sm:$0xff]
    %v4164 = vld [vmem:[#allocation8 + $0x388] sm:$0xff]
    %v4165 = vld [vmem:[#allocation8 + $0x390] sm:$0xff]
    %v4166 = vld [vmem:[#allocation8 + $0x398] sm:$0xff]
    %v4167 = vld [vmem:[#allocation8 + $0x3a0] sm:$0xff]
    %v4168 = vld [vmem:[#allocation8 + $0x3a8] sm:$0xff]
    %v4169 = vld [vmem:[#allocation8 + $0x3b0] sm:$0xff]
    %v4170 = vld [vmem:[#allocation8 + $0x3b8] sm:$0xff]
    %v4171 = vld [vmem:[#allocation8 + $0x3c0] sm:$0xff]
    %v4172 = vld [vmem:[#allocation8 + $0x3c8] sm:$0xff]
    %v4173 = vld [vmem:[#allocation8 + $0x3d0] sm:$0xff]
    %v4174 = vld [vmem:[#allocation8 + $0x3d8] sm:$0xff]
    %v4175 = vld [vmem:[#allocation8 + $0x3e0] sm:$0xff]
    %v4176 = vld [vmem:[#allocation8 + $0x3e8] sm:$0xff]
    %v4177 = vld [vmem:[#allocation8 + $0x3f0] sm:$0xff]
    %v4178 = vld [vmem:[#allocation8 + $0x3f8] sm:$0xff]
    %v4179 = vld [vmem:[#allocation8 + $0x400] sm:$0xff]
    %v4180 = vld [vmem:[#allocation8 + $0x408] sm:$0xff]
    %v4181 = vld [vmem:[#allocation8 + $0x410] sm:$0xff]
    %v4182 = vld [vmem:[#allocation8 + $0x418] sm:$0xff]
    %v4183 = vld [vmem:[#allocation8 + $0x420] sm:$0xff]
    %v4184 = vld [vmem:[#allocation8 + $0x428] sm:$0xff]
    %v4185 = vld [vmem:[#allocation8 + $0x430] sm:$0xff]
    %v4186 = vld [vmem:[#allocation8 + $0x438] sm:$0xff]
    %v4187 = vld [vmem:[#allocation8 + $0x440] sm:$0xff]
    %v4188 = vld [vmem:[#allocation8 + $0x448] sm:$0xff]
    %v4189 = vld [vmem:[#allocation8 + $0x450] sm:$0xff]
    %v4190 = vld [vmem:[#allocation8 + $0x458] sm:$0xff]
    %v4191 = vld [vmem:[#allocation8 + $0x460] sm:$0xff]
    %v4192 = vld [vmem:[#allocation8 + $0x468] sm:$0xff]
    %v4193 = vld [vmem:[#allocation8 + $0x470] sm:$0xff]
    %v4194 = vld [vmem:[#allocation8 + $0x478] sm:$0xff]
    %v4195 = vld [vmem:[#allocation8 + $0x480] sm:$0xff]
    %v4196 = vld [vmem:[#allocation8 + $0x488] sm:$0xff]
    %v4197 = vld [vmem:[#allocation8 + $0x490] sm:$0xff]
    %v4198 = vld [vmem:[#allocation8 + $0x498] sm:$0xff]
    %v4199 = vld [vmem:[#allocation8 + $0x4a0] sm:$0xff]
    %v4200 = vld [vmem:[#allocation8 + $0x4a8] sm:$0xff]
    %v4201 = vld [vmem:[#allocation8 + $0x4b0] sm:$0xff]
    %v4202 = vld [vmem:[#allocation8 + $0x4b8] sm:$0xff]
    %v4203 = vld [vmem:[#allocation8 + $0x4c0] sm:$0xff]
    %v4204 = vld [vmem:[#allocation8 + $0x4c8] sm:$0xff]
    %v4205 = vld [vmem:[#allocation8 + $0x4d0] sm:$0xff]
    %v4206 = vld [vmem:[#allocation8 + $0x4d8] sm:$0xff]
    %v4207 = vld [vmem:[#allocation8 + $0x4e0] sm:$0xff]
    %v4208 = vld [vmem:[#allocation8 + $0x4e8] sm:$0xff]
    %v4209 = vld [vmem:[#allocation8 + $0x4f0] sm:$0xff]
    %v4210 = vld [vmem:[#allocation8 + $0x4f8] sm:$0xff]
    %v4211 = vld [vmem:[#allocation8 + $0x500] sm:$0xff]
    %v4212 = vld [vmem:[#allocation8 + $0x508] sm:$0xff]
    %v4213 = vld [vmem:[#allocation8 + $0x510] sm:$0xff]
    %v4214 = vld [vmem:[#allocation8 + $0x518] sm:$0xff]
    %v4215 = vld [vmem:[#allocation8 + $0x520] sm:$0xff]
    %v4216 = vld [vmem:[#allocation8 + $0x528] sm:$0xff]
    %v4217 = vld [vmem:[#allocation8 + $0x530] sm:$0xff]
    %v4218 = vld [vmem:[#allocation8 + $0x538] sm:$0xff]
    %v4219 = vld [vmem:[#allocation8 + $0x540] sm:$0xff]
    %v4220 = vld [vmem:[#allocation8 + $0x548] sm:$0xff]
    %v4221 = vld [vmem:[#allocation8 + $0x550] sm:$0xff]
    %v4222 = vld [vmem:[#allocation8 + $0x558] sm:$0xff]
    %v4223 = vld [vmem:[#allocation8 + $0x560] sm:$0xff]
    %v4224 = vld [vmem:[#allocation8 + $0x568] sm:$0xff]
    %v4225 = vld [vmem:[#allocation8 + $0x570] sm:$0xff]
    %v4226 = vld [vmem:[#allocation8 + $0x578] sm:$0xff]
    %v4227 = vld [vmem:[#allocation8 + $0x580] sm:$0xff]
    %v4228 = vld [vmem:[#allocation8 + $0x588] sm:$0xff]
    %v4229 = vld [vmem:[#allocation8 + $0x590] sm:$0xff]
    %v4230 = vld [vmem:[#allocation8 + $0x598] sm:$0xff]
    %v4231 = vld [vmem:[#allocation8 + $0x5a0] sm:$0xff]
    %v4232 = vld [vmem:[#allocation8 + $0x5a8] sm:$0xff]
    %v4233 = vld [vmem:[#allocation8 + $0x5b0] sm:$0xff]
    %v4234 = vld [vmem:[#allocation8 + $0x5b8] sm:$0xff]
    %v4235 = vld [vmem:[#allocation8 + $0x5c0] sm:$0xff]
    %v4236 = vld [vmem:[#allocation8 + $0x5c8] sm:$0xff]
    %v4237 = vld [vmem:[#allocation8 + $0x5d0] sm:$0xff]
    %v4238 = vld [vmem:[#allocation8 + $0x5d8] sm:$0xff]
    %v4239 = vld [vmem:[#allocation8 + $0x5e0] sm:$0xff]
    %v4240 = vld [vmem:[#allocation8 + $0x5e8] sm:$0xff]
    %v4241 = vld [vmem:[#allocation8 + $0x5f0] sm:$0xff]
    %v4242 = vld [vmem:[#allocation8 + $0x5f8] sm:$0xff]
    %v4243 = vld [vmem:[#allocation8 + $0x600] sm:$0xff]
    %v4244 = vld [vmem:[#allocation8 + $0x608] sm:$0xff]
    %v4245 = vld [vmem:[#allocation8 + $0x610] sm:$0xff]
    %v4246 = vld [vmem:[#allocation8 + $0x618] sm:$0xff]
    %v4247 = vld [vmem:[#allocation8 + $0x620] sm:$0xff]
    %v4248 = vld [vmem:[#allocation8 + $0x628] sm:$0xff]
    %v4249 = vld [vmem:[#allocation8 + $0x630] sm:$0xff]
    %v4250 = vld [vmem:[#allocation8 + $0x638] sm:$0xff]
    %v4251 = vld [vmem:[#allocation8 + $0x640] sm:$0xff]
    %v4252 = vld [vmem:[#allocation8 + $0x648] sm:$0xff]
    %v4253 = vld [vmem:[#allocation8 + $0x650] sm:$0xff]
    %v4254 = vld [vmem:[#allocation8 + $0x658] sm:$0xff]
    %v4255 = vld [vmem:[#allocation8 + $0x660] sm:$0xff]
    %v4256 = vld [vmem:[#allocation8 + $0x668] sm:$0xff]
    %v4257 = vld [vmem:[#allocation8 + $0x670] sm:$0xff]
    %v4258 = vld [vmem:[#allocation8 + $0x678] sm:$0xff]
    %v4259 = vld [vmem:[#allocation8 + $0x680] sm:$0xff]
    %v4260 = vld [vmem:[#allocation8 + $0x688] sm:$0xff]
    %v4261 = vld [vmem:[#allocation8 + $0x690] sm:$0xff]
    %v4262 = vld [vmem:[#allocation8 + $0x698] sm:$0xff]
    %v4263 = vld [vmem:[#allocation8 + $0x6a0] sm:$0xff]
    %v4264 = vld [vmem:[#allocation8 + $0x6a8] sm:$0xff]
    %v4265 = vld [vmem:[#allocation8 + $0x6b0] sm:$0xff]
    %v4266 = vld [vmem:[#allocation8 + $0x6b8] sm:$0xff]
    %v4267 = vld [vmem:[#allocation8 + $0x6c0] sm:$0xff]
    %v4268 = vld [vmem:[#allocation8 + $0x6c8] sm:$0xff]
    %v4269 = vld [vmem:[#allocation8 + $0x6d0] sm:$0xff]
    %v4270 = vld [vmem:[#allocation8 + $0x6d8] sm:$0xff]
    %v4271 = vld [vmem:[#allocation8 + $0x6e0] sm:$0xff]
    %v4272 = vld [vmem:[#allocation8 + $0x6e8] sm:$0xff]
    %v4273 = vld [vmem:[#allocation8 + $0x6f0] sm:$0xff]
    %v4274 = vld [vmem:[#allocation8 + $0x6f8] sm:$0xff]
    %v4275 = vld [vmem:[#allocation8 + $0x700] sm:$0xff]
    %v4276 = vld [vmem:[#allocation8 + $0x708] sm:$0xff]
    %v4277 = vld [vmem:[#allocation8 + $0x710] sm:$0xff]
    %v4278 = vld [vmem:[#allocation8 + $0x718] sm:$0xff]
    %v4279 = vld [vmem:[#allocation8 + $0x720] sm:$0xff]
    %v4280 = vld [vmem:[#allocation8 + $0x728] sm:$0xff]
    %v4281 = vld [vmem:[#allocation8 + $0x730] sm:$0xff]
    %v4282 = vld [vmem:[#allocation8 + $0x738] sm:$0xff]
    %v4283 = vld [vmem:[#allocation8 + $0x740] sm:$0xff]
    %v4284 = vld [vmem:[#allocation8 + $0x748] sm:$0xff]
    %v4285 = vld [vmem:[#allocation8 + $0x750] sm:$0xff]
    %v4286 = vld [vmem:[#allocation8 + $0x758] sm:$0xff]
    %v4287 = vld [vmem:[#allocation8 + $0x760] sm:$0xff]
    %v4288 = vld [vmem:[#allocation8 + $0x768] sm:$0xff]
    %v4289 = vld [vmem:[#allocation8 + $0x770] sm:$0xff]
    %v4290 = vld [vmem:[#allocation8 + $0x778] sm:$0xff]
    %v4291 = vld [vmem:[#allocation8 + $0x780] sm:$0xff]
    %v4292 = vld [vmem:[#allocation8 + $0x788] sm:$0xff]
    %v4293 = vld [vmem:[#allocation8 + $0x790] sm:$0xff]
    %v4294 = vld [vmem:[#allocation8 + $0x798] sm:$0xff]
    %v4295 = vld [vmem:[#allocation8 + $0x7a0] sm:$0xff]
    %v4296 = vld [vmem:[#allocation8 + $0x7a8] sm:$0xff]
    %v4297 = vld [vmem:[#allocation8 + $0x7b0] sm:$0xff]
    %v4298 = vld [vmem:[#allocation8 + $0x7b8] sm:$0xff]
    %v4299 = vld [vmem:[#allocation8 + $0x7c0] sm:$0xff]
    %v4300 = vld [vmem:[#allocation8 + $0x7c8] sm:$0xff]
    %v4301 = vld [vmem:[#allocation8 + $0x7d0] sm:$0xff]
    %v4302 = vld [vmem:[#allocation8 + $0x7d8] sm:$0xff]
    %v4303 = vld [vmem:[#allocation8 + $0x7e0] sm:$0xff]
    %v4304 = vld [vmem:[#allocation8 + $0x7e8] sm:$0xff]
    %v4305 = vld [vmem:[#allocation8 + $0x7f0] sm:$0xff]
    %v4306 = vld [vmem:[#allocation8 + $0x7f8] sm:$0xff]
    %v4563 = vunpack.c.l.b16 %v4051
    %v4564 = vunpack.c.h.b16 %v4051
    %v4565 = vunpack.c.l.b16 %v4052
    %v4566 = vunpack.c.h.b16 %v4052
    %v4567 = vunpack.c.l.b16 %v4053
    %v4568 = vunpack.c.h.b16 %v4053
    %v4569 = vunpack.c.l.b16 %v4054
    %v4570 = vunpack.c.h.b16 %v4054
    %v4571 = vunpack.c.l.b16 %v4055
    %v4572 = vunpack.c.h.b16 %v4055
    %v4573 = vunpack.c.l.b16 %v4056
    %v4574 = vunpack.c.h.b16 %v4056
    %v4575 = vunpack.c.l.b16 %v4057
    %v4576 = vunpack.c.h.b16 %v4057
    %v4577 = vunpack.c.l.b16 %v4058
    %v4578 = vunpack.c.h.b16 %v4058
    %v4579 = vunpack.c.l.b16 %v4059
    %v4580 = vunpack.c.h.b16 %v4059
    %v4581 = vunpack.c.l.b16 %v4060
    %v4582 = vunpack.c.h.b16 %v4060
    %v4583 = vunpack.c.l.b16 %v4061
    %v4584 = vunpack.c.h.b16 %v4061
    %v4585 = vunpack.c.l.b16 %v4062
    %v4586 = vunpack.c.h.b16 %v4062
    %v4587 = vunpack.c.l.b16 %v4063
    %v4588 = vunpack.c.h.b16 %v4063
    %v4589 = vunpack.c.l.b16 %v4064
    %v4590 = vunpack.c.h.b16 %v4064
    %v4591 = vunpack.c.l.b16 %v4065
    %v4592 = vunpack.c.h.b16 %v4065
    %v4593 = vunpack.c.l.b16 %v4066
    %v4594 = vunpack.c.h.b16 %v4066
    %v4595 = vunpack.c.l.b16 %v4067
    %v4596 = vunpack.c.h.b16 %v4067
    %v4597 = vunpack.c.l.b16 %v4068
    %v4598 = vunpack.c.h.b16 %v4068
    %v4599 = vunpack.c.l.b16 %v4069
    %v4600 = vunpack.c.h.b16 %v4069
    %v4601 = vunpack.c.l.b16 %v4070
    %v4602 = vunpack.c.h.b16 %v4070
    %v4603 = vunpack.c.l.b16 %v4071
    %v4604 = vunpack.c.h.b16 %v4071
    %v4605 = vunpack.c.l.b16 %v4072
    %v4606 = vunpack.c.h.b16 %v4072
    %v4607 = vunpack.c.l.b16 %v4073
    %v4608 = vunpack.c.h.b16 %v4073
    %v4609 = vunpack.c.l.b16 %v4074
    %v4610 = vunpack.c.h.b16 %v4074
    %v4611 = vunpack.c.l.b16 %v4075
    %v4612 = vunpack.c.h.b16 %v4075
    %v4613 = vunpack.c.l.b16 %v4076
    %v4614 = vunpack.c.h.b16 %v4076
    %v4615 = vunpack.c.l.b16 %v4077
    %v4616 = vunpack.c.h.b16 %v4077
    %v4617 = vunpack.c.l.b16 %v4078
    %v4618 = vunpack.c.h.b16 %v4078
    %v4619 = vunpack.c.l.b16 %v4079
    %v4620 = vunpack.c.h.b16 %v4079
    %v4621 = vunpack.c.l.b16 %v4080
    %v4622 = vunpack.c.h.b16 %v4080
    %v4623 = vunpack.c.l.b16 %v4081
    %v4624 = vunpack.c.h.b16 %v4081
    %v4625 = vunpack.c.l.b16 %v4082
    %v4626 = vunpack.c.h.b16 %v4082
    %v4627 = vunpack.c.l.b16 %v4083
    %v4628 = vunpack.c.h.b16 %v4083
    %v4629 = vunpack.c.l.b16 %v4084
    %v4630 = vunpack.c.h.b16 %v4084
    %v4631 = vunpack.c.l.b16 %v4085
    %v4632 = vunpack.c.h.b16 %v4085
    %v4633 = vunpack.c.l.b16 %v4086
    %v4634 = vunpack.c.h.b16 %v4086
    %v4635 = vunpack.c.l.b16 %v4087
    %v4636 = vunpack.c.h.b16 %v4087
    %v4637 = vunpack.c.l.b16 %v4088
    %v4638 = vunpack.c.h.b16 %v4088
    %v4639 = vunpack.c.l.b16 %v4089
    %v4640 = vunpack.c.h.b16 %v4089
    %v4641 = vunpack.c.l.b16 %v4090
    %v4642 = vunpack.c.h.b16 %v4090
    %v4643 = vunpack.c.l.b16 %v4091
    %v4644 = vunpack.c.h.b16 %v4091
    %v4645 = vunpack.c.l.b16 %v4092
    %v4646 = vunpack.c.h.b16 %v4092
    %v4647 = vunpack.c.l.b16 %v4093
    %v4648 = vunpack.c.h.b16 %v4093
    %v4649 = vunpack.c.l.b16 %v4094
    %v4650 = vunpack.c.h.b16 %v4094
    %v4651 = vunpack.c.l.b16 %v4095
    %v4652 = vunpack.c.h.b16 %v4095
    %v4653 = vunpack.c.l.b16 %v4096
    %v4654 = vunpack.c.h.b16 %v4096
    %v4655 = vunpack.c.l.b16 %v4097
    %v4656 = vunpack.c.h.b16 %v4097
    %v4657 = vunpack.c.l.b16 %v4098
    %v4658 = vunpack.c.h.b16 %v4098
    %v4659 = vunpack.c.l.b16 %v4099
    %v4660 = vunpack.c.h.b16 %v4099
    %v4661 = vunpack.c.l.b16 %v4100
    %v4662 = vunpack.c.h.b16 %v4100
    %v4663 = vunpack.c.l.b16 %v4101
    %v4664 = vunpack.c.h.b16 %v4101
    %v4665 = vunpack.c.l.b16 %v4102
    %v4666 = vunpack.c.h.b16 %v4102
    %v4667 = vunpack.c.l.b16 %v4103
    %v4668 = vunpack.c.h.b16 %v4103
    %v4669 = vunpack.c.l.b16 %v4104
    %v4670 = vunpack.c.h.b16 %v4104
    %v4671 = vunpack.c.l.b16 %v4105
    %v4672 = vunpack.c.h.b16 %v4105
    %v4673 = vunpack.c.l.b16 %v4106
    %v4674 = vunpack.c.h.b16 %v4106
    %v4675 = vunpack.c.l.b16 %v4107
    %v4676 = vunpack.c.h.b16 %v4107
    %v4677 = vunpack.c.l.b16 %v4108
    %v4678 = vunpack.c.h.b16 %v4108
    %v4679 = vunpack.c.l.b16 %v4109
    %v4680 = vunpack.c.h.b16 %v4109
    %v4681 = vunpack.c.l.b16 %v4110
    %v4682 = vunpack.c.h.b16 %v4110
    %v4683 = vunpack.c.l.b16 %v4111
    %v4684 = vunpack.c.h.b16 %v4111
    %v4685 = vunpack.c.l.b16 %v4112
    %v4686 = vunpack.c.h.b16 %v4112
    %v4687 = vunpack.c.l.b16 %v4113
    %v4688 = vunpack.c.h.b16 %v4113
    %v4689 = vunpack.c.l.b16 %v4114
    %v4690 = vunpack.c.h.b16 %v4114
    %v4691 = vunpack.c.l.b16 %v4115
    %v4692 = vunpack.c.h.b16 %v4115
    %v4693 = vunpack.c.l.b16 %v4116
    %v4694 = vunpack.c.h.b16 %v4116
    %v4695 = vunpack.c.l.b16 %v4117
    %v4696 = vunpack.c.h.b16 %v4117
    %v4697 = vunpack.c.l.b16 %v4118
    %v4698 = vunpack.c.h.b16 %v4118
    %v4699 = vunpack.c.l.b16 %v4119
    %v4700 = vunpack.c.h.b16 %v4119
    %v4701 = vunpack.c.l.b16 %v4120
    %v4702 = vunpack.c.h.b16 %v4120
    %v4703 = vunpack.c.l.b16 %v4121
    %v4704 = vunpack.c.h.b16 %v4121
    %v4705 = vunpack.c.l.b16 %v4122
    %v4706 = vunpack.c.h.b16 %v4122
    %v4707 = vunpack.c.l.b16 %v4123
    %v4708 = vunpack.c.h.b16 %v4123
    %v4709 = vunpack.c.l.b16 %v4124
    %v4710 = vunpack.c.h.b16 %v4124
    %v4711 = vunpack.c.l.b16 %v4125
    %v4712 = vunpack.c.h.b16 %v4125
    %v4713 = vunpack.c.l.b16 %v4126
    %v4714 = vunpack.c.h.b16 %v4126
    %v4715 = vunpack.c.l.b16 %v4127
    %v4716 = vunpack.c.h.b16 %v4127
    %v4717 = vunpack.c.l.b16 %v4128
    %v4718 = vunpack.c.h.b16 %v4128
    %v4719 = vunpack.c.l.b16 %v4129
    %v4720 = vunpack.c.h.b16 %v4129
    %v4721 = vunpack.c.l.b16 %v4130
    %v4722 = vunpack.c.h.b16 %v4130
    %v4723 = vunpack.c.l.b16 %v4131
    %v4724 = vunpack.c.h.b16 %v4131
    %v4725 = vunpack.c.l.b16 %v4132
    %v4726 = vunpack.c.h.b16 %v4132
    %v4727 = vunpack.c.l.b16 %v4133
    %v4728 = vunpack.c.h.b16 %v4133
    %v4729 = vunpack.c.l.b16 %v4134
    %v4730 = vunpack.c.h.b16 %v4134
    %v4731 = vunpack.c.l.b16 %v4135
    %v4732 = vunpack.c.h.b16 %v4135
    %v4733 = vunpack.c.l.b16 %v4136
    %v4734 = vunpack.c.h.b16 %v4136
    %v4735 = vunpack.c.l.b16 %v4137
    %v4736 = vunpack.c.h.b16 %v4137
    %v4737 = vunpack.c.l.b16 %v4138
    %v4738 = vunpack.c.h.b16 %v4138
    %v4739 = vunpack.c.l.b16 %v4139
    %v4740 = vunpack.c.h.b16 %v4139
    %v4741 = vunpack.c.l.b16 %v4140
    %v4742 = vunpack.c.h.b16 %v4140
    %v4743 = vunpack.c.l.b16 %v4141
    %v4744 = vunpack.c.h.b16 %v4141
    %v4745 = vunpack.c.l.b16 %v4142
    %v4746 = vunpack.c.h.b16 %v4142
    %v4747 = vunpack.c.l.b16 %v4143
    %v4748 = vunpack.c.h.b16 %v4143
    %v4749 = vunpack.c.l.b16 %v4144
    %v4750 = vunpack.c.h.b16 %v4144
    %v4751 = vunpack.c.l.b16 %v4145
    %v4752 = vunpack.c.h.b16 %v4145
    %v4753 = vunpack.c.l.b16 %v4146
    %v4754 = vunpack.c.h.b16 %v4146
    %v4755 = vunpack.c.l.b16 %v4147
    %v4756 = vunpack.c.h.b16 %v4147
    %v4757 = vunpack.c.l.b16 %v4148
    %v4758 = vunpack.c.h.b16 %v4148
    %v4759 = vunpack.c.l.b16 %v4149
    %v4760 = vunpack.c.h.b16 %v4149
    %v4761 = vunpack.c.l.b16 %v4150
    %v4762 = vunpack.c.h.b16 %v4150
    %v4763 = vunpack.c.l.b16 %v4151
    %v4764 = vunpack.c.h.b16 %v4151
    %v4765 = vunpack.c.l.b16 %v4152
    %v4766 = vunpack.c.h.b16 %v4152
    %v4767 = vunpack.c.l.b16 %v4153
    %v4768 = vunpack.c.h.b16 %v4153
    %v4769 = vunpack.c.l.b16 %v4154
    %v4770 = vunpack.c.h.b16 %v4154
    %v4771 = vunpack.c.l.b16 %v4155
    %v4772 = vunpack.c.h.b16 %v4155
    %v4773 = vunpack.c.l.b16 %v4156
    %v4774 = vunpack.c.h.b16 %v4156
    %v4775 = vunpack.c.l.b16 %v4157
    %v4776 = vunpack.c.h.b16 %v4157
    %v4777 = vunpack.c.l.b16 %v4158
    %v4778 = vunpack.c.h.b16 %v4158
    %v4779 = vunpack.c.l.b16 %v4159
    %v4780 = vunpack.c.h.b16 %v4159
    %v4781 = vunpack.c.l.b16 %v4160
    %v4782 = vunpack.c.h.b16 %v4160
    %v4783 = vunpack.c.l.b16 %v4161
    %v4784 = vunpack.c.h.b16 %v4161
    %v4785 = vunpack.c.l.b16 %v4162
    %v4786 = vunpack.c.h.b16 %v4162
    %v4787 = vunpack.c.l.b16 %v4163
    %v4788 = vunpack.c.h.b16 %v4163
    %v4789 = vunpack.c.l.b16 %v4164
    %v4790 = vunpack.c.h.b16 %v4164
    %v4791 = vunpack.c.l.b16 %v4165
    %v4792 = vunpack.c.h.b16 %v4165
    %v4793 = vunpack.c.l.b16 %v4166
    %v4794 = vunpack.c.h.b16 %v4166
    %v4795 = vunpack.c.l.b16 %v4167
    %v4796 = vunpack.c.h.b16 %v4167
    %v4797 = vunpack.c.l.b16 %v4168
    %v4798 = vunpack.c.h.b16 %v4168
    %v4799 = vunpack.c.l.b16 %v4169
    %v4800 = vunpack.c.h.b16 %v4169
    %v4801 = vunpack.c.l.b16 %v4170
    %v4802 = vunpack.c.h.b16 %v4170
    %v4803 = vunpack.c.l.b16 %v4171
    %v4804 = vunpack.c.h.b16 %v4171
    %v4805 = vunpack.c.l.b16 %v4172
    %v4806 = vunpack.c.h.b16 %v4172
    %v4807 = vunpack.c.l.b16 %v4173
    %v4808 = vunpack.c.h.b16 %v4173
    %v4809 = vunpack.c.l.b16 %v4174
    %v4810 = vunpack.c.h.b16 %v4174
    %v4811 = vunpack.c.l.b16 %v4175
    %v4812 = vunpack.c.h.b16 %v4175
    %v4813 = vunpack.c.l.b16 %v4176
    %v4814 = vunpack.c.h.b16 %v4176
    %v4815 = vunpack.c.l.b16 %v4177
    %v4816 = vunpack.c.h.b16 %v4177
    %v4817 = vunpack.c.l.b16 %v4178
    %v4818 = vunpack.c.h.b16 %v4178
    %v4819 = vunpack.c.l.b16 %v4179
    %v4820 = vunpack.c.h.b16 %v4179
    %v4821 = vunpack.c.l.b16 %v4180
    %v4822 = vunpack.c.h.b16 %v4180
    %v4823 = vunpack.c.l.b16 %v4181
    %v4824 = vunpack.c.h.b16 %v4181
    %v4825 = vunpack.c.l.b16 %v4182
    %v4826 = vunpack.c.h.b16 %v4182
    %v4827 = vunpack.c.l.b16 %v4183
    %v4828 = vunpack.c.h.b16 %v4183
    %v4829 = vunpack.c.l.b16 %v4184
    %v4830 = vunpack.c.h.b16 %v4184
    %v4831 = vunpack.c.l.b16 %v4185
    %v4832 = vunpack.c.h.b16 %v4185
    %v4833 = vunpack.c.l.b16 %v4186
    %v4834 = vunpack.c.h.b16 %v4186
    %v4835 = vunpack.c.l.b16 %v4187
    %v4836 = vunpack.c.h.b16 %v4187
    %v4837 = vunpack.c.l.b16 %v4188
    %v4838 = vunpack.c.h.b16 %v4188
    %v4839 = vunpack.c.l.b16 %v4189
    %v4840 = vunpack.c.h.b16 %v4189
    %v4841 = vunpack.c.l.b16 %v4190
    %v4842 = vunpack.c.h.b16 %v4190
    %v4843 = vunpack.c.l.b16 %v4191
    %v4844 = vunpack.c.h.b16 %v4191
    %v4845 = vunpack.c.l.b16 %v4192
    %v4846 = vunpack.c.h.b16 %v4192
    %v4847 = vunpack.c.l.b16 %v4193
    %v4848 = vunpack.c.h.b16 %v4193
    %v4849 = vunpack.c.l.b16 %v4194
    %v4850 = vunpack.c.h.b16 %v4194
    %v4851 = vunpack.c.l.b16 %v4195
    %v4852 = vunpack.c.h.b16 %v4195
    %v4853 = vunpack.c.l.b16 %v4196
    %v4854 = vunpack.c.h.b16 %v4196
    %v4855 = vunpack.c.l.b16 %v4197
    %v4856 = vunpack.c.h.b16 %v4197
    %v4857 = vunpack.c.l.b16 %v4198
    %v4858 = vunpack.c.h.b16 %v4198
    %v4859 = vunpack.c.l.b16 %v4199
    %v4860 = vunpack.c.h.b16 %v4199
    %v4861 = vunpack.c.l.b16 %v4200
    %v4862 = vunpack.c.h.b16 %v4200
    %v4863 = vunpack.c.l.b16 %v4201
    %v4864 = vunpack.c.h.b16 %v4201
    %v4865 = vunpack.c.l.b16 %v4202
    %v4866 = vunpack.c.h.b16 %v4202
    %v4867 = vunpack.c.l.b16 %v4203
    %v4868 = vunpack.c.h.b16 %v4203
    %v4869 = vunpack.c.l.b16 %v4204
    %v4870 = vunpack.c.h.b16 %v4204
    %v4871 = vunpack.c.l.b16 %v4205
    %v4872 = vunpack.c.h.b16 %v4205
    %v4873 = vunpack.c.l.b16 %v4206
    %v4874 = vunpack.c.h.b16 %v4206
    %v4875 = vunpack.c.l.b16 %v4207
    %v4876 = vunpack.c.h.b16 %v4207
    %v4877 = vunpack.c.l.b16 %v4208
    %v4878 = vunpack.c.h.b16 %v4208
    %v4879 = vunpack.c.l.b16 %v4209
    %v4880 = vunpack.c.h.b16 %v4209
    %v4881 = vunpack.c.l.b16 %v4210
    %v4882 = vunpack.c.h.b16 %v4210
    %v4883 = vunpack.c.l.b16 %v4211
    %v4884 = vunpack.c.h.b16 %v4211
    %v4885 = vunpack.c.l.b16 %v4212
    %v4886 = vunpack.c.h.b16 %v4212
    %v4887 = vunpack.c.l.b16 %v4213
    %v4888 = vunpack.c.h.b16 %v4213
    %v4889 = vunpack.c.l.b16 %v4214
    %v4890 = vunpack.c.h.b16 %v4214
    %v4891 = vunpack.c.l.b16 %v4215
    %v4892 = vunpack.c.h.b16 %v4215
    %v4893 = vunpack.c.l.b16 %v4216
    %v4894 = vunpack.c.h.b16 %v4216
    %v4895 = vunpack.c.l.b16 %v4217
    %v4896 = vunpack.c.h.b16 %v4217
    %v4897 = vunpack.c.l.b16 %v4218
    %v4898 = vunpack.c.h.b16 %v4218
    %v4899 = vunpack.c.l.b16 %v4219
    %v4900 = vunpack.c.h.b16 %v4219
    %v4901 = vunpack.c.l.b16 %v4220
    %v4902 = vunpack.c.h.b16 %v4220
    %v4903 = vunpack.c.l.b16 %v4221
    %v4904 = vunpack.c.h.b16 %v4221
    %v4905 = vunpack.c.l.b16 %v4222
    %v4906 = vunpack.c.h.b16 %v4222
    %v4907 = vunpack.c.l.b16 %v4223
    %v4908 = vunpack.c.h.b16 %v4223
    %v4909 = vunpack.c.l.b16 %v4224
    %v4910 = vunpack.c.h.b16 %v4224
    %v4911 = vunpack.c.l.b16 %v4225
    %v4912 = vunpack.c.h.b16 %v4225
    %v4913 = vunpack.c.l.b16 %v4226
    %v4914 = vunpack.c.h.b16 %v4226
    %v4915 = vunpack.c.l.b16 %v4227
    %v4916 = vunpack.c.h.b16 %v4227
    %v4917 = vunpack.c.l.b16 %v4228
    %v4918 = vunpack.c.h.b16 %v4228
    %v4919 = vunpack.c.l.b16 %v4229
    %v4920 = vunpack.c.h.b16 %v4229
    %v4921 = vunpack.c.l.b16 %v4230
    %v4922 = vunpack.c.h.b16 %v4230
    %v4923 = vunpack.c.l.b16 %v4231
    %v4924 = vunpack.c.h.b16 %v4231
    %v4925 = vunpack.c.l.b16 %v4232
    %v4926 = vunpack.c.h.b16 %v4232
    %v4927 = vunpack.c.l.b16 %v4233
    %v4928 = vunpack.c.h.b16 %v4233
    %v4929 = vunpack.c.l.b16 %v4234
    %v4930 = vunpack.c.h.b16 %v4234
    %v4931 = vunpack.c.l.b16 %v4235
    %v4932 = vunpack.c.h.b16 %v4235
    %v4933 = vunpack.c.l.b16 %v4236
    %v4934 = vunpack.c.h.b16 %v4236
    %v4935 = vunpack.c.l.b16 %v4237
    %v4936 = vunpack.c.h.b16 %v4237
    %v4937 = vunpack.c.l.b16 %v4238
    %v4938 = vunpack.c.h.b16 %v4238
    %v4939 = vunpack.c.l.b16 %v4239
    %v4940 = vunpack.c.h.b16 %v4239
    %v4941 = vunpack.c.l.b16 %v4240
    %v4942 = vunpack.c.h.b16 %v4240
    %v4943 = vunpack.c.l.b16 %v4241
    %v4944 = vunpack.c.h.b16 %v4241
    %v4945 = vunpack.c.l.b16 %v4242
    %v4946 = vunpack.c.h.b16 %v4242
    %v4947 = vunpack.c.l.b16 %v4243
    %v4948 = vunpack.c.h.b16 %v4243
    %v4949 = vunpack.c.l.b16 %v4244
    %v4950 = vunpack.c.h.b16 %v4244
    %v4951 = vunpack.c.l.b16 %v4245
    %v4952 = vunpack.c.h.b16 %v4245
    %v4953 = vunpack.c.l.b16 %v4246
    %v4954 = vunpack.c.h.b16 %v4246
    %v4955 = vunpack.c.l.b16 %v4247
    %v4956 = vunpack.c.h.b16 %v4247
    %v4957 = vunpack.c.l.b16 %v4248
    %v4958 = vunpack.c.h.b16 %v4248
    %v4959 = vunpack.c.l.b16 %v4249
    %v4960 = vunpack.c.h.b16 %v4249
    %v4961 = vunpack.c.l.b16 %v4250
    %v4962 = vunpack.c.h.b16 %v4250
    %v4963 = vunpack.c.l.b16 %v4251
    %v4964 = vunpack.c.h.b16 %v4251
    %v4965 = vunpack.c.l.b16 %v4252
    %v4966 = vunpack.c.h.b16 %v4252
    %v4967 = vunpack.c.l.b16 %v4253
    %v4968 = vunpack.c.h.b16 %v4253
    %v4969 = vunpack.c.l.b16 %v4254
    %v4970 = vunpack.c.h.b16 %v4254
    %v4971 = vunpack.c.l.b16 %v4255
    %v4972 = vunpack.c.h.b16 %v4255
    %v4973 = vunpack.c.l.b16 %v4256
    %v4974 = vunpack.c.h.b16 %v4256
    %v4975 = vunpack.c.l.b16 %v4257
    %v4976 = vunpack.c.h.b16 %v4257
    %v4977 = vunpack.c.l.b16 %v4258
    %v4978 = vunpack.c.h.b16 %v4258
    %v4979 = vunpack.c.l.b16 %v4259
    %v4980 = vunpack.c.h.b16 %v4259
    %v4981 = vunpack.c.l.b16 %v4260
    %v4982 = vunpack.c.h.b16 %v4260
    %v4983 = vunpack.c.l.b16 %v4261
    %v4984 = vunpack.c.h.b16 %v4261
    %v4985 = vunpack.c.l.b16 %v4262
    %v4986 = vunpack.c.h.b16 %v4262
    %v4987 = vunpack.c.l.b16 %v4263
    %v4988 = vunpack.c.h.b16 %v4263
    %v4989 = vunpack.c.l.b16 %v4264
    %v4990 = vunpack.c.h.b16 %v4264
    %v4991 = vunpack.c.l.b16 %v4265
    %v4992 = vunpack.c.h.b16 %v4265
    %v4993 = vunpack.c.l.b16 %v4266
    %v4994 = vunpack.c.h.b16 %v4266
    %v4995 = vunpack.c.l.b16 %v4267
    %v4996 = vunpack.c.h.b16 %v4267
    %v4997 = vunpack.c.l.b16 %v4268
    %v4998 = vunpack.c.h.b16 %v4268
    %v4999 = vunpack.c.l.b16 %v4269
    %v5000 = vunpack.c.h.b16 %v4269
    %v5001 = vunpack.c.l.b16 %v4270
    %v5002 = vunpack.c.h.b16 %v4270
    %v5003 = vunpack.c.l.b16 %v4271
    %v5004 = vunpack.c.h.b16 %v4271
    %v5005 = vunpack.c.l.b16 %v4272
    %v5006 = vunpack.c.h.b16 %v4272
    %v5007 = vunpack.c.l.b16 %v4273
    %v5008 = vunpack.c.h.b16 %v4273
    %v5009 = vunpack.c.l.b16 %v4274
    %v5010 = vunpack.c.h.b16 %v4274
    %v5011 = vunpack.c.l.b16 %v4275
    %v5012 = vunpack.c.h.b16 %v4275
    %v5013 = vunpack.c.l.b16 %v4276
    %v5014 = vunpack.c.h.b16 %v4276
    %v5015 = vunpack.c.l.b16 %v4277
    %v5016 = vunpack.c.h.b16 %v4277
    %v5017 = vunpack.c.l.b16 %v4278
    %v5018 = vunpack.c.h.b16 %v4278
    %v5019 = vunpack.c.l.b16 %v4279
    %v5020 = vunpack.c.h.b16 %v4279
    %v5021 = vunpack.c.l.b16 %v4280
    %v5022 = vunpack.c.h.b16 %v4280
    %v5023 = vunpack.c.l.b16 %v4281
    %v5024 = vunpack.c.h.b16 %v4281
    %v5025 = vunpack.c.l.b16 %v4282
    %v5026 = vunpack.c.h.b16 %v4282
    %v5027 = vunpack.c.l.b16 %v4283
    %v5028 = vunpack.c.h.b16 %v4283
    %v5029 = vunpack.c.l.b16 %v4284
    %v5030 = vunpack.c.h.b16 %v4284
    %v5031 = vunpack.c.l.b16 %v4285
    %v5032 = vunpack.c.h.b16 %v4285
    %v5033 = vunpack.c.l.b16 %v4286
    %v5034 = vunpack.c.h.b16 %v4286
    %v5035 = vunpack.c.l.b16 %v4287
    %v5036 = vunpack.c.h.b16 %v4287
    %v5037 = vunpack.c.l.b16 %v4288
    %v5038 = vunpack.c.h.b16 %v4288
    %v5039 = vunpack.c.l.b16 %v4289
    %v5040 = vunpack.c.h.b16 %v4289
    %v5041 = vunpack.c.l.b16 %v4290
    %v5042 = vunpack.c.h.b16 %v4290
    %v5043 = vunpack.c.l.b16 %v4291
    %v5044 = vunpack.c.h.b16 %v4291
    %v5045 = vunpack.c.l.b16 %v4292
    %v5046 = vunpack.c.h.b16 %v4292
    %v5047 = vunpack.c.l.b16 %v4293
    %v5048 = vunpack.c.h.b16 %v4293
    %v5049 = vunpack.c.l.b16 %v4294
    %v5050 = vunpack.c.h.b16 %v4294
    %v5051 = vunpack.c.l.b16 %v4295
    %v5052 = vunpack.c.h.b16 %v4295
    %v5053 = vunpack.c.l.b16 %v4296
    %v5054 = vunpack.c.h.b16 %v4296
    %v5055 = vunpack.c.l.b16 %v4297
    %v5056 = vunpack.c.h.b16 %v4297
    %v5057 = vunpack.c.l.b16 %v4298
    %v5058 = vunpack.c.h.b16 %v4298
    %v5059 = vunpack.c.l.b16 %v4299
    %v5060 = vunpack.c.h.b16 %v4299
    %v5061 = vunpack.c.l.b16 %v4300
    %v5062 = vunpack.c.h.b16 %v4300
    %v5063 = vunpack.c.l.b16 %v4301
    %v5064 = vunpack.c.h.b16 %v4301
    %v5065 = vunpack.c.l.b16 %v4302
    %v5066 = vunpack.c.h.b16 %v4302
    %v5067 = vunpack.c.l.b16 %v4303
    %v5068 = vunpack.c.h.b16 %v4303
    %v5069 = vunpack.c.l.b16 %v4304
    %v5070 = vunpack.c.h.b16 %v4304
    %v5071 = vunpack.c.l.b16 %v4305
    %v5072 = vunpack.c.h.b16 %v4305
    %v5073 = vunpack.c.l.b16 %v4306
    %v5074 = vunpack.c.h.b16 %v4306
    %v5075 = vpack.c.b16 %v4567, %v4563
    %v5076 = vpack.c.b16 %v4568, %v4564
    %v5077 = vpack.c.b16 %v4569, %v4565
    %v5078 = vpack.c.b16 %v4570, %v4566
    %v5079 = vpack.c.b16 %v4575, %v4571
    %v5080 = vpack.c.b16 %v4576, %v4572
    %v5081 = vpack.c.b16 %v4577, %v4573
    %v5082 = vpack.c.b16 %v4578, %v4574
    %v5083 = vpack.c.b16 %v4583, %v4579
    %v5084 = vpack.c.b16 %v4584, %v4580
    %v5085 = vpack.c.b16 %v4585, %v4581
    %v5086 = vpack.c.b16 %v4586, %v4582
    %v5087 = vpack.c.b16 %v4591, %v4587
    %v5088 = vpack.c.b16 %v4592, %v4588
    %v5089 = vpack.c.b16 %v4593, %v4589
    %v5090 = vpack.c.b16 %v4594, %v4590
    %v5091 = vpack.c.b16 %v4599, %v4595
    %v5092 = vpack.c.b16 %v4600, %v4596
    %v5093 = vpack.c.b16 %v4601, %v4597
    %v5094 = vpack.c.b16 %v4602, %v4598
    %v5095 = vpack.c.b16 %v4607, %v4603
    %v5096 = vpack.c.b16 %v4608, %v4604
    %v5097 = vpack.c.b16 %v4609, %v4605
    %v5098 = vpack.c.b16 %v4610, %v4606
    %v5099 = vpack.c.b16 %v4615, %v4611
    %v5100 = vpack.c.b16 %v4616, %v4612
    %v5101 = vpack.c.b16 %v4617, %v4613
    %v5102 = vpack.c.b16 %v4618, %v4614
    %v5103 = vpack.c.b16 %v4623, %v4619
    %v5104 = vpack.c.b16 %v4624, %v4620
    %v5105 = vpack.c.b16 %v4625, %v4621
    %v5106 = vpack.c.b16 %v4626, %v4622
    %v5107 = vpack.c.b16 %v4631, %v4627
    %v5108 = vpack.c.b16 %v4632, %v4628
    %v5109 = vpack.c.b16 %v4633, %v4629
    %v5110 = vpack.c.b16 %v4634, %v4630
    %v5111 = vpack.c.b16 %v4639, %v4635
    %v5112 = vpack.c.b16 %v4640, %v4636
    %v5113 = vpack.c.b16 %v4641, %v4637
    %v5114 = vpack.c.b16 %v4642, %v4638
    %v5115 = vpack.c.b16 %v4647, %v4643
    %v5116 = vpack.c.b16 %v4648, %v4644
    %v5117 = vpack.c.b16 %v4649, %v4645
    %v5118 = vpack.c.b16 %v4650, %v4646
    %v5119 = vpack.c.b16 %v4655, %v4651
    %v5120 = vpack.c.b16 %v4656, %v4652
    %v5121 = vpack.c.b16 %v4657, %v4653
    %v5122 = vpack.c.b16 %v4658, %v4654
    %v5123 = vpack.c.b16 %v4663, %v4659
    %v5124 = vpack.c.b16 %v4664, %v4660
    %v5125 = vpack.c.b16 %v4665, %v4661
    %v5126 = vpack.c.b16 %v4666, %v4662
    %v5127 = vpack.c.b16 %v4671, %v4667
    %v5128 = vpack.c.b16 %v4672, %v4668
    %v5129 = vpack.c.b16 %v4673, %v4669
    %v5130 = vpack.c.b16 %v4674, %v4670
    %v5131 = vpack.c.b16 %v4679, %v4675
    %v5132 = vpack.c.b16 %v4680, %v4676
    %v5133 = vpack.c.b16 %v4681, %v4677
    %v5134 = vpack.c.b16 %v4682, %v4678
    %v5135 = vpack.c.b16 %v4687, %v4683
    %v5136 = vpack.c.b16 %v4688, %v4684
    %v5137 = vpack.c.b16 %v4689, %v4685
    %v5138 = vpack.c.b16 %v4690, %v4686
    %v5139 = vpack.c.b16 %v4695, %v4691
    %v5140 = vpack.c.b16 %v4696, %v4692
    %v5141 = vpack.c.b16 %v4697, %v4693
    %v5142 = vpack.c.b16 %v4698, %v4694
    %v5143 = vpack.c.b16 %v4703, %v4699
    %v5144 = vpack.c.b16 %v4704, %v4700
    %v5145 = vpack.c.b16 %v4705, %v4701
    %v5146 = vpack.c.b16 %v4706, %v4702
    %v5147 = vpack.c.b16 %v4711, %v4707
    %v5148 = vpack.c.b16 %v4712, %v4708
    %v5149 = vpack.c.b16 %v4713, %v4709
    %v5150 = vpack.c.b16 %v4714, %v4710
    %v5151 = vpack.c.b16 %v4719, %v4715
    %v5152 = vpack.c.b16 %v4720, %v4716
    %v5153 = vpack.c.b16 %v4721, %v4717
    %v5154 = vpack.c.b16 %v4722, %v4718
    %v5155 = vpack.c.b16 %v4727, %v4723
    %v5156 = vpack.c.b16 %v4728, %v4724
    %v5157 = vpack.c.b16 %v4729, %v4725
    %v5158 = vpack.c.b16 %v4730, %v4726
    %v5159 = vpack.c.b16 %v4735, %v4731
    %v5160 = vpack.c.b16 %v4736, %v4732
    %v5161 = vpack.c.b16 %v4737, %v4733
    %v5162 = vpack.c.b16 %v4738, %v4734
    %v5163 = vpack.c.b16 %v4743, %v4739
    %v5164 = vpack.c.b16 %v4744, %v4740
    %v5165 = vpack.c.b16 %v4745, %v4741
    %v5166 = vpack.c.b16 %v4746, %v4742
    %v5167 = vpack.c.b16 %v4751, %v4747
    %v5168 = vpack.c.b16 %v4752, %v4748
    %v5169 = vpack.c.b16 %v4753, %v4749
    %v5170 = vpack.c.b16 %v4754, %v4750
    %v5171 = vpack.c.b16 %v4759, %v4755
    %v5172 = vpack.c.b16 %v4760, %v4756
    %v5173 = vpack.c.b16 %v4761, %v4757
    %v5174 = vpack.c.b16 %v4762, %v4758
    %v5175 = vpack.c.b16 %v4767, %v4763
    %v5176 = vpack.c.b16 %v4768, %v4764
    %v5177 = vpack.c.b16 %v4769, %v4765
    %v5178 = vpack.c.b16 %v4770, %v4766
    %v5179 = vpack.c.b16 %v4775, %v4771
    %v5180 = vpack.c.b16 %v4776, %v4772
    %v5181 = vpack.c.b16 %v4777, %v4773
    %v5182 = vpack.c.b16 %v4778, %v4774
    %v5183 = vpack.c.b16 %v4783, %v4779
    %v5184 = vpack.c.b16 %v4784, %v4780
    %v5185 = vpack.c.b16 %v4785, %v4781
    %v5186 = vpack.c.b16 %v4786, %v4782
    %v5187 = vpack.c.b16 %v4791, %v4787
    %v5188 = vpack.c.b16 %v4792, %v4788
    %v5189 = vpack.c.b16 %v4793, %v4789
    %v5190 = vpack.c.b16 %v4794, %v4790
    %v5191 = vpack.c.b16 %v4799, %v4795
    %v5192 = vpack.c.b16 %v4800, %v4796
    %v5193 = vpack.c.b16 %v4801, %v4797
    %v5194 = vpack.c.b16 %v4802, %v4798
    %v5195 = vpack.c.b16 %v4807, %v4803
    %v5196 = vpack.c.b16 %v4808, %v4804
    %v5197 = vpack.c.b16 %v4809, %v4805
    %v5198 = vpack.c.b16 %v4810, %v4806
    %v5199 = vpack.c.b16 %v4815, %v4811
    %v5200 = vpack.c.b16 %v4816, %v4812
    %v5201 = vpack.c.b16 %v4817, %v4813
    %v5202 = vpack.c.b16 %v4818, %v4814
    %v5203 = vpack.c.b16 %v4823, %v4819
    %v5204 = vpack.c.b16 %v4824, %v4820
    %v5205 = vpack.c.b16 %v4825, %v4821
    %v5206 = vpack.c.b16 %v4826, %v4822
    %v5207 = vpack.c.b16 %v4831, %v4827
    %v5208 = vpack.c.b16 %v4832, %v4828
    %v5209 = vpack.c.b16 %v4833, %v4829
    %v5210 = vpack.c.b16 %v4834, %v4830
    %v5211 = vpack.c.b16 %v4839, %v4835
    %v5212 = vpack.c.b16 %v4840, %v4836
    %v5213 = vpack.c.b16 %v4841, %v4837
    %v5214 = vpack.c.b16 %v4842, %v4838
    %v5215 = vpack.c.b16 %v4847, %v4843
    %v5216 = vpack.c.b16 %v4848, %v4844
    %v5217 = vpack.c.b16 %v4849, %v4845
    %v5218 = vpack.c.b16 %v4850, %v4846
    %v5219 = vpack.c.b16 %v4855, %v4851
    %v5220 = vpack.c.b16 %v4856, %v4852
    %v5221 = vpack.c.b16 %v4857, %v4853
    %v5222 = vpack.c.b16 %v4858, %v4854
    %v5223 = vpack.c.b16 %v4863, %v4859
    %v5224 = vpack.c.b16 %v4864, %v4860
    %v5225 = vpack.c.b16 %v4865, %v4861
    %v5226 = vpack.c.b16 %v4866, %v4862
    %v5227 = vpack.c.b16 %v4871, %v4867
    %v5228 = vpack.c.b16 %v4872, %v4868
    %v5229 = vpack.c.b16 %v4873, %v4869
    %v5230 = vpack.c.b16 %v4874, %v4870
    %v5231 = vpack.c.b16 %v4879, %v4875
    %v5232 = vpack.c.b16 %v4880, %v4876
    %v5233 = vpack.c.b16 %v4881, %v4877
    %v5234 = vpack.c.b16 %v4882, %v4878
    %v5235 = vpack.c.b16 %v4887, %v4883
    %v5236 = vpack.c.b16 %v4888, %v4884
    %v5237 = vpack.c.b16 %v4889, %v4885
    %v5238 = vpack.c.b16 %v4890, %v4886
    %v5239 = vpack.c.b16 %v4895, %v4891
    %v5240 = vpack.c.b16 %v4896, %v4892
    %v5241 = vpack.c.b16 %v4897, %v4893
    %v5242 = vpack.c.b16 %v4898, %v4894
    %v5243 = vpack.c.b16 %v4903, %v4899
    %v5244 = vpack.c.b16 %v4904, %v4900
    %v5245 = vpack.c.b16 %v4905, %v4901
    %v5246 = vpack.c.b16 %v4906, %v4902
    %v5247 = vpack.c.b16 %v4911, %v4907
    %v5248 = vpack.c.b16 %v4912, %v4908
    %v5249 = vpack.c.b16 %v4913, %v4909
    %v5250 = vpack.c.b16 %v4914, %v4910
    %v5251 = vpack.c.b16 %v4919, %v4915
    %v5252 = vpack.c.b16 %v4920, %v4916
    %v5253 = vpack.c.b16 %v4921, %v4917
    %v5254 = vpack.c.b16 %v4922, %v4918
    %v5255 = vpack.c.b16 %v4927, %v4923
    %v5256 = vpack.c.b16 %v4928, %v4924
    %v5257 = vpack.c.b16 %v4929, %v4925
    %v5258 = vpack.c.b16 %v4930, %v4926
    %v5259 = vpack.c.b16 %v4935, %v4931
    %v5260 = vpack.c.b16 %v4936, %v4932
    %v5261 = vpack.c.b16 %v4937, %v4933
    %v5262 = vpack.c.b16 %v4938, %v4934
    %v5263 = vpack.c.b16 %v4943, %v4939
    %v5264 = vpack.c.b16 %v4944, %v4940
    %v5265 = vpack.c.b16 %v4945, %v4941
    %v5266 = vpack.c.b16 %v4946, %v4942
    %v5267 = vpack.c.b16 %v4951, %v4947
    %v5268 = vpack.c.b16 %v4952, %v4948
    %v5269 = vpack.c.b16 %v4953, %v4949
    %v5270 = vpack.c.b16 %v4954, %v4950
    %v5271 = vpack.c.b16 %v4959, %v4955
    %v5272 = vpack.c.b16 %v4960, %v4956
    %v5273 = vpack.c.b16 %v4961, %v4957
    %v5274 = vpack.c.b16 %v4962, %v4958
    %v5275 = vpack.c.b16 %v4967, %v4963
    %v5276 = vpack.c.b16 %v4968, %v4964
    %v5277 = vpack.c.b16 %v4969, %v4965
    %v5278 = vpack.c.b16 %v4970, %v4966
    %v5279 = vpack.c.b16 %v4975, %v4971
    %v5280 = vpack.c.b16 %v4976, %v4972
    %v5281 = vpack.c.b16 %v4977, %v4973
    %v5282 = vpack.c.b16 %v4978, %v4974
    %v5283 = vpack.c.b16 %v4983, %v4979
    %v5284 = vpack.c.b16 %v4984, %v4980
    %v5285 = vpack.c.b16 %v4985, %v4981
    %v5286 = vpack.c.b16 %v4986, %v4982
    %v5287 = vpack.c.b16 %v4991, %v4987
    %v5288 = vpack.c.b16 %v4992, %v4988
    %v5289 = vpack.c.b16 %v4993, %v4989
    %v5290 = vpack.c.b16 %v4994, %v4990
    %v5291 = vpack.c.b16 %v4999, %v4995
    %v5292 = vpack.c.b16 %v5000, %v4996
    %v5293 = vpack.c.b16 %v5001, %v4997
    %v5294 = vpack.c.b16 %v5002, %v4998
    %v5295 = vpack.c.b16 %v5007, %v5003
    %v5296 = vpack.c.b16 %v5008, %v5004
    %v5297 = vpack.c.b16 %v5009, %v5005
    %v5298 = vpack.c.b16 %v5010, %v5006
    %v5299 = vpack.c.b16 %v5015, %v5011
    %v5300 = vpack.c.b16 %v5016, %v5012
    %v5301 = vpack.c.b16 %v5017, %v5013
    %v5302 = vpack.c.b16 %v5018, %v5014
    %v5303 = vpack.c.b16 %v5023, %v5019
    %v5304 = vpack.c.b16 %v5024, %v5020
    %v5305 = vpack.c.b16 %v5025, %v5021
    %v5306 = vpack.c.b16 %v5026, %v5022
    %v5307 = vpack.c.b16 %v5031, %v5027
    %v5308 = vpack.c.b16 %v5032, %v5028
    %v5309 = vpack.c.b16 %v5033, %v5029
    %v5310 = vpack.c.b16 %v5034, %v5030
    %v5311 = vpack.c.b16 %v5039, %v5035
    %v5312 = vpack.c.b16 %v5040, %v5036
    %v5313 = vpack.c.b16 %v5041, %v5037
    %v5314 = vpack.c.b16 %v5042, %v5038
    %v5315 = vpack.c.b16 %v5047, %v5043
    %v5316 = vpack.c.b16 %v5048, %v5044
    %v5317 = vpack.c.b16 %v5049, %v5045
    %v5318 = vpack.c.b16 %v5050, %v5046
    %v5319 = vpack.c.b16 %v5055, %v5051
    %v5320 = vpack.c.b16 %v5056, %v5052
    %v5321 = vpack.c.b16 %v5057, %v5053
    %v5322 = vpack.c.b16 %v5058, %v5054
    %v5323 = vpack.c.b16 %v5063, %v5059
    %v5324 = vpack.c.b16 %v5064, %v5060
    %v5325 = vpack.c.b16 %v5065, %v5061
    %v5326 = vpack.c.b16 %v5066, %v5062
    %v5327 = vpack.c.b16 %v5071, %v5067
    %v5328 = vpack.c.b16 %v5072, %v5068
    %v5329 = vpack.c.b16 %v5073, %v5069
    %v5330 = vpack.c.b16 %v5074, %v5070
    %5587 = vmatprep.subr.bf16.mxu0 %v5076
    %5588 = vmatpush1.bf16.msra.mxu0 %v5075
    %5589 = vmatprep.subr.bf16.mxu0 %v5080
    %5590 = vmatpush1.bf16.msra.mxu0 %v5079
    %5591 = vmatprep.subr.bf16.mxu0 %v5084
    %5592 = vmatpush1.bf16.msra.mxu0 %v5083
    %5593 = vmatprep.subr.bf16.mxu0 %v5088
    %5594 = vmatpush1.bf16.msra.mxu0 %v5087
    %5595 = vmatprep.subr.bf16.mxu0 %v5092
    %5596 = vmatpush1.bf16.msra.mxu0 %v5091
    %5597 = vmatprep.subr.bf16.mxu0 %v5096
    %5598 = vmatpush1.bf16.msra.mxu0 %v5095
    %5599 = vmatprep.subr.bf16.mxu0 %v5100
    %5600 = vmatpush1.bf16.msra.mxu0 %v5099
    %5601 = vmatprep.subr.bf16.mxu0 %v5104
    %5602 = vmatpush1.bf16.msra.mxu0 %v5103
    %5603 = vmatprep.subr.bf16.mxu0 %v5108
    %5604 = vmatpush1.bf16.msra.mxu0 %v5107
    %5605 = vmatprep.subr.bf16.mxu0 %v5112
    %5606 = vmatpush1.bf16.msra.mxu0 %v5111
    %5607 = vmatprep.subr.bf16.mxu0 %v5116
    %5608 = vmatpush1.bf16.msra.mxu0 %v5115
    %5609 = vmatprep.subr.bf16.mxu0 %v5120
    %5610 = vmatpush1.bf16.msra.mxu0 %v5119
    %5611 = vmatprep.subr.bf16.mxu0 %v5124
    %5612 = vmatpush1.bf16.msra.mxu0 %v5123
    %5613 = vmatprep.subr.bf16.mxu0 %v5128
    %5614 = vmatpush1.bf16.msra.mxu0 %v5127
    %5615 = vmatprep.subr.bf16.mxu0 %v5132
    %5616 = vmatpush1.bf16.msra.mxu0 %v5131
    %5617 = vmatprep.subr.bf16.mxu0 %v5136
    %5618 = vmatpush1.bf16.msra.mxu0 %v5135
    %5619 = vmatprep.mubr.bf16.mxu0 %v4044
    %5620 = vmatmul.mubr.bf16.gmra.mrb[0].mxu0 %v4043
    %v5621 = vpop.f32.mrb[0].mxu0
    %v5622 = vadd.f32 0.0, %v5621
    %v5623 = vpop.f32.mrb[0].mxu0
    %v5624 = vadd.f32 0.0, %v5623
    %v5625 = vpop.f32.mrb[0].mxu0
    %v5626 = vpop.f32.mrb[0].mxu0
    %5627 = vdwg.mxu0
    %5628 = vmatprep.subr.bf16.mxu0 %v5140
    %5629 = vmatpush1.bf16.msra.mxu0 %v5139
    %5630 = vmatprep.subr.bf16.mxu0 %v5144
    %5631 = vmatpush1.bf16.msra.mxu0 %v5143
    %5632 = vmatprep.subr.bf16.mxu0 %v5148
    %5633 = vmatpush1.bf16.msra.mxu0 %v5147
    %5634 = vmatprep.subr.bf16.mxu0 %v5152
    %5635 = vmatpush1.bf16.msra.mxu0 %v5151
    %5636 = vmatprep.subr.bf16.mxu0 %v5156
    %5637 = vmatpush1.bf16.msra.mxu0 %v5155
    %5638 = vmatprep.subr.bf16.mxu0 %v5160
    %5639 = vmatpush1.bf16.msra.mxu0 %v5159
    %5640 = vmatprep.subr.bf16.mxu0 %v5164
    %5641 = vmatpush1.bf16.msra.mxu0 %v5163
    %5642 = vmatprep.subr.bf16.mxu0 %v5168
    %5643 = vmatpush1.bf16.msra.mxu0 %v5167
    %5644 = vmatprep.subr.bf16.mxu0 %v5172
    %5645 = vmatpush1.bf16.msra.mxu0 %v5171
    %5646 = vmatprep.subr.bf16.mxu0 %v5176
    %5647 = vmatpush1.bf16.msra.mxu0 %v5175
    %5648 = vmatprep.subr.bf16.mxu0 %v5180
    %5649 = vmatpush1.bf16.msra.mxu0 %v5179
    %5650 = vmatprep.subr.bf16.mxu0 %v5184
    %5651 = vmatpush1.bf16.msra.mxu0 %v5183
    %5652 = vmatprep.subr.bf16.mxu0 %v5188
    %5653 = vmatpush1.bf16.msra.mxu0 %v5187
    %5654 = vmatprep.subr.bf16.mxu0 %v5192
    %5655 = vmatpush1.bf16.msra.mxu0 %v5191
    %5656 = vmatprep.subr.bf16.mxu0 %v5196
    %5657 = vmatpush1.bf16.msra.mxu0 %v5195
    %5658 = vmatprep.subr.bf16.mxu0 %v5200
    %5659 = vmatpush1.bf16.msra.mxu0 %v5199
    %5660 = vmatprep.mubr.bf16.mxu0 %v4046
    %5661 = vmatmul.mubr.bf16.gmra.mrb[0].mxu0 %v4045
    %v5662 = vpop.f32.mrb[0].mxu0
    %v5663 = vadd.f32 %v5622, %v5662
    %v5664 = vpop.f32.mrb[0].mxu0
    %v5665 = vadd.f32 %v5624, %v5664
    %v5666 = vpop.f32.mrb[0].mxu0
    %v5667 = vpop.f32.mrb[0].mxu0
    %5668 = vdwg.mxu0
    %5669 = vmatprep.subr.bf16.mxu0 %v5204
    %5670 = vmatpush1.bf16.msra.mxu0 %v5203
    %5671 = vmatprep.subr.bf16.mxu0 %v5208
    %5672 = vmatpush1.bf16.msra.mxu0 %v5207
    %5673 = vmatprep.subr.bf16.mxu0 %v5212
    %5674 = vmatpush1.bf16.msra.mxu0 %v5211
    %5675 = vmatprep.subr.bf16.mxu0 %v5216
    %5676 = vmatpush1.bf16.msra.mxu0 %v5215
    %5677 = vmatprep.subr.bf16.mxu0 %v5220
    %5678 = vmatpush1.bf16.msra.mxu0 %v5219
    %5679 = vmatprep.subr.bf16.mxu0 %v5224
    %5680 = vmatpush1.bf16.msra.mxu0 %v5223
    %5681 = vmatprep.subr.bf16.mxu0 %v5228
    %5682 = vmatpush1.bf16.msra.mxu0 %v5227
    %5683 = vmatprep.subr.bf16.mxu0 %v5232
    %5684 = vmatpush1.bf16.msra.mxu0 %v5231
    %5685 = vmatprep.subr.bf16.mxu0 %v5236
    %5686 = vmatpush1.bf16.msra.mxu0 %v5235
    %5687 = vmatprep.subr.bf16.mxu0 %v5240
    %5688 = vmatpush1.bf16.msra.mxu0 %v5239
    %5689 = vmatprep.subr.bf16.mxu0 %v5244
    %5690 = vmatpush1.bf16.msra.mxu0 %v5243
    %5691 = vmatprep.subr.bf16.mxu0 %v5248
    %5692 = vmatpush1.bf16.msra.mxu0 %v5247
    %5693 = vmatprep.subr.bf16.mxu0 %v5252
    %5694 = vmatpush1.bf16.msra.mxu0 %v5251
    %5695 = vmatprep.subr.bf16.mxu0 %v5256
    %5696 = vmatpush1.bf16.msra.mxu0 %v5255
    %5697 = vmatprep.subr.bf16.mxu0 %v5260
    %5698 = vmatpush1.bf16.msra.mxu0 %v5259
    %5699 = vmatprep.subr.bf16.mxu0 %v5264
    %5700 = vmatpush1.bf16.msra.mxu0 %v5263
    %5701 = vmatprep.mubr.bf16.mxu0 %v4048
    %5702 = vmatmul.mubr.bf16.gmra.mrb[0].mxu0 %v4047
    %v5703 = vpop.f32.mrb[0].mxu0
    %v5704 = vadd.f32 %v5663, %v5703
    %v5705 = vpop.f32.mrb[0].mxu0
    %v5706 = vadd.f32 %v5665, %v5705
    %v5707 = vpop.f32.mrb[0].mxu0
    %v5708 = vpop.f32.mrb[0].mxu0
    %5709 = vdwg.mxu0
    %5710 = vmatprep.subr.bf16.mxu0 %v5268
    %5711 = vmatpush1.bf16.msra.mxu0 %v5267
    %5712 = vmatprep.subr.bf16.mxu0 %v5272
    %5713 = vmatpush1.bf16.msra.mxu0 %v5271
    %5714 = vmatprep.subr.bf16.mxu0 %v5276
    %5715 = vmatpush1.bf16.msra.mxu0 %v5275
    %5716 = vmatprep.subr.bf16.mxu0 %v5280
    %5717 = vmatpush1.bf16.msra.mxu0 %v5279
    %5718 = vmatprep.subr.bf16.mxu0 %v5284
    %5719 = vmatpush1.bf16.msra.mxu0 %v5283
    %5720 = vmatprep.subr.bf16.mxu0 %v5288
    %5721 = vmatpush1.bf16.msra.mxu0 %v5287
    %5722 = vmatprep.subr.bf16.mxu0 %v5292
    %5723 = vmatpush1.bf16.msra.mxu0 %v5291
    %5724 = vmatprep.subr.bf16.mxu0 %v5296
    %5725 = vmatpush1.bf16.msra.mxu0 %v5295
    %5726 = vmatprep.subr.bf16.mxu0 %v5300
    %5727 = vmatpush1.bf16.msra.mxu0 %v5299
    %5728 = vmatprep.subr.bf16.mxu0 %v5304
    %5729 = vmatpush1.bf16.msra.mxu0 %v5303
    %5730 = vmatprep.subr.bf16.mxu0 %v5308
    %5731 = vmatpush1.bf16.msra.mxu0 %v5307
    %5732 = vmatprep.subr.bf16.mxu0 %v5312
    %5733 = vmatpush1.bf16.msra.mxu0 %v5311
    %5734 = vmatprep.subr.bf16.mxu0 %v5316
    %5735 = vmatpush1.bf16.msra.mxu0 %v5315
    %5736 = vmatprep.subr.bf16.mxu0 %v5320
    %5737 = vmatpush1.bf16.msra.mxu0 %v5319
    %5738 = vmatprep.subr.bf16.mxu0 %v5324
    %5739 = vmatpush1.bf16.msra.mxu0 %v5323
    %5740 = vmatprep.subr.bf16.mxu0 %v5328
    %5741 = vmatpush1.bf16.msra.mxu0 %v5327
    %5742 = vmatprep.mubr.bf16.mxu0 %v4050
    %5743 = vmatmul.mubr.bf16.gmra.mrb[0].mxu0 %v4049
    %v5744 = vpop.f32.mrb[0].mxu0
    %v5745 = vadd.f32 %v5704, %v5744
    %v5746 = vpop.f32.mrb[0].mxu0
    %v5747 = vadd.f32 %v5706, %v5746
    %v5748 = vpop.f32.mrb[0].mxu0
    %v5749 = vpop.f32.mrb[0].mxu0
    %5750 = vdwg.mxu0
    %5751 = vmatprep.subr.bf16.mxu0 %v5078
    %5752 = vmatpush1.bf16.msra.mxu0 %v5077
    %5753 = vmatprep.subr.bf16.mxu0 %v5082
    %5754 = vmatpush1.bf16.msra.mxu0 %v5081
    %5755 = vmatprep.subr.bf16.mxu0 %v5086
    %5756 = vmatpush1.bf16.msra.mxu0 %v5085
    %5757 = vmatprep.subr.bf16.mxu0 %v5090
    %5758 = vmatpush1.bf16.msra.mxu0 %v5089
    %5759 = vmatprep.subr.bf16.mxu0 %v5094
    %5760 = vmatpush1.bf16.msra.mxu0 %v5093
    %5761 = vmatprep.subr.bf16.mxu0 %v5098
    %5762 = vmatpush1.bf16.msra.mxu0 %v5097
    %5763 = vmatprep.subr.bf16.mxu0 %v5102
    %5764 = vmatpush1.bf16.msra.mxu0 %v5101
    %5765 = vmatprep.subr.bf16.mxu0 %v5106
    %5766 = vmatpush1.bf16.msra.mxu0 %v5105
    %5767 = vmatprep.subr.bf16.mxu0 %v5110
    %5768 = vmatpush1.bf16.msra.mxu0 %v5109
    %5769 = vmatprep.subr.bf16.mxu0 %v5114
    %5770 = vmatpush1.bf16.msra.mxu0 %v5113
    %5771 = vmatprep.subr.bf16.mxu0 %v5118
    %5772 = vmatpush1.bf16.msra.mxu0 %v5117
    %5773 = vmatprep.subr.bf16.mxu0 %v5122
    %5774 = vmatpush1.bf16.msra.mxu0 %v5121
    %5775 = vmatprep.subr.bf16.mxu0 %v5126
    %5776 = vmatpush1.bf16.msra.mxu0 %v5125
    %5777 = vmatprep.subr.bf16.mxu0 %v5130
    %5778 = vmatpush1.bf16.msra.mxu0 %v5129
    %5779 = vmatprep.subr.bf16.mxu0 %v5134
    %5780 = vmatpush1.bf16.msra.mxu0 %v5133
    %5781 = vmatprep.subr.bf16.mxu0 %v5138
    %5782 = vmatpush1.bf16.msra.mxu0 %v5137
    %5783 = vmatprep.mubr.bf16.mxu0 %v4044
    %5784 = vmatmul.mubr.bf16.gmra.mrb[0].mxu0 %v4043
    %v5785 = vpop.f32.mrb[0].mxu0
    %v5786 = vadd.f32 0.0, %v5785
    %v5787 = vpop.f32.mrb[0].mxu0
    %v5788 = vadd.f32 0.0, %v5787
    %v5789 = vpop.f32.mrb[0].mxu0
    %v5790 = vpop.f32.mrb[0].mxu0
    %5791 = vdwg.mxu0
    %5792 = vmatprep.subr.bf16.mxu0 %v5142
    %5793 = vmatpush1.bf16.msra.mxu0 %v5141
    %5794 = vmatprep.subr.bf16.mxu0 %v5146
    %5795 = vmatpush1.bf16.msra.mxu0 %v5145
    %5796 = vmatprep.subr.bf16.mxu0 %v5150
    %5797 = vmatpush1.bf16.msra.mxu0 %v5149
    %5798 = vmatprep.subr.bf16.mxu0 %v5154
    %5799 = vmatpush1.bf16.msra.mxu0 %v5153
    %5800 = vmatprep.subr.bf16.mxu0 %v5158
    %5801 = vmatpush1.bf16.msra.mxu0 %v5157
    %5802 = vmatprep.subr.bf16.mxu0 %v5162
    %5803 = vmatpush1.bf16.msra.mxu0 %v5161
    %5804 = vmatprep.subr.bf16.mxu0 %v5166
    %5805 = vmatpush1.bf16.msra.mxu0 %v5165
    %5806 = vmatprep.subr.bf16.mxu0 %v5170
    %5807 = vmatpush1.bf16.msra.mxu0 %v5169
    %5808 = vmatprep.subr.bf16.mxu0 %v5174
    %5809 = vmatpush1.bf16.msra.mxu0 %v5173
    %5810 = vmatprep.subr.bf16.mxu0 %v5178
    %5811 = vmatpush1.bf16.msra.mxu0 %v5177
    %5812 = vmatprep.subr.bf16.mxu0 %v5182
    %5813 = vmatpush1.bf16.msra.mxu0 %v5181
    %5814 = vmatprep.subr.bf16.mxu0 %v5186
    %5815 = vmatpush1.bf16.msra.mxu0 %v5185
    %5816 = vmatprep.subr.bf16.mxu0 %v5190
    %5817 = vmatpush1.bf16.msra.mxu0 %v5189
    %5818 = vmatprep.subr.bf16.mxu0 %v5194
    %5819 = vmatpush1.bf16.msra.mxu0 %v5193
    %5820 = vmatprep.subr.bf16.mxu0 %v5198
    %5821 = vmatpush1.bf16.msra.mxu0 %v5197
    %5822 = vmatprep.subr.bf16.mxu0 %v5202
    %5823 = vmatpush1.bf16.msra.mxu0 %v5201
    %5824 = vmatprep.mubr.bf16.mxu0 %v4046
    %5825 = vmatmul.mubr.bf16.gmra.mrb[0].mxu0 %v4045
    %v5826 = vpop.f32.mrb[0].mxu0
    %v5827 = vadd.f32 %v5786, %v5826
    %v5828 = vpop.f32.mrb[0].mxu0
    %v5829 = vadd.f32 %v5788, %v5828
    %v5830 = vpop.f32.mrb[0].mxu0
    %v5831 = vpop.f32.mrb[0].mxu0
    %5832 = vdwg.mxu0
    %5833 = vmatprep.subr.bf16.mxu0 %v5206
    %5834 = vmatpush1.bf16.msra.mxu0 %v5205
    %5835 = vmatprep.subr.bf16.mxu0 %v5210
    %5836 = vmatpush1.bf16.msra.mxu0 %v5209
    %5837 = vmatprep.subr.bf16.mxu0 %v5214
    %5838 = vmatpush1.bf16.msra.mxu0 %v5213
    %5839 = vmatprep.subr.bf16.mxu0 %v5218
    %5840 = vmatpush1.bf16.msra.mxu0 %v5217
    %5841 = vmatprep.subr.bf16.mxu0 %v5222
    %5842 = vmatpush1.bf16.msra.mxu0 %v5221
    %5843 = vmatprep.subr.bf16.mxu0 %v5226
    %5844 = vmatpush1.bf16.msra.mxu0 %v5225
    %5845 = vmatprep.subr.bf16.mxu0 %v5230
    %5846 = vmatpush1.bf16.msra.mxu0 %v5229
    %5847 = vmatprep.subr.bf16.mxu0 %v5234
    %5848 = vmatpush1.bf16.msra.mxu0 %v5233
    %5849 = vmatprep.subr.bf16.mxu0 %v5238
    %5850 = vmatpush1.bf16.msra.mxu0 %v5237
    %5851 = vmatprep.subr.bf16.mxu0 %v5242
    %5852 = vmatpush1.bf16.msra.mxu0 %v5241
    %5853 = vmatprep.subr.bf16.mxu0 %v5246
    %5854 = vmatpush1.bf16.msra.mxu0 %v5245
    %5855 = vmatprep.subr.bf16.mxu0 %v5250
    %5856 = vmatpush1.bf16.msra.mxu0 %v5249
    %5857 = vmatprep.subr.bf16.mxu0 %v5254
    %5858 = vmatpush1.bf16.msra.mxu0 %v5253
    %5859 = vmatprep.subr.bf16.mxu0 %v5258
    %5860 = vmatpush1.bf16.msra.mxu0 %v5257
    %5861 = vmatprep.subr.bf16.mxu0 %v5262
    %5862 = vmatpush1.bf16.msra.mxu0 %v5261
    %5863 = vmatprep.subr.bf16.mxu0 %v5266
    %5864 = vmatpush1.bf16.msra.mxu0 %v5265
    %5865 = vmatprep.mubr.bf16.mxu0 %v4048
    %5866 = vmatmul.mubr.bf16.gmra.mrb[0].mxu0 %v4047
    %v5867 = vpop.f32.mrb[0].mxu0
    %v5868 = vadd.f32 %v5827, %v5867
    %v5869 = vpop.f32.mrb[0].mxu0
    %v5870 = vadd.f32 %v5829, %v5869
    %v5871 = vpop.f32.mrb[0].mxu0
    %v5872 = vpop.f32.mrb[0].mxu0
    %5873 = vdwg.mxu0
    %5874 = vmatprep.subr.bf16.mxu0 %v5270
    %5875 = vmatpush1.bf16.msra.mxu0 %v5269
    %5876 = vmatprep.subr.bf16.mxu0 %v5274
    %5877 = vmatpush1.bf16.msra.mxu0 %v5273
    %5878 = vmatprep.subr.bf16.mxu0 %v5278
    %5879 = vmatpush1.bf16.msra.mxu0 %v5277
    %5880 = vmatprep.subr.bf16.mxu0 %v5282
    %5881 = vmatpush1.bf16.msra.mxu0 %v5281
    %5882 = vmatprep.subr.bf16.mxu0 %v5286
    %5883 = vmatpush1.bf16.msra.mxu0 %v5285
    %5884 = vmatprep.subr.bf16.mxu0 %v5290
    %5885 = vmatpush1.bf16.msra.mxu0 %v5289
    %5886 = vmatprep.subr.bf16.mxu0 %v5294
    %5887 = vmatpush1.bf16.msra.mxu0 %v5293
    %5888 = vmatprep.subr.bf16.mxu0 %v5298
    %5889 = vmatpush1.bf16.msra.mxu0 %v5297
    %5890 = vmatprep.subr.bf16.mxu0 %v5302
    %5891 = vmatpush1.bf16.msra.mxu0 %v5301
    %5892 = vmatprep.subr.bf16.mxu0 %v5306
    %5893 = vmatpush1.bf16.msra.mxu0 %v5305
    %5894 = vmatprep.subr.bf16.mxu0 %v5310
    %5895 = vmatpush1.bf16.msra.mxu0 %v5309
    %5896 = vmatprep.subr.bf16.mxu0 %v5314
    %5897 = vmatpush1.bf16.msra.mxu0 %v5313
    %5898 = vmatprep.subr.bf16.mxu0 %v5318
    %5899 = vmatpush1.bf16.msra.mxu0 %v5317
    %5900 = vmatprep.subr.bf16.mxu0 %v5322
    %5901 = vmatpush1.bf16.msra.mxu0 %v5321
    %5902 = vmatprep.subr.bf16.mxu0 %v5326
    %5903 = vmatpush1.bf16.msra.mxu0 %v5325
    %5904 = vmatprep.subr.bf16.mxu0 %v5330
    %5905 = vmatpush1.bf16.msra.mxu0 %v5329
    %5906 = vmatprep.mubr.bf16.mxu0 %v4050
    %5907 = vmatmul.mubr.bf16.gmra.mrb[0].mxu0 %v4049
    %v5908 = vpop.f32.mrb[0].mxu0
    %v5909 = vadd.f32 %v5868, %v5908
    %v5910 = vpop.f32.mrb[0].mxu0
    %v5911 = vadd.f32 %v5870, %v5910
    %v5912 = vpop.f32.mrb[0].mxu0
    %v5913 = vpop.f32.mrb[0].mxu0
    %5914 = vdwg.mxu0
    %v5915 = vpack.c.bf16 %v5745, %v5745
    %v5916 = vpack.c.bf16 %v5747, %v5747
    %v5917 = vpack.c.bf16 %v5909, %v5909
    %v5918 = vpack.c.bf16 %v5911, %v5911
    %v5919 = vld [vmem:[#allocation10] sm:$0xf]
    %v5921 = vlaneseq
    %v5922 = vshrl.u32 %v5921, 7
    %v5923 = vsub.s32 0, %v5922
    %v5924 = vrot.slane %v5919, %v5923
    %v5925 = vlaneseq
    %v5926 = vshrl.u32 %v5925, 7
    %v5927 = vsub.s32 1, %v5926
    %v5928 = vrot.slane %v5919, %v5927
    %v5929 = vlaneseq
    %v5930 = vshrl.u32 %v5929, 7
    %v5931 = vsub.s32 2, %v5930
    %v5932 = vrot.slane %v5919, %v5931
    %v5933 = vlaneseq
    %v5934 = vshrl.u32 %v5933, 7
    %v5935 = vsub.s32 3, %v5934
    %v5936 = vrot.slane %v5919, %v5935
    %v5941 = vpack.c.bf16 %v5924, %v5924
    %v5942 = vpack.c.bf16 %v5928, %v5928
    %v5943 = vpack.c.bf16 %v5932, %v5932
    %v5944 = vpack.c.bf16 %v5936, %v5936
    %v5946 = vpack.i.b16 %v5941, %v5941
    %v5948 = vlaneseq
    %v5949 = vshrl.u32 %v5948, 7
    %v5950 = vsub.s32 0, %v5949
    %v5951 = vrot.slane %v5946, %v5950
    %v5953 = vpack.i.b16 %v5942, %v5942
    %v5955 = vlaneseq
    %v5956 = vshrl.u32 %v5955, 7
    %v5957 = vsub.s32 0, %v5956
    %v5958 = vrot.slane %v5953, %v5957
    %v5960 = vpack.i.b16 %v5943, %v5943
    %v5962 = vlaneseq
    %v5963 = vshrl.u32 %v5962, 7
    %v5964 = vsub.s32 0, %v5963
    %v5965 = vrot.slane %v5960, %v5964
    %v5967 = vpack.i.b16 %v5944, %v5944
    %v5969 = vlaneseq
    %v5970 = vshrl.u32 %v5969, 7
    %v5971 = vsub.s32 0, %v5970
    %v5972 = vrot.slane %v5967, %v5971
    %v5973 = vadd.bf16 %v5915, %v5951
    %v5974 = vadd.bf16 %v5916, %v5958
    %v5975 = vadd.bf16 %v5917, %v5965
    %v5976 = vadd.bf16 %v5918, %v5972
    %v5977 = vmax.bf16 %v5973, 0
    %v5978 = vmax.bf16 %v5974, 0
    %v5979 = vmax.bf16 %v5975, 0
    %v5980 = vmax.bf16 %v5976, 0
    %v5981 = vld [vmem:[#allocation11] sm:$0xff]
    %v5982 = vld [vmem:[#allocation11 + $0x8] sm:$0xff]
    %v5983 = vld [vmem:[#allocation11 + $0x10] sm:$0xff]
    %v5984 = vld [vmem:[#allocation11 + $0x18] sm:$0xff]
    %v5985 = vld [vmem:[#allocation11 + $0x20] sm:$0xff]
    %v5986 = vld [vmem:[#allocation11 + $0x28] sm:$0xff]
    %v5987 = vld [vmem:[#allocation11 + $0x30] sm:$0xff]
    %v5988 = vld [vmem:[#allocation11 + $0x38] sm:$0xff]
    %v5989 = vld [vmem:[#allocation11 + $0x40] sm:$0xff]
    %v5990 = vld [vmem:[#allocation11 + $0x48] sm:$0xff]
    %v5991 = vld [vmem:[#allocation11 + $0x50] sm:$0xff]
    %v5992 = vld [vmem:[#allocation11 + $0x58] sm:$0xff]
    %v5993 = vld [vmem:[#allocation11 + $0x60] sm:$0xff]
    %v5994 = vld [vmem:[#allocation11 + $0x68] sm:$0xff]
    %v5995 = vld [vmem:[#allocation11 + $0x70] sm:$0xff]
    %v5996 = vld [vmem:[#allocation11 + $0x78] sm:$0xff]
    %v5997 = vld [vmem:[#allocation11 + $0x80] sm:$0xff]
    %v5998 = vld [vmem:[#allocation11 + $0x88] sm:$0xff]
    %v5999 = vld [vmem:[#allocation11 + $0x90] sm:$0xff]
    %v6000 = vld [vmem:[#allocation11 + $0x98] sm:$0xff]
    %v6001 = vld [vmem:[#allocation11 + $0xa0] sm:$0xff]
    %v6002 = vld [vmem:[#allocation11 + $0xa8] sm:$0xff]
    %v6003 = vld [vmem:[#allocation11 + $0xb0] sm:$0xff]
    %v6004 = vld [vmem:[#allocation11 + $0xb8] sm:$0xff]
    %v6005 = vld [vmem:[#allocation11 + $0xc0] sm:$0xff]
    %v6006 = vld [vmem:[#allocation11 + $0xc8] sm:$0xff]
    %v6007 = vld [vmem:[#allocation11 + $0xd0] sm:$0xff]
    %v6008 = vld [vmem:[#allocation11 + $0xd8] sm:$0xff]
    %v6009 = vld [vmem:[#allocation11 + $0xe0] sm:$0xff]
    %v6010 = vld [vmem:[#allocation11 + $0xe8] sm:$0xff]
    %v6011 = vld [vmem:[#allocation11 + $0xf0] sm:$0xff]
    %v6012 = vld [vmem:[#allocation11 + $0xf8] sm:$0xff]
    %v6013 = vld [vmem:[#allocation11 + $0x100] sm:$0xff]
    %v6014 = vld [vmem:[#allocation11 + $0x108] sm:$0xff]
    %v6015 = vld [vmem:[#allocation11 + $0x110] sm:$0xff]
    %v6016 = vld [vmem:[#allocation11 + $0x118] sm:$0xff]
    %v6017 = vld [vmem:[#allocation11 + $0x120] sm:$0xff]
    %v6018 = vld [vmem:[#allocation11 + $0x128] sm:$0xff]
    %v6019 = vld [vmem:[#allocation11 + $0x130] sm:$0xff]
    %v6020 = vld [vmem:[#allocation11 + $0x138] sm:$0xff]
    %v6021 = vld [vmem:[#allocation11 + $0x140] sm:$0xff]
    %v6022 = vld [vmem:[#allocation11 + $0x148] sm:$0xff]
    %v6023 = vld [vmem:[#allocation11 + $0x150] sm:$0xff]
    %v6024 = vld [vmem:[#allocation11 + $0x158] sm:$0xff]
    %v6025 = vld [vmem:[#allocation11 + $0x160] sm:$0xff]
    %v6026 = vld [vmem:[#allocation11 + $0x168] sm:$0xff]
    %v6027 = vld [vmem:[#allocation11 + $0x170] sm:$0xff]
    %v6028 = vld [vmem:[#allocation11 + $0x178] sm:$0xff]
    %v6029 = vld [vmem:[#allocation11 + $0x180] sm:$0xff]
    %v6030 = vld [vmem:[#allocation11 + $0x188] sm:$0xff]
    %v6031 = vld [vmem:[#allocation11 + $0x190] sm:$0xff]
    %v6032 = vld [vmem:[#allocation11 + $0x198] sm:$0xff]
    %v6033 = vld [vmem:[#allocation11 + $0x1a0] sm:$0xff]
    %v6034 = vld [vmem:[#allocation11 + $0x1a8] sm:$0xff]
    %v6035 = vld [vmem:[#allocation11 + $0x1b0] sm:$0xff]
    %v6036 = vld [vmem:[#allocation11 + $0x1b8] sm:$0xff]
    %v6037 = vld [vmem:[#allocation11 + $0x1c0] sm:$0xff]
    %v6038 = vld [vmem:[#allocation11 + $0x1c8] sm:$0xff]
    %v6039 = vld [vmem:[#allocation11 + $0x1d0] sm:$0xff]
    %v6040 = vld [vmem:[#allocation11 + $0x1d8] sm:$0xff]
    %v6041 = vld [vmem:[#allocation11 + $0x1e0] sm:$0xff]
    %v6042 = vld [vmem:[#allocation11 + $0x1e8] sm:$0xff]
    %v6043 = vld [vmem:[#allocation11 + $0x1f0] sm:$0xff]
    %v6044 = vld [vmem:[#allocation11 + $0x1f8] sm:$0xff]
    %v6109 = vunpack.c.l.b16 %v5981
    %v6110 = vunpack.c.h.b16 %v5981
    %v6111 = vunpack.c.l.b16 %v5982
    %v6112 = vunpack.c.h.b16 %v5982
    %v6113 = vunpack.c.l.b16 %v5983
    %v6114 = vunpack.c.h.b16 %v5983
    %v6115 = vunpack.c.l.b16 %v5984
    %v6116 = vunpack.c.h.b16 %v5984
    %v6117 = vunpack.c.l.b16 %v5985
    %v6118 = vunpack.c.h.b16 %v5985
    %v6119 = vunpack.c.l.b16 %v5986
    %v6120 = vunpack.c.h.b16 %v5986
    %v6121 = vunpack.c.l.b16 %v5987
    %v6122 = vunpack.c.h.b16 %v5987
    %v6123 = vunpack.c.l.b16 %v5988
    %v6124 = vunpack.c.h.b16 %v5988
    %v6125 = vunpack.c.l.b16 %v5989
    %v6126 = vunpack.c.h.b16 %v5989
    %v6127 = vunpack.c.l.b16 %v5990
    %v6128 = vunpack.c.h.b16 %v5990
    %v6129 = vunpack.c.l.b16 %v5991
    %v6130 = vunpack.c.h.b16 %v5991
    %v6131 = vunpack.c.l.b16 %v5992
    %v6132 = vunpack.c.h.b16 %v5992
    %v6133 = vunpack.c.l.b16 %v5993
    %v6134 = vunpack.c.h.b16 %v5993
    %v6135 = vunpack.c.l.b16 %v5994
    %v6136 = vunpack.c.h.b16 %v5994
    %v6137 = vunpack.c.l.b16 %v5995
    %v6138 = vunpack.c.h.b16 %v5995
    %v6139 = vunpack.c.l.b16 %v5996
    %v6140 = vunpack.c.h.b16 %v5996
    %v6141 = vunpack.c.l.b16 %v5997
    %v6142 = vunpack.c.h.b16 %v5997
    %v6143 = vunpack.c.l.b16 %v5998
    %v6144 = vunpack.c.h.b16 %v5998
    %v6145 = vunpack.c.l.b16 %v5999
    %v6146 = vunpack.c.h.b16 %v5999
    %v6147 = vunpack.c.l.b16 %v6000
    %v6148 = vunpack.c.h.b16 %v6000
    %v6149 = vunpack.c.l.b16 %v6001
    %v6150 = vunpack.c.h.b16 %v6001
    %v6151 = vunpack.c.l.b16 %v6002
    %v6152 = vunpack.c.h.b16 %v6002
    %v6153 = vunpack.c.l.b16 %v6003
    %v6154 = vunpack.c.h.b16 %v6003
    %v6155 = vunpack.c.l.b16 %v6004
    %v6156 = vunpack.c.h.b16 %v6004
    %v6157 = vunpack.c.l.b16 %v6005
    %v6158 = vunpack.c.h.b16 %v6005
    %v6159 = vunpack.c.l.b16 %v6006
    %v6160 = vunpack.c.h.b16 %v6006
    %v6161 = vunpack.c.l.b16 %v6007
    %v6162 = vunpack.c.h.b16 %v6007
    %v6163 = vunpack.c.l.b16 %v6008
    %v6164 = vunpack.c.h.b16 %v6008
    %v6165 = vunpack.c.l.b16 %v6009
    %v6166 = vunpack.c.h.b16 %v6009
    %v6167 = vunpack.c.l.b16 %v6010
    %v6168 = vunpack.c.h.b16 %v6010
    %v6169 = vunpack.c.l.b16 %v6011
    %v6170 = vunpack.c.h.b16 %v6011
    %v6171 = vunpack.c.l.b16 %v6012
    %v6172 = vunpack.c.h.b16 %v6012
    %v6173 = vunpack.c.l.b16 %v6013
    %v6174 = vunpack.c.h.b16 %v6013
    %v6175 = vunpack.c.l.b16 %v6014
    %v6176 = vunpack.c.h.b16 %v6014
    %v6177 = vunpack.c.l.b16 %v6015
    %v6178 = vunpack.c.h.b16 %v6015
    %v6179 = vunpack.c.l.b16 %v6016
    %v6180 = vunpack.c.h.b16 %v6016
    %v6181 = vunpack.c.l.b16 %v6017
    %v6182 = vunpack.c.h.b16 %v6017
    %v6183 = vunpack.c.l.b16 %v6018
    %v6184 = vunpack.c.h.b16 %v6018
    %v6185 = vunpack.c.l.b16 %v6019
    %v6186 = vunpack.c.h.b16 %v6019
    %v6187 = vunpack.c.l.b16 %v6020
    %v6188 = vunpack.c.h.b16 %v6020
    %v6189 = vunpack.c.l.b16 %v6021
    %v6190 = vunpack.c.h.b16 %v6021
    %v6191 = vunpack.c.l.b16 %v6022
    %v6192 = vunpack.c.h.b16 %v6022
    %v6193 = vunpack.c.l.b16 %v6023
    %v6194 = vunpack.c.h.b16 %v6023
    %v6195 = vunpack.c.l.b16 %v6024
    %v6196 = vunpack.c.h.b16 %v6024
    %v6197 = vunpack.c.l.b16 %v6025
    %v6198 = vunpack.c.h.b16 %v6025
    %v6199 = vunpack.c.l.b16 %v6026
    %v6200 = vunpack.c.h.b16 %v6026
    %v6201 = vunpack.c.l.b16 %v6027
    %v6202 = vunpack.c.h.b16 %v6027
    %v6203 = vunpack.c.l.b16 %v6028
    %v6204 = vunpack.c.h.b16 %v6028
    %v6205 = vunpack.c.l.b16 %v6029
    %v6206 = vunpack.c.h.b16 %v6029
    %v6207 = vunpack.c.l.b16 %v6030
    %v6208 = vunpack.c.h.b16 %v6030
    %v6209 = vunpack.c.l.b16 %v6031
    %v6210 = vunpack.c.h.b16 %v6031
    %v6211 = vunpack.c.l.b16 %v6032
    %v6212 = vunpack.c.h.b16 %v6032
    %v6213 = vunpack.c.l.b16 %v6033
    %v6214 = vunpack.c.h.b16 %v6033
    %v6215 = vunpack.c.l.b16 %v6034
    %v6216 = vunpack.c.h.b16 %v6034
    %v6217 = vunpack.c.l.b16 %v6035
    %v6218 = vunpack.c.h.b16 %v6035
    %v6219 = vunpack.c.l.b16 %v6036
    %v6220 = vunpack.c.h.b16 %v6036
    %v6221 = vunpack.c.l.b16 %v6037
    %v6222 = vunpack.c.h.b16 %v6037
    %v6223 = vunpack.c.l.b16 %v6038
    %v6224 = vunpack.c.h.b16 %v6038
    %v6225 = vunpack.c.l.b16 %v6039
    %v6226 = vunpack.c.h.b16 %v6039
    %v6227 = vunpack.c.l.b16 %v6040
    %v6228 = vunpack.c.h.b16 %v6040
    %v6229 = vunpack.c.l.b16 %v6041
    %v6230 = vunpack.c.h.b16 %v6041
    %v6231 = vunpack.c.l.b16 %v6042
    %v6232 = vunpack.c.h.b16 %v6042
    %v6233 = vunpack.c.l.b16 %v6043
    %v6234 = vunpack.c.h.b16 %v6043
    %v6235 = vunpack.c.l.b16 %v6044
    %v6236 = vunpack.c.h.b16 %v6044
    %v6237 = vpack.c.b16 %v6111, %v6109
    %v6238 = vpack.c.b16 %v6112, %v6110
    %v6239 = vpack.c.b16 %v6115, %v6113
    %v6240 = vpack.c.b16 %v6116, %v6114
    %v6241 = vpack.c.b16 %v6119, %v6117
    %v6242 = vpack.c.b16 %v6120, %v6118
    %v6243 = vpack.c.b16 %v6123, %v6121
    %v6244 = vpack.c.b16 %v6124, %v6122
    %v6245 = vpack.c.b16 %v6127, %v6125
    %v6246 = vpack.c.b16 %v6128, %v6126
    %v6247 = vpack.c.b16 %v6131, %v6129
    %v6248 = vpack.c.b16 %v6132, %v6130
    %v6249 = vpack.c.b16 %v6135, %v6133
    %v6250 = vpack.c.b16 %v6136, %v6134
    %v6251 = vpack.c.b16 %v6139, %v6137
    %v6252 = vpack.c.b16 %v6140, %v6138
    %v6253 = vpack.c.b16 %v6143, %v6141
    %v6254 = vpack.c.b16 %v6144, %v6142
    %v6255 = vpack.c.b16 %v6147, %v6145
    %v6256 = vpack.c.b16 %v6148, %v6146
    %v6257 = vpack.c.b16 %v6151, %v6149
    %v6258 = vpack.c.b16 %v6152, %v6150
    %v6259 = vpack.c.b16 %v6155, %v6153
    %v6260 = vpack.c.b16 %v6156, %v6154
    %v6261 = vpack.c.b16 %v6159, %v6157
    %v6262 = vpack.c.b16 %v6160, %v6158
    %v6263 = vpack.c.b16 %v6163, %v6161
    %v6264 = vpack.c.b16 %v6164, %v6162
    %v6265 = vpack.c.b16 %v6167, %v6165
    %v6266 = vpack.c.b16 %v6168, %v6166
    %v6267 = vpack.c.b16 %v6171, %v6169
    %v6268 = vpack.c.b16 %v6172, %v6170
    %v6269 = vpack.c.b16 %v6175, %v6173
    %v6270 = vpack.c.b16 %v6176, %v6174
    %v6271 = vpack.c.b16 %v6179, %v6177
    %v6272 = vpack.c.b16 %v6180, %v6178
    %v6273 = vpack.c.b16 %v6183, %v6181
    %v6274 = vpack.c.b16 %v6184, %v6182
    %v6275 = vpack.c.b16 %v6187, %v6185
    %v6276 = vpack.c.b16 %v6188, %v6186
    %v6277 = vpack.c.b16 %v6191, %v6189
    %v6278 = vpack.c.b16 %v6192, %v6190
    %v6279 = vpack.c.b16 %v6195, %v6193
    %v6280 = vpack.c.b16 %v6196, %v6194
    %v6281 = vpack.c.b16 %v6199, %v6197
    %v6282 = vpack.c.b16 %v6200, %v6198
    %v6283 = vpack.c.b16 %v6203, %v6201
    %v6284 = vpack.c.b16 %v6204, %v6202
    %v6285 = vpack.c.b16 %v6207, %v6205
    %v6286 = vpack.c.b16 %v6208, %v6206
    %v6287 = vpack.c.b16 %v6211, %v6209
    %v6288 = vpack.c.b16 %v6212, %v6210
    %v6289 = vpack.c.b16 %v6215, %v6213
    %v6290 = vpack.c.b16 %v6216, %v6214
    %v6291 = vpack.c.b16 %v6219, %v6217
    %v6292 = vpack.c.b16 %v6220, %v6218
    %v6293 = vpack.c.b16 %v6223, %v6221
    %v6294 = vpack.c.b16 %v6224, %v6222
    %v6295 = vpack.c.b16 %v6227, %v6225
    %v6296 = vpack.c.b16 %v6228, %v6226
    %v6297 = vpack.c.b16 %v6231, %v6229
    %v6298 = vpack.c.b16 %v6232, %v6230
    %v6299 = vpack.c.b16 %v6235, %v6233
    %v6300 = vpack.c.b16 %v6236, %v6234
    %6365 = vmatprep.subr.bf16.mxu0 %v6238
    %6366 = vmatpush1.bf16.msra.mxu0 %v6237
    %6367 = vmatprep.subr.bf16.mxu0 %v6240
    %6368 = vmatpush1.bf16.msra.mxu0 %v6239
    %6369 = vmatprep.subr.bf16.mxu0 %v6242
    %6370 = vmatpush1.bf16.msra.mxu0 %v6241
    %6371 = vmatprep.subr.bf16.mxu0 %v6244
    %6372 = vmatpush1.bf16.msra.mxu0 %v6243
    %6373 = vmatprep.subr.bf16.mxu0 %v6246
    %6374 = vmatpush1.bf16.msra.mxu0 %v6245
    %6375 = vmatprep.subr.bf16.mxu0 %v6248
    %6376 = vmatpush1.bf16.msra.mxu0 %v6247
    %6377 = vmatprep.subr.bf16.mxu0 %v6250
    %6378 = vmatpush1.bf16.msra.mxu0 %v6249
    %6379 = vmatprep.subr.bf16.mxu0 %v6252
    %6380 = vmatpush1.bf16.msra.mxu0 %v6251
    %6381 = vmatprep.subr.bf16.mxu0 %v6254
    %6382 = vmatpush1.bf16.msra.mxu0 %v6253
    %6383 = vmatprep.subr.bf16.mxu0 %v6256
    %6384 = vmatpush1.bf16.msra.mxu0 %v6255
    %6385 = vmatprep.subr.bf16.mxu0 %v6258
    %6386 = vmatpush1.bf16.msra.mxu0 %v6257
    %6387 = vmatprep.subr.bf16.mxu0 %v6260
    %6388 = vmatpush1.bf16.msra.mxu0 %v6259
    %6389 = vmatprep.subr.bf16.mxu0 %v6262
    %6390 = vmatpush1.bf16.msra.mxu0 %v6261
    %6391 = vmatprep.subr.bf16.mxu0 %v6264
    %6392 = vmatpush1.bf16.msra.mxu0 %v6263
    %6393 = vmatprep.subr.bf16.mxu0 %v6266
    %6394 = vmatpush1.bf16.msra.mxu0 %v6265
    %6395 = vmatprep.subr.bf16.mxu0 %v6268
    %6396 = vmatpush1.bf16.msra.mxu0 %v6267
    %6397 = vmatprep.mubr.bf16.mxu0 %v5978
    %6398 = vmatmul.mubr.bf16.gmra.mrb[0].mxu0 %v5977
    %v6399 = vpop.f32.mrb[0].mxu0
    %v6400 = vadd.f32 0.0, %v6399
    %v6401 = vpop.f32.mrb[0].mxu0
    %v6402 = vadd.f32 0.0, %v6401
    %v6403 = vpop.f32.mrb[0].mxu0
    %v6404 = vpop.f32.mrb[0].mxu0
    %6405 = vdwg.mxu0
    %6406 = vmatprep.subr.bf16.mxu0 %v6270
    %6407 = vmatpush1.bf16.msra.mxu0 %v6269
    %6408 = vmatprep.subr.bf16.mxu0 %v6272
    %6409 = vmatpush1.bf16.msra.mxu0 %v6271
    %6410 = vmatprep.subr.bf16.mxu0 %v6274
    %6411 = vmatpush1.bf16.msra.mxu0 %v6273
    %6412 = vmatprep.subr.bf16.mxu0 %v6276
    %6413 = vmatpush1.bf16.msra.mxu0 %v6275
    %6414 = vmatprep.subr.bf16.mxu0 %v6278
    %6415 = vmatpush1.bf16.msra.mxu0 %v6277
    %6416 = vmatprep.subr.bf16.mxu0 %v6280
    %6417 = vmatpush1.bf16.msra.mxu0 %v6279
    %6418 = vmatprep.subr.bf16.mxu0 %v6282
    %6419 = vmatpush1.bf16.msra.mxu0 %v6281
    %6420 = vmatprep.subr.bf16.mxu0 %v6284
    %6421 = vmatpush1.bf16.msra.mxu0 %v6283
    %6422 = vmatprep.subr.bf16.mxu0 %v6286
    %6423 = vmatpush1.bf16.msra.mxu0 %v6285
    %6424 = vmatprep.subr.bf16.mxu0 %v6288
    %6425 = vmatpush1.bf16.msra.mxu0 %v6287
    %6426 = vmatprep.subr.bf16.mxu0 %v6290
    %6427 = vmatpush1.bf16.msra.mxu0 %v6289
    %6428 = vmatprep.subr.bf16.mxu0 %v6292
    %6429 = vmatpush1.bf16.msra.mxu0 %v6291
    %6430 = vmatprep.subr.bf16.mxu0 %v6294
    %6431 = vmatpush1.bf16.msra.mxu0 %v6293
    %6432 = vmatprep.subr.bf16.mxu0 %v6296
    %6433 = vmatpush1.bf16.msra.mxu0 %v6295
    %6434 = vmatprep.subr.bf16.mxu0 %v6298
    %6435 = vmatpush1.bf16.msra.mxu0 %v6297
    %6436 = vmatprep.subr.bf16.mxu0 %v6300
    %6437 = vmatpush1.bf16.msra.mxu0 %v6299
    %6438 = vmatprep.mubr.bf16.mxu0 %v5980
    %6439 = vmatmul.mubr.bf16.gmra.mrb[0].mxu0 %v5979
    %v6440 = vpop.f32.mrb[0].mxu0
    %v6441 = vadd.f32 %v6400, %v6440
    %v6442 = vpop.f32.mrb[0].mxu0
    %v6443 = vadd.f32 %v6402, %v6442
    %v6444 = vpop.f32.mrb[0].mxu0
    %v6445 = vpop.f32.mrb[0].mxu0
    %6446 = vdwg.mxu0
    %v6447 = vpack.c.bf16 %v6441, %v6441
    %v6448 = vpack.c.bf16 %v6443, %v6443
    %v6449 = vld [vmem:[#allocation13] sm:$0x3]
    %v6451 = vlaneseq
    %v6452 = vshrl.u32 %v6451, 7
    %v6453 = vsub.s32 0, %v6452
    %v6454 = vrot.slane %v6449, %v6453
    %v6455 = vlaneseq
    %v6456 = vshrl.u32 %v6455, 7
    %v6457 = vsub.s32 1, %v6456
    %v6458 = vrot.slane %v6449, %v6457
    %v6461 = vpack.c.bf16 %v6454, %v6454
    %v6462 = vpack.c.bf16 %v6458, %v6458
    %v6464 = vpack.i.b16 %v6461, %v6461
    %v6466 = vlaneseq
    %v6467 = vshrl.u32 %v6466, 7
    %v6468 = vsub.s32 0, %v6467
    %v6469 = vrot.slane %v6464, %v6468
    %v6471 = vpack.i.b16 %v6462, %v6462
    %v6473 = vlaneseq
    %v6474 = vshrl.u32 %v6473, 7
    %v6475 = vsub.s32 0, %v6474
    %v6476 = vrot.slane %v6471, %v6475
    %v6477 = vadd.bf16 %v6447, %v6469
    %v6478 = vadd.bf16 %v6448, %v6476
    %v6479 = vmax.bf16 %v6477, 0
    %v6480 = vmax.bf16 %v6478, 0
    %v6481 = vld [vmem:[#allocation14] sm:$0xf]
    %v6482 = vld [vmem:[#allocation14 + $0x4] sm:$0xf]
    %v6483 = vld [vmem:[#allocation14 + $0x8] sm:$0xf]
    %v6484 = vld [vmem:[#allocation14 + $0xc] sm:$0xf]
    %v6485 = vld [vmem:[#allocation14 + $0x10] sm:$0xf]
    %v6486 = vld [vmem:[#allocation14 + $0x14] sm:$0xf]
    %v6487 = vld [vmem:[#allocation14 + $0x18] sm:$0xf]
    %v6488 = vld [vmem:[#allocation14 + $0x1c] sm:$0xf]
    %v6489 = vld [vmem:[#allocation14 + $0x20] sm:$0xf]
    %v6490 = vld [vmem:[#allocation14 + $0x24] sm:$0xf]
    %v6491 = vld [vmem:[#allocation14 + $0x28] sm:$0xf]
    %v6492 = vld [vmem:[#allocation14 + $0x2c] sm:$0xf]
    %v6493 = vld [vmem:[#allocation14 + $0x30] sm:$0xf]
    %v6494 = vld [vmem:[#allocation14 + $0x34] sm:$0xf]
    %v6495 = vld [vmem:[#allocation14 + $0x38] sm:$0xf]
    %v6496 = vld [vmem:[#allocation14 + $0x3c] sm:$0xf]
    %v6497 = vld [vmem:[#allocation14 + $0x40] sm:$0xf]
    %v6498 = vld [vmem:[#allocation14 + $0x44] sm:$0xf]
    %v6499 = vld [vmem:[#allocation14 + $0x48] sm:$0xf]
    %v6500 = vld [vmem:[#allocation14 + $0x4c] sm:$0xf]
    %v6501 = vld [vmem:[#allocation14 + $0x50] sm:$0xf]
    %v6502 = vld [vmem:[#allocation14 + $0x54] sm:$0xf]
    %v6503 = vld [vmem:[#allocation14 + $0x58] sm:$0xf]
    %v6504 = vld [vmem:[#allocation14 + $0x5c] sm:$0xf]
    %v6505 = vld [vmem:[#allocation14 + $0x60] sm:$0xf]
    %v6506 = vld [vmem:[#allocation14 + $0x64] sm:$0xf]
    %v6507 = vld [vmem:[#allocation14 + $0x68] sm:$0xf]
    %v6508 = vld [vmem:[#allocation14 + $0x6c] sm:$0xf]
    %v6509 = vld [vmem:[#allocation14 + $0x70] sm:$0xf]
    %v6510 = vld [vmem:[#allocation14 + $0x74] sm:$0xf]
    %v6511 = vld [vmem:[#allocation14 + $0x78] sm:$0xf]
    %v6512 = vld [vmem:[#allocation14 + $0x7c] sm:$0xf]
    %v6545 = vunpack.c.l.b16 %v6481
    %v6546 = vunpack.c.l.b16 %v6482
    %v6547 = vunpack.c.l.b16 %v6483
    %v6548 = vunpack.c.l.b16 %v6484
    %v6549 = vunpack.c.l.b16 %v6485
    %v6550 = vunpack.c.l.b16 %v6486
    %v6551 = vunpack.c.l.b16 %v6487
    %v6552 = vunpack.c.l.b16 %v6488
    %v6553 = vunpack.c.l.b16 %v6489
    %v6554 = vunpack.c.l.b16 %v6490
    %v6555 = vunpack.c.l.b16 %v6491
    %v6556 = vunpack.c.l.b16 %v6492
    %v6557 = vunpack.c.l.b16 %v6493
    %v6558 = vunpack.c.l.b16 %v6494
    %v6559 = vunpack.c.l.b16 %v6495
    %v6560 = vunpack.c.l.b16 %v6496
    %v6561 = vunpack.c.l.b16 %v6497
    %v6562 = vunpack.c.l.b16 %v6498
    %v6563 = vunpack.c.l.b16 %v6499
    %v6564 = vunpack.c.l.b16 %v6500
    %v6565 = vunpack.c.l.b16 %v6501
    %v6566 = vunpack.c.l.b16 %v6502
    %v6567 = vunpack.c.l.b16 %v6503
    %v6568 = vunpack.c.l.b16 %v6504
    %v6569 = vunpack.c.l.b16 %v6505
    %v6570 = vunpack.c.l.b16 %v6506
    %v6571 = vunpack.c.l.b16 %v6507
    %v6572 = vunpack.c.l.b16 %v6508
    %v6573 = vunpack.c.l.b16 %v6509
    %v6574 = vunpack.c.l.b16 %v6510
    %v6575 = vunpack.c.l.b16 %v6511
    %v6576 = vunpack.c.l.b16 %v6512
    %v6577 = vpack.c.b16 %v6546, %v6545
    %v6578 = vpack.c.b16 %v6548, %v6547
    %v6579 = vpack.c.b16 %v6550, %v6549
    %v6580 = vpack.c.b16 %v6552, %v6551
    %v6581 = vpack.c.b16 %v6554, %v6553
    %v6582 = vpack.c.b16 %v6556, %v6555
    %v6583 = vpack.c.b16 %v6558, %v6557
    %v6584 = vpack.c.b16 %v6560, %v6559
    %v6585 = vpack.c.b16 %v6562, %v6561
    %v6586 = vpack.c.b16 %v6564, %v6563
    %v6587 = vpack.c.b16 %v6566, %v6565
    %v6588 = vpack.c.b16 %v6568, %v6567
    %v6589 = vpack.c.b16 %v6570, %v6569
    %v6590 = vpack.c.b16 %v6572, %v6571
    %v6591 = vpack.c.b16 %v6574, %v6573
    %v6592 = vpack.c.b16 %v6576, %v6575
    %6609 = vmatprep.subr.bf16.mxu0 0
    %6610 = vmatpush1.bf16.msra.mxu0 %v6577
    %6611 = vmatprep.subr.bf16.mxu0 0
    %6612 = vmatpush1.bf16.msra.mxu0 %v6578
    %6613 = vmatprep.subr.bf16.mxu0 0
    %6614 = vmatpush1.bf16.msra.mxu0 %v6579
    %6615 = vmatprep.subr.bf16.mxu0 0
    %6616 = vmatpush1.bf16.msra.mxu0 %v6580
    %6617 = vmatprep.subr.bf16.mxu0 0
    %6618 = vmatpush1.bf16.msra.mxu0 %v6581
    %6619 = vmatprep.subr.bf16.mxu0 0
    %6620 = vmatpush1.bf16.msra.mxu0 %v6582
    %6621 = vmatprep.subr.bf16.mxu0 0
    %6622 = vmatpush1.bf16.msra.mxu0 %v6583
    %6623 = vmatprep.subr.bf16.mxu0 0
    %6624 = vmatpush1.bf16.msra.mxu0 %v6584
    %6625 = vmatprep.subr.bf16.mxu0 0
    %6626 = vmatpush1.bf16.msra.mxu0 %v6585
    %6627 = vmatprep.subr.bf16.mxu0 0
    %6628 = vmatpush1.bf16.msra.mxu0 %v6586
    %6629 = vmatprep.subr.bf16.mxu0 0
    %6630 = vmatpush1.bf16.msra.mxu0 %v6587
    %6631 = vmatprep.subr.bf16.mxu0 0
    %6632 = vmatpush1.bf16.msra.mxu0 %v6588
    %6633 = vmatprep.subr.bf16.mxu0 0
    %6634 = vmatpush1.bf16.msra.mxu0 %v6589
    %6635 = vmatprep.subr.bf16.mxu0 0
    %6636 = vmatpush1.bf16.msra.mxu0 %v6590
    %6637 = vmatprep.subr.bf16.mxu0 0
    %6638 = vmatpush1.bf16.msra.mxu0 %v6591
    %6639 = vmatprep.subr.bf16.mxu0 0
    %6640 = vmatpush1.bf16.msra.mxu0 %v6592
    %6641 = vmatprep.mubr.bf16.mxu0 %v6480
    %6642 = vmatmul.mubr.bf16.gmra.mrb[0].mxu0 %v6479
    %v6643 = vpop.f32.mrb[0].mxu0
    %v6644 = vadd.f32 0.0, %v6643
    %v6645 = vpop.f32.mrb[0].mxu0
    %v6646 = vpop.f32.mrb[0].mxu0
    %v6647 = vpop.f32.mrb[0].mxu0
    %6648 = vdwg.mxu0
    %v6649 = vpack.c.bf16 %v6644, %v6644
    %v6650 = vld [vmem:[#allocation16] sm:$0x1]
    %v6651 = vpack.c.bf16 %v6650, %v6650
    %v6653 = vpack.i.b16 %v6651, %v6651
    %v6655 = vlaneseq
    %v6656 = vshrl.u32 %v6655, 7
    %v6657 = vsub.s32 0, %v6656
    %v6658 = vrot.slane %v6653, %v6657
    %v6659 = vadd.bf16 %v6649, %v6658
    %v6660 = vmax.bf16 %v6659, 0
    %v6661 = vld [vmem:[#allocation17] sm:$0xf]
    %v6662 = vld [vmem:[#allocation17 + $0x4] sm:$0xf]
    %v6663 = vld [vmem:[#allocation17 + $0x8] sm:$0xf]
    %v6664 = vld [vmem:[#allocation17 + $0xc] sm:$0xf]
    %v6665 = vld [vmem:[#allocation17 + $0x10] sm:$0xf]
    %v6666 = vld [vmem:[#allocation17 + $0x14] sm:$0xf]
    %v6667 = vld [vmem:[#allocation17 + $0x18] sm:$0xf]
    %v6668 = vld [vmem:[#allocation17 + $0x1c] sm:$0xf]
    %v6669 = vld [vmem:[#allocation17 + $0x20] sm:$0xf]
    %v6670 = vld [vmem:[#allocation17 + $0x24] sm:$0xf]
    %v6671 = vld [vmem:[#allocation17 + $0x28] sm:$0xf]
    %v6672 = vld [vmem:[#allocation17 + $0x2c] sm:$0xf]
    %v6673 = vld [vmem:[#allocation17 + $0x30] sm:$0xf]
    %v6674 = vld [vmem:[#allocation17 + $0x34] sm:$0xf]
    %v6675 = vld [vmem:[#allocation17 + $0x38] sm:$0xf]
    %v6676 = vld [vmem:[#allocation17 + $0x3c] sm:$0xf]
    %v6677 = vld [vmem:[#allocation19] sm:$0x1]
    %v6679 = vlaneseq
    %v6680 = vshrl.u32 %v6679, 7
    %v6681 = vsub.s32 0, %v6680
    %v6682 = vrot.slane %v6677, %v6681
    %v6700 = vunpack.c.l.b16 %v6661
    %v6701 = vunpack.c.l.b16 %v6662
    %v6702 = vunpack.c.l.b16 %v6663
    %v6703 = vunpack.c.l.b16 %v6664
    %v6704 = vunpack.c.l.b16 %v6665
    %v6705 = vunpack.c.l.b16 %v6666
    %v6706 = vunpack.c.l.b16 %v6667
    %v6707 = vunpack.c.l.b16 %v6668
    %v6708 = vunpack.c.l.b16 %v6669
    %v6709 = vunpack.c.l.b16 %v6670
    %v6710 = vunpack.c.l.b16 %v6671
    %v6711 = vunpack.c.l.b16 %v6672
    %v6712 = vunpack.c.l.b16 %v6673
    %v6713 = vunpack.c.l.b16 %v6674
    %v6714 = vunpack.c.l.b16 %v6675
    %v6715 = vunpack.c.l.b16 %v6676
    %v6716 = vpack.c.b16 %v6701, %v6700
    %v6717 = vpack.c.b16 %v6703, %v6702
    %v6718 = vpack.c.b16 %v6705, %v6704
    %v6719 = vpack.c.b16 %v6707, %v6706
    %v6720 = vpack.c.b16 %v6709, %v6708
    %v6721 = vpack.c.b16 %v6711, %v6710
    %v6722 = vpack.c.b16 %v6713, %v6712
    %v6723 = vpack.c.b16 %v6715, %v6714
    %6732 = vmatprep.subr.bf16.mxu0 0
    %6733 = vmatpush1.bf16.msra.mxu0 %v6716
    %6734 = vmatprep.subr.bf16.mxu0 0
    %6735 = vmatpush1.bf16.msra.mxu0 %v6717
    %6736 = vmatprep.subr.bf16.mxu0 0
    %6737 = vmatpush1.bf16.msra.mxu0 %v6718
    %6738 = vmatprep.subr.bf16.mxu0 0
    %6739 = vmatpush1.bf16.msra.mxu0 %v6719
    %6740 = vmatprep.subr.bf16.mxu0 0
    %6741 = vmatpush1.bf16.msra.mxu0 %v6720
    %6742 = vmatprep.subr.bf16.mxu0 0
    %6743 = vmatpush1.bf16.msra.mxu0 %v6721
    %6744 = vmatprep.subr.bf16.mxu0 0
    %6745 = vmatpush1.bf16.msra.mxu0 %v6722
    %6746 = vmatprep.subr.bf16.mxu0 0
    %6747 = vmatpush1.bf16.msra.mxu0 %v6723
    %6748 = vmatprep.subr.bf16.mxu0 0
    %6749 = vmatpush1.bf16.msra.mxu0 0
    %6750 = vmatprep.subr.bf16.mxu0 0
    %6751 = vmatpush1.bf16.msra.mxu0 0
    %6752 = vmatprep.subr.bf16.mxu0 0
    %6753 = vmatpush1.bf16.msra.mxu0 0
    %6754 = vmatprep.subr.bf16.mxu0 0
    %6755 = vmatpush1.bf16.msra.mxu0 0
    %6756 = vmatprep.subr.bf16.mxu0 0
    %6757 = vmatpush1.bf16.msra.mxu0 0
    %6758 = vmatprep.subr.bf16.mxu0 0
    %6759 = vmatpush1.bf16.msra.mxu0 0
    %6760 = vmatprep.subr.bf16.mxu0 0
    %6761 = vmatpush1.bf16.msra.mxu0 0
    %6762 = vmatprep.subr.bf16.mxu0 0
    %6763 = vmatpush1.bf16.msra.mxu0 0
    %6764 = vmatprep.mubr.bf16.mxu0 0
    %6765 = vmatmul.mubr.bf16.gmra.mrb[0].mxu0 %v6660
    %v6766 = vpop.f32.mrb[0].mxu0
    %v6767 = vadd.f32 %v6682, %v6766
    %v6768 = vpop.f32.mrb[0].mxu0
    %v6769 = vpop.f32.mrb[0].mxu0
    %v6770 = vpop.f32.mrb[0].mxu0
    %6771 = vdwg.mxu0
    %6772 = vst [vmem:[#allocation20] sm:$0xff] %v6767
    // Predicated region
    $region90: #{tpu_custom_call.1} parent=1 // pred_check
      _
    $region91: #{tpu_custom_call.1} parent=1 // pred_check_branch
      %6774 = sbr.rel (0) target = $region93
    $region92: #{tpu_custom_call.1} parent=1 // pred_region
      %s6776 = ssub.s32 128, 128
      %6777 = vsyncadd [#allocation4], %s6776
      %s6779 = sshll.u32 [#allocation20], 4
      %s6780 = int_to_ptr.vmem [resolvable:$true] %s6779
      %6782 = dma.vmem_to_hbm [thread:$0]  %s6780, 128, %s11, [#allocation4]
    $region93: #{tpu_custom_call.1} parent=1 // pred_fallthru
      _
    // Predicated region
    $region94: #{tpu_custom_call.1} parent=1 // pred_check
      _
    $region95: #{tpu_custom_call.1} parent=1 // pred_check_branch
      %6784 = sbr.rel (0) target = $region97
    $region96: #{tpu_custom_call.1} parent=1 // pred_region
      %6785 = dma.done [#allocation4], 128
    $region97: #{tpu_custom_call.1} parent=1 // pred_fallthru
      _
    %6786 = vsyncpa [#allocation3], 1
    %6787 = vsyncpa [#allocation6], 1
    %6788 = vsyncpa [#allocation9], 1
    %6789 = vsyncpa [#allocation12], 1
    %6790 = vsyncpa [#allocation15], 1
    %6791 = vsyncpa [#allocation18], 1
    %6792 = vsyncpa [#allocation4], 1

</llo_original>
